<compile_context>
chip_gen: v7x
topology: tpu7x:2x2x1
jax: 0.10.0
libtpu: 0.0.40
codegen_flags: <defaults>
</compile_context>

<pallas_src>
import functools

import numpy as np
import jax
import jax.numpy as jnp
from jax import lax
from jax.experimental import pallas as pl
from jax.experimental.pallas import tpu as pltpu


def _conv_bn_relu_kernel(xp_ref, xm_ref, xn_ref, w_ref, shift_ref, mask_ref,
                         o_ref, rhs_ref, *, cin, d_blk, h, w):
    """One grid step = (one batch element, one block of d_blk depth planes).

    xp_ref:    (1, cin, h*w)          depth plane just before the block (clamped)
    xm_ref:    (1, cin, d_blk*h*w)    the block's depth planes
    xn_ref:    (1, cin, h*w)          depth plane just after the block (clamped)
    w_ref:     (cout, 27*cin)         conv weights * BN scale, K ordered (kd,kh,kw,ci)
    shift_ref: (cout, 1)              folded BN shift (f32)
    mask_ref:  (9, d_blk*h*w)         0/1 validity masks for the 9 in-plane taps
    o_ref:     (1, cout, d_blk*h*w)   output block (lane-dense)
    rhs_ref:   (9*cin, d_blk*h*w)     scratch: per-kd packed-K (im2col) block
    """
    hw = h * w
    blk_n = d_blk * hw
    cout = o_ref.shape[1]
    cdtype = xm_ref.dtype

    j = pl.program_id(1)
    n_d = pl.num_programs(1)

    main = xm_ref[0]                                           # (cin, blk_n)
    # The halo planes were clamped in the index maps; zero them at the volume
    # boundary so they act as the conv's zero padding in depth.
    pscale = jnp.where(j > 0, 1.0, 0.0).astype(cdtype)
    nscale = jnp.where(j < n_d - 1, 1.0, 0.0).astype(cdtype)
    prev = xp_ref[0] * pscale                                  # (cin, hw)
    nxt = xn_ref[0] * nscale                                   # (cin, hw)

    masks = mask_ref[...]                                      # (9, blk_n)

    acc = jnp.zeros((cout, blk_n), jnp.float32)
    for kd in range(3):
        # Depth-shifted slab: plane dd of `slab` is input plane
        # (block_start + dd + kd - 1) of the unpadded volume.
        if kd == 0:
            slab = prev if d_blk == 1 else jnp.concatenate(
                [prev, main[:, :(d_blk - 1) * hw]], axis=-1)
        elif kd == 1:
            slab = main
        else:
            slab = nxt if d_blk == 1 else jnp.concatenate(
                [main[:, hw:], nxt], axis=-1)

        # Pack the 9 (kh, kw) taps into the contraction dim -> (9*cin, blk_n).
        for t in range(9):
            kh_off = t // 3 - 1
            kw_off = t % 3 - 1
            s = kh_off * w + kw_off
            shifted = slab if s == 0 else jnp.roll(slab, -s, axis=-1)
            # Roll wrap-around only lands on positions the mask zeroes.
            rhs_ref[t * cin:(t + 1) * cin, :] = shifted * masks[t:t + 1, :]

        wk = w_ref[:, kd * 9 * cin:(kd + 1) * 9 * cin]          # (cout, 9*cin)
        acc = acc + jnp.dot(wk, rhs_ref[...],
                            preferred_element_type=jnp.float32)

    y = jnp.maximum(acc + shift_ref[...], 0.0)                  # BN shift + ReLU
    o_ref[0] = y.astype(o_ref.dtype)


@functools.partial(jax.jit, static_argnames=("eps", "block_d", "compute_dtype"))
def conv_bn_relu_3d(x, weight, gamma, beta, running_mean, running_var, *,
                    eps=1e-5, block_d=None, compute_dtype=jnp.bfloat16):
    """ConvBnReLU3D forward. x: (B, Cin, D, H, W) -> (B, Cout, D, H, W)."""
    B, Cin, D, H, W = x.shape
    Cout = weight.shape[0]
    assert weight.shape == (Cout, Cin, 3, 3, 3)
    HW = H * W
    # TODO(synk): generalize to H*W not a multiple of 128 (needs lane-tail
    # masking or manual halo DMA); the shapes used here satisfy it.
    assert HW % 128 == 0, "H*W must be a multiple of 128"

    itemsize = jnp.dtype(compute_dtype).itemsize
    if block_d is None:
        # Largest divisor of D whose main input block is <= ~1 MiB (the pipeline
        # double-buffers it), preferring >= 2 depth blocks so there is a second
        # parallel grid axis (v7x megacore) and enough steps to hide DMA.
        divs = [c for c in range(1, D + 1) if D % c == 0]
        fit = [c for c in divs if Cin * c * HW * itemsize <= (1 << 20)] or [1]
        pref = [c for c in fit if c < D] or fit
        block_d = max(pref)
    assert D % block_d == 0
    n_d = D // block_d
    blk_n = block_d * HW

    # ---- cheap wrapper-side glue (no transposes, no spatial padding) ----
    x_flat = x.reshape(B, Cin, D * HW).astype(compute_dtype)

    scale = gamma / jnp.sqrt(running_var + eps)                         # (Cout,)
    shift2 = (beta - running_mean * scale).astype(jnp.float32).reshape(Cout, 1)
    # Fold the BN scale into the conv weights; K ordered (kd, kh, kw, ci).
    w_folded = weight * scale[:, None, None, None, None]                # (Cout,Cin,3,3,3)
    w2 = jnp.transpose(w_folded, (0, 2, 3, 4, 1)).reshape(Cout, 27 * Cin)
    w2 = w2.astype(compute_dtype)

    # 0/1 validity masks of the 9 in-plane (kh, kw) taps, tiled over the D block.
    hh = np.arange(H)[:, None]
    ww = np.arange(W)[None, :]
    m = np.zeros((9, blk_n), dtype=np.float32)
    for t in range(9):
        kh, kw = t // 3 - 1, t % 3 - 1
        valid = ((hh + kh >= 0) & (hh + kh < H) & (ww + kw >= 0) & (ww + kw < W))
        m[t] = np.tile(valid.reshape(-1).astype(np.float32), block_d)
    masks = jnp.asarray(m, dtype=compute_dtype)

    kernel = functools.partial(_conv_bn_relu_kernel,
                               cin=Cin, d_blk=block_d, h=H, w=W)

    out_flat = pl.pallas_call(
        kernel,
        out_shape=jax.ShapeDtypeStruct((B, Cout, D * HW), x.dtype),
        grid_spec=pltpu.PrefetchScalarGridSpec(
            num_scalar_prefetch=0,
            grid=(B, n_d),
            in_specs=[
                # previous depth plane (clamped at the front boundary)
                pl.BlockSpec((1, Cin, HW),
                             lambda b, j: (b, 0, jnp.maximum(j * block_d - 1, 0))),
                # the block's own depth planes
                pl.BlockSpec((1, Cin, blk_n), lambda b, j: (b, 0, j)),
                # next depth plane (clamped at the back boundary)
                pl.BlockSpec((1, Cin, HW),
                             lambda b, j: (b, 0, jnp.minimum(j * block_d + block_d,
                                                             D - 1))),
                pl.BlockSpec((Cout, 27 * Cin), lambda b, j: (0, 0)),
                pl.BlockSpec((Cout, 1), lambda b, j: (0, 0)),
                pl.BlockSpec((9, blk_n), lambda b, j: (0, 0)),
            ],
            out_specs=pl.BlockSpec((1, Cout, blk_n), lambda b, j: (b, 0, j)),
            scratch_shapes=[pltpu.VMEM((9 * Cin, blk_n), compute_dtype)],
        ),
        compiler_params=pltpu.CompilerParams(
            dimension_semantics=("parallel", "parallel"),
            vmem_limit_bytes=32 * 1024 * 1024),
    )(x_flat, x_flat, x_flat, w2, shift2, masks)

    return out_flat.reshape(B, Cout, D, H, W)


def reference(x, weight, gamma, beta, mean, var, eps=1e-5):
    conv = lax.conv_general_dilated(
        x, weight, window_strides=(1, 1, 1),
        padding=((1, 1), (1, 1), (1, 1)),
        dimension_numbers=("NCDHW", "OIDHW", "NCDHW"),
        precision=lax.Precision.HIGHEST)
    bc = (1, -1, 1, 1, 1)
    y = (conv - mean.reshape(bc)) / jnp.sqrt(var.reshape(bc) + eps)
    y = y * gamma.reshape(bc) + beta.reshape(bc)
    return jnp.maximum(y, 0.0)


if __name__ == "__main__":
    # Small shapes consistent with nn.Conv3d(Cin, Cout, 3, 1, 1) + BatchNorm3d.
    B, Cin, Cout, D, H, W = 2, 4, 8, 8, 16, 16

    key = jax.random.PRNGKey(0)
    k_x, k_w, k_g, k_b, k_m, k_v = jax.random.split(key, 6)

    x = jax.random.normal(k_x, (B, Cin, D, H, W), dtype=jnp.float32)
    weight = jax.random.normal(k_w, (Cout, Cin, 3, 3, 3), dtype=jnp.float32) * 0.1
    gamma = 1.0 + 0.1 * jax.random.normal(k_g, (Cout,), dtype=jnp.float32)
    beta = 0.1 * jax.random.normal(k_b, (Cout,), dtype=jnp.float32)
    running_mean = 0.1 * jax.random.normal(k_m, (Cout,), dtype=jnp.float32)
    running_var = 1.0 + 0.1 * jax.random.uniform(k_v, (Cout,), dtype=jnp.float32)

    out = conv_bn_relu_3d(x, weight, gamma, beta, running_mean, running_var,
                          block_d=4)
    out = jax.block_until_ready(out)
    assert out.shape == (B, Cout, D, H, W)

    # Check 1 (tight): reference built from the same bf16-quantized operands the
    # kernel uses, so only f32 accumulation-order differences remain.
    eps = 1e-5
    scale = gamma / jnp.sqrt(running_var + eps)
    shift = beta - running_mean * scale
    xq = x.astype(jnp.bfloat16).astype(jnp.float32)
    wq = (weight * scale[:, None, None, None, None]
          ).astype(jnp.bfloat16).astype(jnp.float32)
    conv_q = lax.conv_general_dilated(
        xq, wq, window_strides=(1, 1, 1), padding=((1, 1),) * 3,
        dimension_numbers=("NCDHW", "OIDHW", "NCDHW"),
        precision=lax.Precision.HIGHEST)
    ref_q = jnp.maximum(conv_q + shift.reshape(1, Cout, 1, 1, 1), 0.0)
    err_q = float(jnp.max(jnp.abs(out - ref_q)))
    assert jnp.allclose(out, ref_q, rtol=1e-2, atol=1e-2), \
        f"max abs err vs quantized reference: {err_q}"

    # Check 2 (loose): full-f32 PyTorch-equivalent forward; difference is only
    # the bf16 operand quantization inside the kernel.
    ref = reference(x, weight, gamma, beta, running_mean, running_var, eps)
    err = float(jnp.max(jnp.abs(out - ref)))
    assert jnp.allclose(out, ref, rtol=1e-1, atol=1e-1), \
        f"max abs err vs f32 reference: {err}"

    print("KERNEL_OK")
</pallas_src>

<mosaic_0001>
module attributes {stable_mosaic.version = 11 : i64} {
  func.func @_conv_bn_relu_kernel(%arg0: i32, %arg1: i32, %arg2: memref<1x4x256xbf16, #tpu.memory_space<vmem>>, %arg3: memref<1x4x1024xbf16, #tpu.memory_space<vmem>>, %arg4: memref<1x4x256xbf16, #tpu.memory_space<vmem>>, %arg5: memref<8x108xbf16, #tpu.memory_space<vmem>>, %arg6: memref<8x1xf32, #tpu.memory_space<vmem>>, %arg7: memref<9x1024xbf16, #tpu.memory_space<vmem>>, %arg8: memref<1x8x1024xf32, #tpu.memory_space<vmem>>, %arg9: memref<36x1024xbf16, #tpu.memory_space<vmem>>) attributes {dimension_semantics = [#tpu.dimension_semantics<parallel>, #tpu.dimension_semantics<parallel>], iteration_bounds = array<i64: 2, 2>, scalar_prefetch = 0 : i64, scratch_operands = 1 : i64, tpu.core_type = #tpu.core_type<tc>, window_params = [{transform_indices = @transform_0, window_bounds = array<i64: 1, 4, 256>}, {transform_indices = @transform_1, window_bounds = array<i64: 1, 4, 1024>}, {transform_indices = @transform_2, window_bounds = array<i64: 1, 4, 256>}, {pipeline_mode = #tpu.pipeline_mode<synchronous>, transform_indices = @transform_3, window_bounds = array<i64: 8, 108>}, {pipeline_mode = #tpu.pipeline_mode<synchronous>, transform_indices = @transform_4, window_bounds = array<i64: 8, 1>}, {pipeline_mode = #tpu.pipeline_mode<synchronous>, transform_indices = @transform_5, window_bounds = array<i64: 9, 1024>}, {transform_indices = @transform_6, window_bounds = array<i64: 1, 8, 1024>}]} {
    %c0 = arith.constant 0 : index
    %c0_0 = arith.constant 0 : index
    %c0_1 = arith.constant 0 : index
    %0 = vector.load %arg3[%c0, %c0_0, %c0_1] : memref<1x4x1024xbf16, #tpu.memory_space<vmem>>, vector<1x4x1024xbf16>
    %1 = vector.shape_cast %0 : vector<1x4x1024xbf16> to vector<4x1024xbf16>
    %c0_i32 = arith.constant 0 : i32
    %2 = arith.cmpi sgt, %arg1, %c0_i32 : i32
    %cst = arith.constant 1.000000e+00 : f32
    %cst_2 = arith.constant 0.000000e+00 : f32
    %3 = arith.select %2, %cst, %cst_2 : f32
    %4 = arith.truncf %3 : f32 to bf16
    %c1_i32 = arith.constant 1 : i32
    %5 = arith.cmpi slt, %arg1, %c1_i32 : i32
    %cst_3 = arith.constant 1.000000e+00 : f32
    %cst_4 = arith.constant 0.000000e+00 : f32
    %6 = arith.select %5, %cst_3, %cst_4 : f32
    %7 = arith.truncf %6 : f32 to bf16
    %c0_5 = arith.constant 0 : index
    %c0_6 = arith.constant 0 : index
    %c0_7 = arith.constant 0 : index
    %8 = vector.load %arg2[%c0_5, %c0_6, %c0_7] : memref<1x4x256xbf16, #tpu.memory_space<vmem>>, vector<1x4x256xbf16>
    %9 = vector.shape_cast %8 : vector<1x4x256xbf16> to vector<4x256xbf16>
    %10 = vector.broadcast %4 : bf16 to vector<4x256xbf16>
    %11 = arith.mulf %9, %10 : vector<4x256xbf16>
    %c0_8 = arith.constant 0 : index
    %c0_9 = arith.constant 0 : index
    %c0_10 = arith.constant 0 : index
    %12 = vector.load %arg4[%c0_8, %c0_9, %c0_10] : memref<1x4x256xbf16, #tpu.memory_space<vmem>>, vector<1x4x256xbf16>
    %13 = vector.shape_cast %12 : vector<1x4x256xbf16> to vector<4x256xbf16>
    %14 = vector.broadcast %7 : bf16 to vector<4x256xbf16>
    %15 = arith.mulf %13, %14 : vector<4x256xbf16>
    %c0_11 = arith.constant 0 : index
    %c0_12 = arith.constant 0 : index
    %16 = vector.load %arg7[%c0_11, %c0_12] : memref<9x1024xbf16, #tpu.memory_space<vmem>>, vector<9x1024xbf16>
    %cst_13 = arith.constant 0.000000e+00 : f32
    %17 = vector.broadcast %cst_13 : f32 to vector<8x1024xf32>
    %18 = vector.extract_strided_slice %1 {offsets = [0, 0], sizes = [4, 768], strides = [1, 1]} : vector<4x1024xbf16> to vector<4x768xbf16>
    %19 = tpu.concatenate %11, %18 in 1 : vector<4x256xbf16>, vector<4x768xbf16> -> vector<4x1024xbf16>
    %20 = vector.extract_strided_slice %19 {offsets = [0, 1007], sizes = [4, 17], strides = [1, 1]} : vector<4x1024xbf16> to vector<4x17xbf16>
    %21 = vector.extract_strided_slice %19 {offsets = [0, 0], sizes = [4, 1007], strides = [1, 1]} : vector<4x1024xbf16> to vector<4x1007xbf16>
    %22 = tpu.concatenate %20, %21 in 1 : vector<4x17xbf16>, vector<4x1007xbf16> -> vector<4x1024xbf16>
    %23 = vector.extract_strided_slice %16 {offsets = [0, 0], sizes = [1, 1024], strides = [1, 1]} : vector<9x1024xbf16> to vector<1x1024xbf16>
    %24 = vector.broadcast %23 : vector<1x1024xbf16> to vector<4x1024xbf16>
    %25 = arith.mulf %22, %24 : vector<4x1024xbf16>
    %c0_14 = arith.constant 0 : index
    %c0_15 = arith.constant 0 : index
    %26 = vector.load %arg9[%c0_14, %c0_15] : memref<36x1024xbf16, #tpu.memory_space<vmem>>, vector<4x1024xbf16>
    tpu.vector_store %arg9[%c0_14, %c0_15], %25 {strides = array<i32>} : memref<36x1024xbf16, #tpu.memory_space<vmem>>, vector<4x1024xbf16>,
    %27 = vector.extract_strided_slice %19 {offsets = [0, 1008], sizes = [4, 16], strides = [1, 1]} : vector<4x1024xbf16> to vector<4x16xbf16>
    %28 = vector.extract_strided_slice %19 {offsets = [0, 0], sizes = [4, 1008], strides = [1, 1]} : vector<4x1024xbf16> to vector<4x1008xbf16>
    %29 = tpu.concatenate %27, %28 in 1 : vector<4x16xbf16>, vector<4x1008xbf16> -> vector<4x1024xbf16>
    %30 = vector.extract_strided_slice %16 {offsets = [1, 0], sizes = [1, 1024], strides = [1, 1]} : vector<9x1024xbf16> to vector<1x1024xbf16>
    %31 = vector.broadcast %30 : vector<1x1024xbf16> to vector<4x1024xbf16>
    %32 = arith.mulf %29, %31 : vector<4x1024xbf16>
    %c4 = arith.constant 4 : index
    %c0_16 = arith.constant 0 : index
    %33 = vector.load %arg9[%c4, %c0_16] : memref<36x1024xbf16, #tpu.memory_space<vmem>>, vector<4x1024xbf16>
    tpu.vector_store %arg9[%c4, %c0_16], %32 {strides = array<i32>} : memref<36x1024xbf16, #tpu.memory_space<vmem>>, vector<4x1024xbf16>,
    %34 = vector.extract_strided_slice %19 {offsets = [0, 1009], sizes = [4, 15], strides = [1, 1]} : vector<4x1024xbf16> to vector<4x15xbf16>
    %35 = vector.extract_strided_slice %19 {offsets = [0, 0], sizes = [4, 1009], strides = [1, 1]} : vector<4x1024xbf16> to vector<4x1009xbf16>
    %36 = tpu.concatenate %34, %35 in 1 : vector<4x15xbf16>, vector<4x1009xbf16> -> vector<4x1024xbf16>
    %37 = vector.extract_strided_slice %16 {offsets = [2, 0], sizes = [1, 1024], strides = [1, 1]} : vector<9x1024xbf16> to vector<1x1024xbf16>
    %38 = vector.broadcast %37 : vector<1x1024xbf16> to vector<4x1024xbf16>
    %39 = arith.mulf %36, %38 : vector<4x1024xbf16>
    %c8 = arith.constant 8 : index
    %c0_17 = arith.constant 0 : index
    %40 = vector.load %arg9[%c8, %c0_17] : memref<36x1024xbf16, #tpu.memory_space<vmem>>, vector<4x1024xbf16>
    tpu.vector_store %arg9[%c8, %c0_17], %39 {strides = array<i32>} : memref<36x1024xbf16, #tpu.memory_space<vmem>>, vector<4x1024xbf16>,
    %41 = vector.extract_strided_slice %19 {offsets = [0, 1023], sizes = [4, 1], strides = [1, 1]} : vector<4x1024xbf16> to vector<4x1xbf16>
    %42 = vector.extract_strided_slice %19 {offsets = [0, 0], sizes = [4, 1023], strides = [1, 1]} : vector<4x1024xbf16> to vector<4x1023xbf16>
    %43 = tpu.concatenate %41, %42 in 1 : vector<4x1xbf16>, vector<4x1023xbf16> -> vector<4x1024xbf16>
    %44 = vector.extract_strided_slice %16 {offsets = [3, 0], sizes = [1, 1024], strides = [1, 1]} : vector<9x1024xbf16> to vector<1x1024xbf16>
    %45 = vector.broadcast %44 : vector<1x1024xbf16> to vector<4x1024xbf16>
    %46 = arith.mulf %43, %45 : vector<4x1024xbf16>
    %c12 = arith.constant 12 : index
    %c0_18 = arith.constant 0 : index
    %47 = vector.load %arg9[%c12, %c0_18] : memref<36x1024xbf16, #tpu.memory_space<vmem>>, vector<4x1024xbf16>
    tpu.vector_store %arg9[%c12, %c0_18], %46 {strides = array<i32>} : memref<36x1024xbf16, #tpu.memory_space<vmem>>, vector<4x1024xbf16>,
    %48 = vector.extract_strided_slice %16 {offsets = [4, 0], sizes = [1, 1024], strides = [1, 1]} : vector<9x1024xbf16> to vector<1x1024xbf16>
    %49 = vector.broadcast %48 : vector<1x1024xbf16> to vector<4x1024xbf16>
    %50 = arith.mulf %19, %49 : vector<4x1024xbf16>
    %c16 = arith.constant 16 : index
    %c0_19 = arith.constant 0 : index
    %51 = vector.load %arg9[%c16, %c0_19] : memref<36x1024xbf16, #tpu.memory_space<vmem>>, vector<4x1024xbf16>
    tpu.vector_store %arg9[%c16, %c0_19], %50 {strides = array<i32>} : memref<36x1024xbf16, #tpu.memory_space<vmem>>, vector<4x1024xbf16>,
    %52 = vector.extract_strided_slice %19 {offsets = [0, 1], sizes = [4, 1023], strides = [1, 1]} : vector<4x1024xbf16> to vector<4x1023xbf16>
    %53 = vector.extract_strided_slice %19 {offsets = [0, 0], sizes = [4, 1], strides = [1, 1]} : vector<4x1024xbf16> to vector<4x1xbf16>
    %54 = tpu.concatenate %52, %53 in 1 : vector<4x1023xbf16>, vector<4x1xbf16> -> vector<4x1024xbf16>
    %55 = vector.extract_strided_slice %16 {offsets = [5, 0], sizes = [1, 1024], strides = [1, 1]} : vector<9x1024xbf16> to vector<1x1024xbf16>
    %56 = vector.broadcast %55 : vector<1x1024xbf16> to vector<4x1024xbf16>
    %57 = arith.mulf %54, %56 : vector<4x1024xbf16>
    %c20 = arith.constant 20 : index
    %c0_20 = arith.constant 0 : index
    %58 = vector.load %arg9[%c20, %c0_20] : memref<36x1024xbf16, #tpu.memory_space<vmem>>, vector<4x1024xbf16>
    tpu.vector_store %arg9[%c20, %c0_20], %57 {strides = array<i32>} : memref<36x1024xbf16, #tpu.memory_space<vmem>>, vector<4x1024xbf16>,
    %59 = vector.extract_strided_slice %19 {offsets = [0, 15], sizes = [4, 1009], strides = [1, 1]} : vector<4x1024xbf16> to vector<4x1009xbf16>
    %60 = vector.extract_strided_slice %19 {offsets = [0, 0], sizes = [4, 15], strides = [1, 1]} : vector<4x1024xbf16> to vector<4x15xbf16>
    %61 = tpu.concatenate %59, %60 in 1 : vector<4x1009xbf16>, vector<4x15xbf16> -> vector<4x1024xbf16>
    %62 = vector.extract_strided_slice %16 {offsets = [6, 0], sizes = [1, 1024], strides = [1, 1]} : vector<9x1024xbf16> to vector<1x1024xbf16>
    %63 = vector.broadcast %62 : vector<1x1024xbf16> to vector<4x1024xbf16>
    %64 = arith.mulf %61, %63 : vector<4x1024xbf16>
    %c24 = arith.constant 24 : index
    %c0_21 = arith.constant 0 : index
    %65 = vector.load %arg9[%c24, %c0_21] : memref<36x1024xbf16, #tpu.memory_space<vmem>>, vector<4x1024xbf16>
    tpu.vector_store %arg9[%c24, %c0_21], %64 {strides = array<i32>} : memref<36x1024xbf16, #tpu.memory_space<vmem>>, vector<4x1024xbf16>,
    %66 = vector.extract_strided_slice %19 {offsets = [0, 16], sizes = [4, 1008], strides = [1, 1]} : vector<4x1024xbf16> to vector<4x1008xbf16>
    %67 = vector.extract_strided_slice %19 {offsets = [0, 0], sizes = [4, 16], strides = [1, 1]} : vector<4x1024xbf16> to vector<4x16xbf16>
    %68 = tpu.concatenate %66, %67 in 1 : vector<4x1008xbf16>, vector<4x16xbf16> -> vector<4x1024xbf16>
    %69 = vector.extract_strided_slice %16 {offsets = [7, 0], sizes = [1, 1024], strides = [1, 1]} : vector<9x1024xbf16> to vector<1x1024xbf16>
    %70 = vector.broadcast %69 : vector<1x1024xbf16> to vector<4x1024xbf16>
    %71 = arith.mulf %68, %70 : vector<4x1024xbf16>
    %c28 = arith.constant 28 : index
    %c0_22 = arith.constant 0 : index
    %72 = vector.load %arg9[%c28, %c0_22] : memref<36x1024xbf16, #tpu.memory_space<vmem>>, vector<4x1024xbf16>
    tpu.vector_store %arg9[%c28, %c0_22], %71 {strides = array<i32>} : memref<36x1024xbf16, #tpu.memory_space<vmem>>, vector<4x1024xbf16>,
    %73 = vector.extract_strided_slice %19 {offsets = [0, 17], sizes = [4, 1007], strides = [1, 1]} : vector<4x1024xbf16> to vector<4x1007xbf16>
    %74 = vector.extract_strided_slice %19 {offsets = [0, 0], sizes = [4, 17], strides = [1, 1]} : vector<4x1024xbf16> to vector<4x17xbf16>
    %75 = tpu.concatenate %73, %74 in 1 : vector<4x1007xbf16>, vector<4x17xbf16> -> vector<4x1024xbf16>
    %76 = vector.extract_strided_slice %16 {offsets = [8, 0], sizes = [1, 1024], strides = [1, 1]} : vector<9x1024xbf16> to vector<1x1024xbf16>
    %77 = vector.broadcast %76 : vector<1x1024xbf16> to vector<4x1024xbf16>
    %78 = arith.mulf %75, %77 : vector<4x1024xbf16>
    %c32 = arith.constant 32 : index
    %c0_23 = arith.constant 0 : index
    %79 = vector.load %arg9[%c32, %c0_23] : memref<36x1024xbf16, #tpu.memory_space<vmem>>, vector<4x1024xbf16>
    tpu.vector_store %arg9[%c32, %c0_23], %78 {strides = array<i32>} : memref<36x1024xbf16, #tpu.memory_space<vmem>>, vector<4x1024xbf16>,
    %c0_24 = arith.constant 0 : index
    %c0_25 = arith.constant 0 : index
    %80 = vector.load %arg5[%c0_24, %c0_25] : memref<8x108xbf16, #tpu.memory_space<vmem>>, vector<8x36xbf16>
    %c0_26 = arith.constant 0 : index
    %c0_27 = arith.constant 0 : index
    %81 = vector.load %arg9[%c0_26, %c0_27] : memref<36x1024xbf16, #tpu.memory_space<vmem>>, vector<36x1024xbf16>
    %cst_28 = arith.constant dense<0.000000e+00> : vector<8x1024xf32>
    %82 = tpu.matmul %80, %81, %cst_28 {dimension_numbers = #tpu.dot_dimension_numbers<[1], [0], [0], [1], [0, 0, 1, 1], [], []>} : vector<8x36xbf16>, vector<36x1024xbf16>, vector<8x1024xf32> -> vector<8x1024xf32>
    %83 = arith.addf %17, %82 : vector<8x1024xf32>
    %84 = vector.extract_strided_slice %1 {offsets = [0, 1007], sizes = [4, 17], strides = [1, 1]} : vector<4x1024xbf16> to vector<4x17xbf16>
    %85 = vector.extract_strided_slice %1 {offsets = [0, 0], sizes = [4, 1007], strides = [1, 1]} : vector<4x1024xbf16> to vector<4x1007xbf16>
    %86 = tpu.concatenate %84, %85 in 1 : vector<4x17xbf16>, vector<4x1007xbf16> -> vector<4x1024xbf16>
    %87 = vector.extract_strided_slice %16 {offsets = [0, 0], sizes = [1, 1024], strides = [1, 1]} : vector<9x1024xbf16> to vector<1x1024xbf16>
    %88 = vector.broadcast %87 : vector<1x1024xbf16> to vector<4x1024xbf16>
    %89 = arith.mulf %86, %88 : vector<4x1024xbf16>
    %c0_29 = arith.constant 0 : index
    %c0_30 = arith.constant 0 : index
    %90 = vector.load %arg9[%c0_29, %c0_30] : memref<36x1024xbf16, #tpu.memory_space<vmem>>, vector<4x1024xbf16>
    tpu.vector_store %arg9[%c0_29, %c0_30], %89 {strides = array<i32>} : memref<36x1024xbf16, #tpu.memory_space<vmem>>, vector<4x1024xbf16>,
    %91 = vector.extract_strided_slice %1 {offsets = [0, 1008], sizes = [4, 16], strides = [1, 1]} : vector<4x1024xbf16> to vector<4x16xbf16>
    %92 = vector.extract_strided_slice %1 {offsets = [0, 0], sizes = [4, 1008], strides = [1, 1]} : vector<4x1024xbf16> to vector<4x1008xbf16>
    %93 = tpu.concatenate %91, %92 in 1 : vector<4x16xbf16>, vector<4x1008xbf16> -> vector<4x1024xbf16>
    %94 = vector.extract_strided_slice %16 {offsets = [1, 0], sizes = [1, 1024], strides = [1, 1]} : vector<9x1024xbf16> to vector<1x1024xbf16>
    %95 = vector.broadcast %94 : vector<1x1024xbf16> to vector<4x1024xbf16>
    %96 = arith.mulf %93, %95 : vector<4x1024xbf16>
    %c4_31 = arith.constant 4 : index
    %c0_32 = arith.constant 0 : index
    %97 = vector.load %arg9[%c4_31, %c0_32] : memref<36x1024xbf16, #tpu.memory_space<vmem>>, vector<4x1024xbf16>
    tpu.vector_store %arg9[%c4_31, %c0_32], %96 {strides = array<i32>} : memref<36x1024xbf16, #tpu.memory_space<vmem>>, vector<4x1024xbf16>,
    %98 = vector.extract_strided_slice %1 {offsets = [0, 1009], sizes = [4, 15], strides = [1, 1]} : vector<4x1024xbf16> to vector<4x15xbf16>
    %99 = vector.extract_strided_slice %1 {offsets = [0, 0], sizes = [4, 1009], strides = [1, 1]} : vector<4x1024xbf16> to vector<4x1009xbf16>
    %100 = tpu.concatenate %98, %99 in 1 : vector<4x15xbf16>, vector<4x1009xbf16> -> vector<4x1024xbf16>
    %101 = vector.extract_strided_slice %16 {offsets = [2, 0], sizes = [1, 1024], strides = [1, 1]} : vector<9x1024xbf16> to vector<1x1024xbf16>
    %102 = vector.broadcast %101 : vector<1x1024xbf16> to vector<4x1024xbf16>
    %103 = arith.mulf %100, %102 : vector<4x1024xbf16>
    %c8_33 = arith.constant 8 : index
    %c0_34 = arith.constant 0 : index
    %104 = vector.load %arg9[%c8_33, %c0_34] : memref<36x1024xbf16, #tpu.memory_space<vmem>>, vector<4x1024xbf16>
    tpu.vector_store %arg9[%c8_33, %c0_34], %103 {strides = array<i32>} : memref<36x1024xbf16, #tpu.memory_space<vmem>>, vector<4x1024xbf16>,
    %105 = vector.extract_strided_slice %1 {offsets = [0, 1023], sizes = [4, 1], strides = [1, 1]} : vector<4x1024xbf16> to vector<4x1xbf16>
    %106 = vector.extract_strided_slice %1 {offsets = [0, 0], sizes = [4, 1023], strides = [1, 1]} : vector<4x1024xbf16> to vector<4x1023xbf16>
    %107 = tpu.concatenate %105, %106 in 1 : vector<4x1xbf16>, vector<4x1023xbf16> -> vector<4x1024xbf16>
    %108 = vector.extract_strided_slice %16 {offsets = [3, 0], sizes = [1, 1024], strides = [1, 1]} : vector<9x1024xbf16> to vector<1x1024xbf16>
    %109 = vector.broadcast %108 : vector<1x1024xbf16> to vector<4x1024xbf16>
    %110 = arith.mulf %107, %109 : vector<4x1024xbf16>
    %c12_35 = arith.constant 12 : index
    %c0_36 = arith.constant 0 : index
    %111 = vector.load %arg9[%c12_35, %c0_36] : memref<36x1024xbf16, #tpu.memory_space<vmem>>, vector<4x1024xbf16>
    tpu.vector_store %arg9[%c12_35, %c0_36], %110 {strides = array<i32>} : memref<36x1024xbf16, #tpu.memory_space<vmem>>, vector<4x1024xbf16>,
    %112 = vector.extract_strided_slice %16 {offsets = [4, 0], sizes = [1, 1024], strides = [1, 1]} : vector<9x1024xbf16> to vector<1x1024xbf16>
    %113 = vector.broadcast %112 : vector<1x1024xbf16> to vector<4x1024xbf16>
    %114 = arith.mulf %1, %113 : vector<4x1024xbf16>
    %c16_37 = arith.constant 16 : index
    %c0_38 = arith.constant 0 : index
    %115 = vector.load %arg9[%c16_37, %c0_38] : memref<36x1024xbf16, #tpu.memory_space<vmem>>, vector<4x1024xbf16>
    tpu.vector_store %arg9[%c16_37, %c0_38], %114 {strides = array<i32>} : memref<36x1024xbf16, #tpu.memory_space<vmem>>, vector<4x1024xbf16>,
    %116 = vector.extract_strided_slice %1 {offsets = [0, 1], sizes = [4, 1023], strides = [1, 1]} : vector<4x1024xbf16> to vector<4x1023xbf16>
    %117 = vector.extract_strided_slice %1 {offsets = [0, 0], sizes = [4, 1], strides = [1, 1]} : vector<4x1024xbf16> to vector<4x1xbf16>
    %118 = tpu.concatenate %116, %117 in 1 : vector<4x1023xbf16>, vector<4x1xbf16> -> vector<4x1024xbf16>
    %119 = vector.extract_strided_slice %16 {offsets = [5, 0], sizes = [1, 1024], strides = [1, 1]} : vector<9x1024xbf16> to vector<1x1024xbf16>
    %120 = vector.broadcast %119 : vector<1x1024xbf16> to vector<4x1024xbf16>
    %121 = arith.mulf %118, %120 : vector<4x1024xbf16>
    %c20_39 = arith.constant 20 : index
    %c0_40 = arith.constant 0 : index
    %122 = vector.load %arg9[%c20_39, %c0_40] : memref<36x1024xbf16, #tpu.memory_space<vmem>>, vector<4x1024xbf16>
    tpu.vector_store %arg9[%c20_39, %c0_40], %121 {strides = array<i32>} : memref<36x1024xbf16, #tpu.memory_space<vmem>>, vector<4x1024xbf16>,
    %123 = vector.extract_strided_slice %1 {offsets = [0, 15], sizes = [4, 1009], strides = [1, 1]} : vector<4x1024xbf16> to vector<4x1009xbf16>
    %124 = vector.extract_strided_slice %1 {offsets = [0, 0], sizes = [4, 15], strides = [1, 1]} : vector<4x1024xbf16> to vector<4x15xbf16>
    %125 = tpu.concatenate %123, %124 in 1 : vector<4x1009xbf16>, vector<4x15xbf16> -> vector<4x1024xbf16>
    %126 = vector.extract_strided_slice %16 {offsets = [6, 0], sizes = [1, 1024], strides = [1, 1]} : vector<9x1024xbf16> to vector<1x1024xbf16>
    %127 = vector.broadcast %126 : vector<1x1024xbf16> to vector<4x1024xbf16>
    %128 = arith.mulf %125, %127 : vector<4x1024xbf16>
    %c24_41 = arith.constant 24 : index
    %c0_42 = arith.constant 0 : index
    %129 = vector.load %arg9[%c24_41, %c0_42] : memref<36x1024xbf16, #tpu.memory_space<vmem>>, vector<4x1024xbf16>
    tpu.vector_store %arg9[%c24_41, %c0_42], %128 {strides = array<i32>} : memref<36x1024xbf16, #tpu.memory_space<vmem>>, vector<4x1024xbf16>,
    %130 = vector.extract_strided_slice %1 {offsets = [0, 16], sizes = [4, 1008], strides = [1, 1]} : vector<4x1024xbf16> to vector<4x1008xbf16>
    %131 = vector.extract_strided_slice %1 {offsets = [0, 0], sizes = [4, 16], strides = [1, 1]} : vector<4x1024xbf16> to vector<4x16xbf16>
    %132 = tpu.concatenate %130, %131 in 1 : vector<4x1008xbf16>, vector<4x16xbf16> -> vector<4x1024xbf16>
    %133 = vector.extract_strided_slice %16 {offsets = [7, 0], sizes = [1, 1024], strides = [1, 1]} : vector<9x1024xbf16> to vector<1x1024xbf16>
    %134 = vector.broadcast %133 : vector<1x1024xbf16> to vector<4x1024xbf16>
    %135 = arith.mulf %132, %134 : vector<4x1024xbf16>
    %c28_43 = arith.constant 28 : index
    %c0_44 = arith.constant 0 : index
    %136 = vector.load %arg9[%c28_43, %c0_44] : memref<36x1024xbf16, #tpu.memory_space<vmem>>, vector<4x1024xbf16>
    tpu.vector_store %arg9[%c28_43, %c0_44], %135 {strides = array<i32>} : memref<36x1024xbf16, #tpu.memory_space<vmem>>, vector<4x1024xbf16>,
    %137 = vector.extract_strided_slice %1 {offsets = [0, 17], sizes = [4, 1007], strides = [1, 1]} : vector<4x1024xbf16> to vector<4x1007xbf16>
    %138 = vector.extract_strided_slice %1 {offsets = [0, 0], sizes = [4, 17], strides = [1, 1]} : vector<4x1024xbf16> to vector<4x17xbf16>
    %139 = tpu.concatenate %137, %138 in 1 : vector<4x1007xbf16>, vector<4x17xbf16> -> vector<4x1024xbf16>
    %140 = vector.extract_strided_slice %16 {offsets = [8, 0], sizes = [1, 1024], strides = [1, 1]} : vector<9x1024xbf16> to vector<1x1024xbf16>
    %141 = vector.broadcast %140 : vector<1x1024xbf16> to vector<4x1024xbf16>
    %142 = arith.mulf %139, %141 : vector<4x1024xbf16>
    %c32_45 = arith.constant 32 : index
    %c0_46 = arith.constant 0 : index
    %143 = vector.load %arg9[%c32_45, %c0_46] : memref<36x1024xbf16, #tpu.memory_space<vmem>>, vector<4x1024xbf16>
    tpu.vector_store %arg9[%c32_45, %c0_46], %142 {strides = array<i32>} : memref<36x1024xbf16, #tpu.memory_space<vmem>>, vector<4x1024xbf16>,
    %c0_47 = arith.constant 0 : index
    %c36 = arith.constant 36 : index
    %144 = vector.load %arg5[%c0_47, %c36] : memref<8x108xbf16, #tpu.memory_space<vmem>>, vector<8x36xbf16>
    %c0_48 = arith.constant 0 : index
    %c0_49 = arith.constant 0 : index
    %145 = vector.load %arg9[%c0_48, %c0_49] : memref<36x1024xbf16, #tpu.memory_space<vmem>>, vector<36x1024xbf16>
    %cst_50 = arith.constant dense<0.000000e+00> : vector<8x1024xf32>
    %146 = tpu.matmul %144, %145, %cst_50 {dimension_numbers = #tpu.dot_dimension_numbers<[1], [0], [0], [1], [0, 0, 1, 1], [], []>} : vector<8x36xbf16>, vector<36x1024xbf16>, vector<8x1024xf32> -> vector<8x1024xf32>
    %147 = arith.addf %83, %146 : vector<8x1024xf32>
    %148 = vector.extract_strided_slice %1 {offsets = [0, 256], sizes = [4, 768], strides = [1, 1]} : vector<4x1024xbf16> to vector<4x768xbf16>
    %149 = tpu.concatenate %148, %15 in 1 : vector<4x768xbf16>, vector<4x256xbf16> -> vector<4x1024xbf16>
    %150 = vector.extract_strided_slice %149 {offsets = [0, 1007], sizes = [4, 17], strides = [1, 1]} : vector<4x1024xbf16> to vector<4x17xbf16>
    %151 = vector.extract_strided_slice %149 {offsets = [0, 0], sizes = [4, 1007], strides = [1, 1]} : vector<4x1024xbf16> to vector<4x1007xbf16>
    %152 = tpu.concatenate %150, %151 in 1 : vector<4x17xbf16>, vector<4x1007xbf16> -> vector<4x1024xbf16>
    %153 = vector.extract_strided_slice %16 {offsets = [0, 0], sizes = [1, 1024], strides = [1, 1]} : vector<9x1024xbf16> to vector<1x1024xbf16>
    %154 = vector.broadcast %153 : vector<1x1024xbf16> to vector<4x1024xbf16>
    %155 = arith.mulf %152, %154 : vector<4x1024xbf16>
    %c0_51 = arith.constant 0 : index
    %c0_52 = arith.constant 0 : index
    %156 = vector.load %arg9[%c0_51, %c0_52] : memref<36x1024xbf16, #tpu.memory_space<vmem>>, vector<4x1024xbf16>
    tpu.vector_store %arg9[%c0_51, %c0_52], %155 {strides = array<i32>} : memref<36x1024xbf16, #tpu.memory_space<vmem>>, vector<4x1024xbf16>,
    %157 = vector.extract_strided_slice %149 {offsets = [0, 1008], sizes = [4, 16], strides = [1, 1]} : vector<4x1024xbf16> to vector<4x16xbf16>
    %158 = vector.extract_strided_slice %149 {offsets = [0, 0], sizes = [4, 1008], strides = [1, 1]} : vector<4x1024xbf16> to vector<4x1008xbf16>
    %159 = tpu.concatenate %157, %158 in 1 : vector<4x16xbf16>, vector<4x1008xbf16> -> vector<4x1024xbf16>
    %160 = vector.extract_strided_slice %16 {offsets = [1, 0], sizes = [1, 1024], strides = [1, 1]} : vector<9x1024xbf16> to vector<1x1024xbf16>
    %161 = vector.broadcast %160 : vector<1x1024xbf16> to vector<4x1024xbf16>
    %162 = arith.mulf %159, %161 : vector<4x1024xbf16>
    %c4_53 = arith.constant 4 : index
    %c0_54 = arith.constant 0 : index
    %163 = vector.load %arg9[%c4_53, %c0_54] : memref<36x1024xbf16, #tpu.memory_space<vmem>>, vector<4x1024xbf16>
    tpu.vector_store %arg9[%c4_53, %c0_54], %162 {strides = array<i32>} : memref<36x1024xbf16, #tpu.memory_space<vmem>>, vector<4x1024xbf16>,
    %164 = vector.extract_strided_slice %149 {offsets = [0, 1009], sizes = [4, 15], strides = [1, 1]} : vector<4x1024xbf16> to vector<4x15xbf16>
    %165 = vector.extract_strided_slice %149 {offsets = [0, 0], sizes = [4, 1009], strides = [1, 1]} : vector<4x1024xbf16> to vector<4x1009xbf16>
    %166 = tpu.concatenate %164, %165 in 1 : vector<4x15xbf16>, vector<4x1009xbf16> -> vector<4x1024xbf16>
    %167 = vector.extract_strided_slice %16 {offsets = [2, 0], sizes = [1, 1024], strides = [1, 1]} : vector<9x1024xbf16> to vector<1x1024xbf16>
    %168 = vector.broadcast %167 : vector<1x1024xbf16> to vector<4x1024xbf16>
    %169 = arith.mulf %166, %168 : vector<4x1024xbf16>
    %c8_55 = arith.constant 8 : index
    %c0_56 = arith.constant 0 : index
    %170 = vector.load %arg9[%c8_55, %c0_56] : memref<36x1024xbf16, #tpu.memory_space<vmem>>, vector<4x1024xbf16>
    tpu.vector_store %arg9[%c8_55, %c0_56], %169 {strides = array<i32>} : memref<36x1024xbf16, #tpu.memory_space<vmem>>, vector<4x1024xbf16>,
    %171 = vector.extract_strided_slice %149 {offsets = [0, 1023], sizes = [4, 1], strides = [1, 1]} : vector<4x1024xbf16> to vector<4x1xbf16>
    %172 = vector.extract_strided_slice %149 {offsets = [0, 0], sizes = [4, 1023], strides = [1, 1]} : vector<4x1024xbf16> to vector<4x1023xbf16>
    %173 = tpu.concatenate %171, %172 in 1 : vector<4x1xbf16>, vector<4x1023xbf16> -> vector<4x1024xbf16>
    %174 = vector.extract_strided_slice %16 {offsets = [3, 0], sizes = [1, 1024], strides = [1, 1]} : vector<9x1024xbf16> to vector<1x1024xbf16>
    %175 = vector.broadcast %174 : vector<1x1024xbf16> to vector<4x1024xbf16>
    %176 = arith.mulf %173, %175 : vector<4x1024xbf16>
    %c12_57 = arith.constant 12 : index
    %c0_58 = arith.constant 0 : index
    %177 = vector.load %arg9[%c12_57, %c0_58] : memref<36x1024xbf16, #tpu.memory_space<vmem>>, vector<4x1024xbf16>
    tpu.vector_store %arg9[%c12_57, %c0_58], %176 {strides = array<i32>} : memref<36x1024xbf16, #tpu.memory_space<vmem>>, vector<4x1024xbf16>,
    %178 = vector.extract_strided_slice %16 {offsets = [4, 0], sizes = [1, 1024], strides = [1, 1]} : vector<9x1024xbf16> to vector<1x1024xbf16>
    %179 = vector.broadcast %178 : vector<1x1024xbf16> to vector<4x1024xbf16>
    %180 = arith.mulf %149, %179 : vector<4x1024xbf16>
    %c16_59 = arith.constant 16 : index
    %c0_60 = arith.constant 0 : index
    %181 = vector.load %arg9[%c16_59, %c0_60] : memref<36x1024xbf16, #tpu.memory_space<vmem>>, vector<4x1024xbf16>
    tpu.vector_store %arg9[%c16_59, %c0_60], %180 {strides = array<i32>} : memref<36x1024xbf16, #tpu.memory_space<vmem>>, vector<4x1024xbf16>,
    %182 = vector.extract_strided_slice %149 {offsets = [0, 1], sizes = [4, 1023], strides = [1, 1]} : vector<4x1024xbf16> to vector<4x1023xbf16>
    %183 = vector.extract_strided_slice %149 {offsets = [0, 0], sizes = [4, 1], strides = [1, 1]} : vector<4x1024xbf16> to vector<4x1xbf16>
    %184 = tpu.concatenate %182, %183 in 1 : vector<4x1023xbf16>, vector<4x1xbf16> -> vector<4x1024xbf16>
    %185 = vector.extract_strided_slice %16 {offsets = [5, 0], sizes = [1, 1024], strides = [1, 1]} : vector<9x1024xbf16> to vector<1x1024xbf16>
    %186 = vector.broadcast %185 : vector<1x1024xbf16> to vector<4x1024xbf16>
    %187 = arith.mulf %184, %186 : vector<4x1024xbf16>
    %c20_61 = arith.constant 20 : index
    %c0_62 = arith.constant 0 : index
    %188 = vector.load %arg9[%c20_61, %c0_62] : memref<36x1024xbf16, #tpu.memory_space<vmem>>, vector<4x1024xbf16>
    tpu.vector_store %arg9[%c20_61, %c0_62], %187 {strides = array<i32>} : memref<36x1024xbf16, #tpu.memory_space<vmem>>, vector<4x1024xbf16>,
    %189 = vector.extract_strided_slice %149 {offsets = [0, 15], sizes = [4, 1009], strides = [1, 1]} : vector<4x1024xbf16> to vector<4x1009xbf16>
    %190 = vector.extract_strided_slice %149 {offsets = [0, 0], sizes = [4, 15], strides = [1, 1]} : vector<4x1024xbf16> to vector<4x15xbf16>
    %191 = tpu.concatenate %189, %190 in 1 : vector<4x1009xbf16>, vector<4x15xbf16> -> vector<4x1024xbf16>
    %192 = vector.extract_strided_slice %16 {offsets = [6, 0], sizes = [1, 1024], strides = [1, 1]} : vector<9x1024xbf16> to vector<1x1024xbf16>
    %193 = vector.broadcast %192 : vector<1x1024xbf16> to vector<4x1024xbf16>
    %194 = arith.mulf %191, %193 : vector<4x1024xbf16>
    %c24_63 = arith.constant 24 : index
    %c0_64 = arith.constant 0 : index
    %195 = vector.load %arg9[%c24_63, %c0_64] : memref<36x1024xbf16, #tpu.memory_space<vmem>>, vector<4x1024xbf16>
    tpu.vector_store %arg9[%c24_63, %c0_64], %194 {strides = array<i32>} : memref<36x1024xbf16, #tpu.memory_space<vmem>>, vector<4x1024xbf16>,
    %196 = vector.extract_strided_slice %149 {offsets = [0, 16], sizes = [4, 1008], strides = [1, 1]} : vector<4x1024xbf16> to vector<4x1008xbf16>
    %197 = vector.extract_strided_slice %149 {offsets = [0, 0], sizes = [4, 16], strides = [1, 1]} : vector<4x1024xbf16> to vector<4x16xbf16>
    %198 = tpu.concatenate %196, %197 in 1 : vector<4x1008xbf16>, vector<4x16xbf16> -> vector<4x1024xbf16>
    %199 = vector.extract_strided_slice %16 {offsets = [7, 0], sizes = [1, 1024], strides = [1, 1]} : vector<9x1024xbf16> to vector<1x1024xbf16>
    %200 = vector.broadcast %199 : vector<1x1024xbf16> to vector<4x1024xbf16>
    %201 = arith.mulf %198, %200 : vector<4x1024xbf16>
    %c28_65 = arith.constant 28 : index
    %c0_66 = arith.constant 0 : index
    %202 = vector.load %arg9[%c28_65, %c0_66] : memref<36x1024xbf16, #tpu.memory_space<vmem>>, vector<4x1024xbf16>
    tpu.vector_store %arg9[%c28_65, %c0_66], %201 {strides = array<i32>} : memref<36x1024xbf16, #tpu.memory_space<vmem>>, vector<4x1024xbf16>,
    %203 = vector.extract_strided_slice %149 {offsets = [0, 17], sizes = [4, 1007], strides = [1, 1]} : vector<4x1024xbf16> to vector<4x1007xbf16>
    %204 = vector.extract_strided_slice %149 {offsets = [0, 0], sizes = [4, 17], strides = [1, 1]} : vector<4x1024xbf16> to vector<4x17xbf16>
    %205 = tpu.concatenate %203, %204 in 1 : vector<4x1007xbf16>, vector<4x17xbf16> -> vector<4x1024xbf16>
    %206 = vector.extract_strided_slice %16 {offsets = [8, 0], sizes = [1, 1024], strides = [1, 1]} : vector<9x1024xbf16> to vector<1x1024xbf16>
    %207 = vector.broadcast %206 : vector<1x1024xbf16> to vector<4x1024xbf16>
    %208 = arith.mulf %205, %207 : vector<4x1024xbf16>
    %c32_67 = arith.constant 32 : index
    %c0_68 = arith.constant 0 : index
    %209 = vector.load %arg9[%c32_67, %c0_68] : memref<36x1024xbf16, #tpu.memory_space<vmem>>, vector<4x1024xbf16>
    tpu.vector_store %arg9[%c32_67, %c0_68], %208 {strides = array<i32>} : memref<36x1024xbf16, #tpu.memory_space<vmem>>, vector<4x1024xbf16>,
    %c0_69 = arith.constant 0 : index
    %c72 = arith.constant 72 : index
    %210 = vector.load %arg5[%c0_69, %c72] : memref<8x108xbf16, #tpu.memory_space<vmem>>, vector<8x36xbf16>
    %c0_70 = arith.constant 0 : index
    %c0_71 = arith.constant 0 : index
    %211 = vector.load %arg9[%c0_70, %c0_71] : memref<36x1024xbf16, #tpu.memory_space<vmem>>, vector<36x1024xbf16>
    %cst_72 = arith.constant dense<0.000000e+00> : vector<8x1024xf32>
    %212 = tpu.matmul %210, %211, %cst_72 {dimension_numbers = #tpu.dot_dimension_numbers<[1], [0], [0], [1], [0, 0, 1, 1], [], []>} : vector<8x36xbf16>, vector<36x1024xbf16>, vector<8x1024xf32> -> vector<8x1024xf32>
    %213 = arith.addf %147, %212 : vector<8x1024xf32>
    %c0_73 = arith.constant 0 : index
    %c0_74 = arith.constant 0 : index
    %214 = vector.load %arg6[%c0_73, %c0_74] : memref<8x1xf32, #tpu.memory_space<vmem>>, vector<8x1xf32>
    %215 = vector.broadcast %214 : vector<8x1xf32> to vector<8x1024xf32>
    %216 = arith.addf %213, %215 : vector<8x1024xf32>
    %cst_75 = arith.constant 0.000000e+00 : f32
    %217 = vector.broadcast %cst_75 : f32 to vector<8x1024xf32>
    %218 = arith.maximumf %216, %217 : vector<8x1024xf32>
    %c0_76 = arith.constant 0 : index
    %c0_77 = arith.constant 0 : index
    %c0_78 = arith.constant 0 : index
    %219 = vector.load %arg8[%c0_76, %c0_77, %c0_78] : memref<1x8x1024xf32, #tpu.memory_space<vmem>>, vector<1x8x1024xf32>
    %220 = vector.shape_cast %219 : vector<1x8x1024xf32> to vector<8x1024xf32>
    %221 = vector.shape_cast %218 : vector<8x1024xf32> to vector<1x8x1024xf32>
    tpu.vector_store %arg8[%c0_76, %c0_77, %c0_78], %221 {strides = array<i32>} : memref<1x8x1024xf32, #tpu.memory_space<vmem>>, vector<1x8x1024xf32>,
    return
  }
  func.func @transform_0(%arg0: i32, %arg1: i32) -> (i32, i32, i32) {
    %c4_i32 = arith.constant 4 : i32
    %0 = arith.muli %arg1, %c4_i32 : i32
    %c1_i32 = arith.constant 1 : i32
    %1 = arith.subi %0, %c1_i32 : i32
    %c0_i32 = arith.constant 0 : i32
    %2 = arith.maxsi %1, %c0_i32 : i32
    %c0_i32_0 = arith.constant 0 : i32
    %c0_i32_1 = arith.constant 0 : i32
    return %arg0, %c0_i32_0, %2 : i32, i32, i32
  }
  func.func @transform_1(%arg0: i32, %arg1: i32) -> (i32, i32, i32) {
    %c0_i32 = arith.constant 0 : i32
    %c0_i32_0 = arith.constant 0 : i32
    return %arg0, %c0_i32, %arg1 : i32, i32, i32
  }
  func.func @transform_2(%arg0: i32, %arg1: i32) -> (i32, i32, i32) {
    %c4_i32 = arith.constant 4 : i32
    %0 = arith.muli %arg1, %c4_i32 : i32
    %c4_i32_0 = arith.constant 4 : i32
    %1 = arith.addi %0, %c4_i32_0 : i32
    %c7_i32 = arith.constant 7 : i32
    %2 = arith.minsi %1, %c7_i32 : i32
    %c0_i32 = arith.constant 0 : i32
    %c0_i32_1 = arith.constant 0 : i32
    return %arg0, %c0_i32, %2 : i32, i32, i32
  }
  func.func @transform_3(%arg0: i32, %arg1: i32) -> (i32, i32) {
    %c0_i32 = arith.constant 0 : i32
    %c0_i32_0 = arith.constant 0 : i32
    %c0_i32_1 = arith.constant 0 : i32
    return %c0_i32, %c0_i32_0 : i32, i32
  }
  func.func @transform_4(%arg0: i32, %arg1: i32) -> (i32, i32) {
    %c0_i32 = arith.constant 0 : i32
    %c0_i32_0 = arith.constant 0 : i32
    %c0_i32_1 = arith.constant 0 : i32
    return %c0_i32, %c0_i32_0 : i32, i32
  }
  func.func @transform_5(%arg0: i32, %arg1: i32) -> (i32, i32) {
    %c0_i32 = arith.constant 0 : i32
    %c0_i32_0 = arith.constant 0 : i32
    %c0_i32_1 = arith.constant 0 : i32
    return %c0_i32, %c0_i32_0 : i32, i32
  }
  func.func @transform_6(%arg0: i32, %arg1: i32) -> (i32, i32, i32) {
    %c0_i32 = arith.constant 0 : i32
    %c0_i32_0 = arith.constant 0 : i32
    return %arg0, %c0_i32, %arg1 : i32, i32, i32
  }
}

</mosaic_0001>

<llo_original>
// kernel: conv_bn_relu_3d.1
$region0: #{conv_bn_relu_3d.1}
  #allocation0 [shape = 'u32[]', space=smem, size = 0x4, offset = 0x4, fixed_abs, tag = 'smem constant byte address 0x4 - core index']
  #allocation1 [shape = 'u32[144,128]{1,0:T(1,128)}', space=vmem, size = 0x12000, scoped, tag = 'internal scratch']
  #allocation2 [shape = 'bf16[36,1024]{1,0:T(8,128)(2,1)}', space=vmem, size = 0x14000, scoped, tag = 'scratch operand']
  %s0 = inlined_call_operand.vmem [shape: bf16[2,4,2048], index: 0, kind: input, shape index: {}, may-alias: {0,1,2}]
  %s1 = inlined_call_operand.vmem [shape: bf16[2,4,2048], index: 1, kind: input, shape index: {}, may-alias: {0,1,2}]
  %s2 = inlined_call_operand.vmem [shape: bf16[2,4,2048], index: 2, kind: input, shape index: {}, may-alias: {0,1,2}]
  %s3 = inlined_call_operand.vmem [shape: bf16[8,108], index: 3, kind: input, shape index: {}]
  %s4 = inlined_call_operand.vmem [shape: f32[8,1], index: 4, kind: input, shape index: {}]
  %s5 = inlined_call_operand.vmem [shape: bf16[9,1024], index: 5, kind: input, shape index: {}]
  %s6 = inlined_call_operand.vmem [shape: f32[2,8,2048], index: 6, kind: output, shape index: {}]
  %s7 = sld [smem:[#allocation0]]
  $region57: #{conv_bn_relu_3d.1} parent=0
    _
  %s9 = ssub.s32 1, %s7
  %s10 = scalar_select 0, %s9, %s7
  loop: start=0, step=1, limit=6
  $region2: #{conv_bn_relu_3d.1} parent=0 // loop_pre_header
    _
  $region3: #{conv_bn_relu_3d.1} parent=0 // loop_header
    %s12 = sphi 0, %s16
    %p13 = scmp.ge.s32.totalorder %s12, 6
    %s19 = sphi 0, %s31
    %s20 = sphi 0, %s27
    %s21 = sphi 0, %s19
    %s22 = sphi 0, %s20
    %s23 = sphi 0, %s21
    %s24 = sphi 0, %s22
    %s44 = sphi 0, %s46
    %s47 = sphi 0, %s44
    %s48 = sphi 0, %s47
    %s64 = sphi 0, %s48
    %s72 = sphi 0, %s74
    %s75 = sphi 0, %s72
    %s76 = sphi 0, %s75
    %s92 = sphi 0, %s76
    %s108 = sphi 0, %s110
    %s111 = sphi 0, %s108
    %s112 = sphi 0, %s111
    %s128 = sphi 0, %s112
    %s132 = sphi 0, %s132
    %s134 = sphi 0, %s132
    %s135 = sphi 0, %s134
    %s149 = sphi 0, %s135
    %s153 = sphi 0, %s153
    %s155 = sphi 0, %s153
    %s156 = sphi 0, %s155
    %s170 = sphi 0, %s156
    %s174 = sphi 0, %s174
    %s176 = sphi 0, %s174
    %s177 = sphi 0, %s176
    %s191 = sphi 0, %s177
    %s199 = sphi 0, %s201
    %s202 = sphi 0, %s199
    %s203 = sphi 0, %s202
    %s219 = sphi 0, %s203
  $region4: #{conv_bn_relu_3d.1} parent=0 // loop_header_branch
    %15 = sbr.rel (%p13) target = $region8
  $region5: #{conv_bn_relu_3d.1} parent=0 // loop_body
    %s17 = ssub.s32 %s12, 1
    %s18 = ssub.s32 %s12, 2
    %s25 = sadd.s32 1, %s20
    %p26 = scmp.ge.s32.totalorder %s25, 2
    %s27 = scalar_select %p26, 0, %s25
    %s28 = sadd.s32 1, %s19
    %s29 = scalar_select %p26, %s28, %s19
    %p30 = scmp.ge.s32.totalorder %s29, 2
    %s31 = scalar_select %p30, 0, %s29
    %s32 = smul.u32 %s20, 4
    %s33 = ssub.s32 %s32, 1
    %p34 = scmp.gt.s32.totalorder %s33, 0
    %s35 = scalar_select %p34, %s33, 0
    %s36 = smul.u32 %s27, 4
    %s37 = ssub.s32 %s36, 1
    %p38 = scmp.gt.s32.totalorder %s37, 0
    %s39 = scalar_select %p38, %s37, 0
    %s40 = ssub.s32 %s19, %s31
    %s41 = ssub.s32 %s35, %s39
    %s42 = sor.u32 %s40, %s41
    %p43 = scmp.eq.s32.totalorder %s42, 0
    %s45 = sadd.s32 %s44, 1
    %s46 = scalar_select %p43, %s44, %s45
    %p49 = pneg %p43
    %p50 = scmp.eq.s32.totalorder %s12, 3
    %p51 = por %p49, %p50
    %p52 = scmp.ne.s32.totalorder %s44, %s47
    %p53 = scmp.eq.s32.totalorder %s12, 0
    %p54 = por %p52, %p53
    %p55 = scmp.ne.s32.totalorder %s44, %s47
    %p56 = scmp.eq.s32.totalorder %s17, 3
    %p57 = por %p55, %p56
    %p58 = scmp.ne.s32.totalorder %s47, %s48
    %p59 = scmp.eq.s32.totalorder %s17, 0
    %p60 = por %p58, %p59
    %p61 = scmp.ne.s32.totalorder %s47, %s48
    %p62 = scmp.eq.s32.totalorder %s18, 3
    %p63 = por %p61, %p62
    %p65 = scmp.ne.s32.totalorder %s48, %s64
    %p66 = scmp.eq.s32.totalorder %s18, 0
    %p67 = por %p65, %p66
    %s68 = ssub.s32 %s19, %s31
    %s69 = ssub.s32 %s20, %s27
    %s70 = sor.u32 %s68, %s69
    %p71 = scmp.eq.s32.totalorder %s70, 0
    %s73 = sadd.s32 %s72, 1
    %s74 = scalar_select %p71, %s72, %s73
    %p77 = pneg %p71
    %p78 = scmp.eq.s32.totalorder %s12, 3
    %p79 = por %p77, %p78
    %p80 = scmp.ne.s32.totalorder %s72, %s75
    %p81 = scmp.eq.s32.totalorder %s12, 0
    %p82 = por %p80, %p81
    %p83 = scmp.ne.s32.totalorder %s72, %s75
    %p84 = scmp.eq.s32.totalorder %s17, 3
    %p85 = por %p83, %p84
    %p86 = scmp.ne.s32.totalorder %s75, %s76
    %p87 = scmp.eq.s32.totalorder %s17, 0
    %p88 = por %p86, %p87
    %p89 = scmp.ne.s32.totalorder %s75, %s76
    %p90 = scmp.eq.s32.totalorder %s18, 3
    %p91 = por %p89, %p90
    %p93 = scmp.ne.s32.totalorder %s76, %s92
    %p94 = scmp.eq.s32.totalorder %s18, 0
    %p95 = por %p93, %p94
    %s96 = smul.u32 %s20, 4
    %s97 = sadd.s32 %s96, 4
    %p98 = scmp.lt.s32.totalorder %s97, 7
    %s99 = scalar_select %p98, %s97, 7
    %s100 = smul.u32 %s27, 4
    %s101 = sadd.s32 %s100, 4
    %p102 = scmp.lt.s32.totalorder %s101, 7
    %s103 = scalar_select %p102, %s101, 7
    %s104 = ssub.s32 %s19, %s31
    %s105 = ssub.s32 %s99, %s103
    %s106 = sor.u32 %s104, %s105
    %p107 = scmp.eq.s32.totalorder %s106, 0
    %s109 = sadd.s32 %s108, 1
    %s110 = scalar_select %p107, %s108, %s109
    %p113 = pneg %p107
    %p114 = scmp.eq.s32.totalorder %s12, 3
    %p115 = por %p113, %p114
    %p116 = scmp.ne.s32.totalorder %s108, %s111
    %p117 = scmp.eq.s32.totalorder %s12, 0
    %p118 = por %p116, %p117
    %p119 = scmp.ne.s32.totalorder %s108, %s111
    %p120 = scmp.eq.s32.totalorder %s17, 3
    %p121 = por %p119, %p120
    %p122 = scmp.ne.s32.totalorder %s111, %s112
    %p123 = scmp.eq.s32.totalorder %s17, 0
    %p124 = por %p122, %p123
    %p125 = scmp.ne.s32.totalorder %s111, %s112
    %p126 = scmp.eq.s32.totalorder %s18, 3
    %p127 = por %p125, %p126
    %p129 = scmp.ne.s32.totalorder %s112, %s128
    %p130 = scmp.eq.s32.totalorder %s18, 0
    %p131 = por %p129, %p130
    %s133 = sadd.s32 %s132, 1
    %p136 = scmp.eq.s32.totalorder %s12, 3
    %p137 = scmp.ne.s32.totalorder %s132, %s134
    %p138 = scmp.eq.s32.totalorder %s12, 0
    %p139 = por %p137, %p138
    %p140 = scmp.ne.s32.totalorder %s132, %s134
    %p141 = scmp.eq.s32.totalorder %s17, 3
    %p142 = por %p140, %p141
    %p143 = scmp.ne.s32.totalorder %s134, %s135
    %p144 = scmp.eq.s32.totalorder %s17, 0
    %p145 = por %p143, %p144
    %p146 = scmp.ne.s32.totalorder %s134, %s135
    %p147 = scmp.eq.s32.totalorder %s18, 3
    %p148 = por %p146, %p147
    %p150 = scmp.ne.s32.totalorder %s135, %s149
    %p151 = scmp.eq.s32.totalorder %s18, 0
    %p152 = por %p150, %p151
    %s154 = sadd.s32 %s153, 1
    %p157 = scmp.eq.s32.totalorder %s12, 3
    %p158 = scmp.ne.s32.totalorder %s153, %s155
    %p159 = scmp.eq.s32.totalorder %s12, 0
    %p160 = por %p158, %p159
    %p161 = scmp.ne.s32.totalorder %s153, %s155
    %p162 = scmp.eq.s32.totalorder %s17, 3
    %p163 = por %p161, %p162
    %p164 = scmp.ne.s32.totalorder %s155, %s156
    %p165 = scmp.eq.s32.totalorder %s17, 0
    %p166 = por %p164, %p165
    %p167 = scmp.ne.s32.totalorder %s155, %s156
    %p168 = scmp.eq.s32.totalorder %s18, 3
    %p169 = por %p167, %p168
    %p171 = scmp.ne.s32.totalorder %s156, %s170
    %p172 = scmp.eq.s32.totalorder %s18, 0
    %p173 = por %p171, %p172
    %s175 = sadd.s32 %s174, 1
    %p178 = scmp.eq.s32.totalorder %s12, 3
    %p179 = scmp.ne.s32.totalorder %s174, %s176
    %p180 = scmp.eq.s32.totalorder %s12, 0
    %p181 = por %p179, %p180
    %p182 = scmp.ne.s32.totalorder %s174, %s176
    %p183 = scmp.eq.s32.totalorder %s17, 3
    %p184 = por %p182, %p183
    %p185 = scmp.ne.s32.totalorder %s176, %s177
    %p186 = scmp.eq.s32.totalorder %s17, 0
    %p187 = por %p185, %p186
    %p188 = scmp.ne.s32.totalorder %s176, %s177
    %p189 = scmp.eq.s32.totalorder %s18, 3
    %p190 = por %p188, %p189
    %p192 = scmp.ne.s32.totalorder %s177, %s191
    %p193 = scmp.eq.s32.totalorder %s18, 0
    %p194 = por %p192, %p193
    %s195 = ssub.s32 %s19, %s31
    %s196 = ssub.s32 %s20, %s27
    %s197 = sor.u32 %s195, %s196
    %p198 = scmp.eq.s32.totalorder %s197, 0
    %s200 = sadd.s32 %s199, 1
    %s201 = scalar_select %p198, %s199, %s200
    %p204 = pneg %p198
    %p205 = scmp.eq.s32.totalorder %s12, 3
    %p206 = por %p204, %p205
    %p207 = scmp.ne.s32.totalorder %s199, %s202
    %p208 = scmp.eq.s32.totalorder %s12, 0
    %p209 = por %p207, %p208
    %p210 = scmp.ne.s32.totalorder %s199, %s202
    %p211 = scmp.eq.s32.totalorder %s17, 3
    %p212 = por %p210, %p211
    %p213 = scmp.ne.s32.totalorder %s202, %s203
    %p214 = scmp.eq.s32.totalorder %s17, 0
    %p215 = por %p213, %p214
    %p216 = scmp.ne.s32.totalorder %s202, %s203
    %p217 = scmp.eq.s32.totalorder %s18, 3
    %p218 = por %p216, %p217
    %p220 = scmp.ne.s32.totalorder %s203, %s219
    %p221 = scmp.eq.s32.totalorder %s18, 0
    %p222 = por %p220, %p221
    %p223 = scmp.le.s32.totalorder 1, %s12
    %p224 = scmp.lt.s32.totalorder %s12, 5
    %p225 = pnand %p223, %p224
    %p226 = pneg %p225
    // Predicated region
    $region9: #{conv_bn_relu_3d.1} parent=5 // pred_check
      _
    $region10: #{conv_bn_relu_3d.1} parent=5 // pred_check_branch
      %228 = sbr.rel (%p225) target = $region12
    $region11: #{conv_bn_relu_3d.1} parent=5 // pred_region
      %s229 = ssub.s32 %s12, 1
      // Predicated region
      $region13: #{conv_bn_relu_3d.1} parent=11 // pred_check
        %p230 = pneg %p145
      $region14: #{conv_bn_relu_3d.1} parent=11 // pred_check_branch
        %232 = sbr.rel (%p230) target = $region16
      $region15: #{conv_bn_relu_3d.1} parent=11 // pred_region
        _
      $region16: #{conv_bn_relu_3d.1} parent=11 // pred_fallthru
        _
      // Predicated region
      $region17: #{conv_bn_relu_3d.1} parent=11 // pred_check
        %p233 = pneg %p166
      $region18: #{conv_bn_relu_3d.1} parent=11 // pred_check_branch
        %235 = sbr.rel (%p233) target = $region20
      $region19: #{conv_bn_relu_3d.1} parent=11 // pred_region
        _
      $region20: #{conv_bn_relu_3d.1} parent=11 // pred_fallthru
        _
      // Predicated region
      $region21: #{conv_bn_relu_3d.1} parent=11 // pred_check
        %p236 = pneg %p187
      $region22: #{conv_bn_relu_3d.1} parent=11 // pred_check_branch
        %238 = sbr.rel (%p236) target = $region24
      $region23: #{conv_bn_relu_3d.1} parent=11 // pred_region
        _
      $region24: #{conv_bn_relu_3d.1} parent=11 // pred_fallthru
        _
    $region12: #{conv_bn_relu_3d.1} parent=5 // pred_fallthru
      _
    %p239 = scmp.lt.s32.totalorder %s12, 4
    // Predicated region
    $region25: #{conv_bn_relu_3d.1} parent=5 // pred_check
      %p240 = pneg %p239
    $region26: #{conv_bn_relu_3d.1} parent=5 // pred_check_branch
      %242 = sbr.rel (%p240) target = $region28
    $region27: #{conv_bn_relu_3d.1} parent=5 // pred_region
      // Predicated region
      $region29: #{conv_bn_relu_3d.1} parent=27 // pred_check
        %p243 = pneg %p54
      $region30: #{conv_bn_relu_3d.1} parent=27 // pred_check_branch
        %245 = sbr.rel (%p243) target = $region32
      $region31: #{conv_bn_relu_3d.1} parent=27 // pred_region
        %s246 = smul.u32 %s20, 4
        %s247 = ssub.s32 %s246, 1
        %p248 = scmp.gt.s32.totalorder %s247, 0
        %s249 = scalar_select %p248, %s247, 0
        %s250 = smul.u32 2, %s249
        %p251 = scmp.lt.s32.totalorder %s19, 1
        %s252 = scalar_select %p251, %s19, 1
        %p253 = scmp.lt.s32.totalorder %s250, 15
        %s254 = scalar_select %p253, %s250, 15
        %s255 = smul.addr %s252, 16
        %s256 = sadd.s32 %s254, %s255
        %s257 = smul.addr %s256, 2
        %s258 = scalar_lea.vmem %s0, %s257
        %s259 = smul.u32 %s20, 4
        %s260 = ssub.s32 %s259, 1
        %p261 = scmp.gt.s32.totalorder %s260, 0
        %s262 = scalar_select %p261, %s260, 0
        %s263 = smul.u32 2, %s262
      $region32: #{conv_bn_relu_3d.1} parent=27 // pred_fallthru
        _
      // Predicated region
      $region33: #{conv_bn_relu_3d.1} parent=27 // pred_check
        %p264 = pneg %p82
      $region34: #{conv_bn_relu_3d.1} parent=27 // pred_check_branch
        %266 = sbr.rel (%p264) target = $region36
      $region35: #{conv_bn_relu_3d.1} parent=27 // pred_region
        %s267 = smul.u32 8, %s20
        %p268 = scmp.lt.s32.totalorder %s19, 1
        %s269 = scalar_select %p268, %s19, 1
        %p270 = scmp.lt.s32.totalorder %s267, 15
        %s271 = scalar_select %p270, %s267, 15
        %s272 = smul.addr %s269, 16
        %s273 = sadd.s32 %s271, %s272
        %s274 = smul.addr %s273, 2
        %s275 = scalar_lea.vmem %s1, %s274
        %s276 = smul.u32 8, %s20
      $region36: #{conv_bn_relu_3d.1} parent=27 // pred_fallthru
        _
      // Predicated region
      $region37: #{conv_bn_relu_3d.1} parent=27 // pred_check
        %p277 = pneg %p118
      $region38: #{conv_bn_relu_3d.1} parent=27 // pred_check_branch
        %279 = sbr.rel (%p277) target = $region40
      $region39: #{conv_bn_relu_3d.1} parent=27 // pred_region
        %s280 = smul.u32 %s20, 4
        %s281 = sadd.s32 %s280, 4
        %p282 = scmp.lt.s32.totalorder %s281, 7
        %s283 = scalar_select %p282, %s281, 7
        %s284 = smul.u32 2, %s283
        %p285 = scmp.lt.s32.totalorder %s19, 1
        %s286 = scalar_select %p285, %s19, 1
        %p287 = scmp.lt.s32.totalorder %s284, 15
        %s288 = scalar_select %p287, %s284, 15
        %s289 = smul.addr %s286, 16
        %s290 = sadd.s32 %s288, %s289
        %s291 = smul.addr %s290, 2
        %s292 = scalar_lea.vmem %s2, %s291
        %s293 = smul.u32 %s20, 4
        %s294 = sadd.s32 %s293, 4
        %p295 = scmp.lt.s32.totalorder %s294, 7
        %s296 = scalar_select %p295, %s294, 7
        %s297 = smul.u32 2, %s296
      $region40: #{conv_bn_relu_3d.1} parent=27 // pred_fallthru
        _
    $region28: #{conv_bn_relu_3d.1} parent=5 // pred_fallthru
      _
    %p298 = scmp.le.s32.totalorder 1, %s12
    %p299 = scmp.lt.s32.totalorder %s12, 5
    %p300 = pnand %p298, %p299
    %p301 = pneg %p300
    // Predicated region
    $region41: #{conv_bn_relu_3d.1} parent=5 // pred_check
      _
    $region42: #{conv_bn_relu_3d.1} parent=5 // pred_check_branch
      %303 = sbr.rel (%p300) target = $region44
    $region43: #{conv_bn_relu_3d.1} parent=5 // pred_region
      %s304 = ssub.s32 %s12, 1
      %s305 = smul.u32 %s22, 4
      %s306 = ssub.s32 %s305, 1
      %p307 = scmp.gt.s32.totalorder %s306, 0
      %s308 = scalar_select %p307, %s306, 0
      %s309 = smul.u32 2, %s308
      %p310 = scmp.lt.s32.totalorder %s21, 1
      %s311 = scalar_select %p310, %s21, 1
      %p312 = scmp.lt.s32.totalorder %s309, 15
      %s313 = scalar_select %p312, %s309, 15
      %s314 = smul.addr %s311, 16
      %s315 = sadd.s32 %s313, %s314
      %s316 = smul.addr %s315, 2
      %s317 = scalar_lea.vmem %s0, %s316
      %p318 = pneg %p60
      %p319 = pneg %p57
      %s320 = smul.u32 8, %s22
      %p321 = scmp.lt.s32.totalorder %s21, 1
      %s322 = scalar_select %p321, %s21, 1
      %p323 = scmp.lt.s32.totalorder %s320, 15
      %s324 = scalar_select %p323, %s320, 15
      %s325 = smul.addr %s322, 16
      %s326 = sadd.s32 %s324, %s325
      %s327 = smul.addr %s326, 2
      %s328 = scalar_lea.vmem %s1, %s327
      %p329 = pneg %p88
      %p330 = pneg %p85
      %s331 = smul.u32 %s22, 4
      %s332 = sadd.s32 %s331, 4
      %p333 = scmp.lt.s32.totalorder %s332, 7
      %s334 = scalar_select %p333, %s332, 7
      %s335 = smul.u32 2, %s334
      %p336 = scmp.lt.s32.totalorder %s21, 1
      %s337 = scalar_select %p336, %s21, 1
      %p338 = scmp.lt.s32.totalorder %s335, 15
      %s339 = scalar_select %p338, %s335, 15
      %s340 = smul.addr %s337, 16
      %s341 = sadd.s32 %s339, %s340
      %s342 = smul.addr %s341, 2
      %s343 = scalar_lea.vmem %s2, %s342
      %p344 = pneg %p124
      %p345 = pneg %p121
      %p346 = pneg %p145
      %p347 = pneg %p142
      %p348 = pneg %p166
      %p349 = pneg %p163
      %p350 = pneg %p187
      %p351 = pneg %p184
      %p352 = pneg %p215
      %p353 = pneg %p212
      %s354 = smul.u32 8, %s22
      %p355 = scmp.lt.s32.totalorder %s21, 1
      %s356 = scalar_select %p355, %s21, 1
      %p357 = scmp.lt.s32.totalorder %s354, 15
      %s358 = scalar_select %p357, %s354, 15
      %s359 = smul.addr %s356, 16
      %s360 = sadd.s32 %s358, %s359
      %s361 = smul.addr %s360, 8
      %s362 = scalar_lea.vmem %s6, %s361
      %s363 = smul.u32 %s22, 4
      %s364 = ssub.s32 %s363, 1
      %p365 = scmp.gt.s32.totalorder %s364, 0
      %s366 = scalar_select %p365, %s364, 0
      %s367 = smul.u32 2, %s366
      %p368 = scmp.lt.s32.totalorder %s21, 1
      %s369 = scalar_select %p368, %s21, 1
      %p370 = scmp.lt.s32.totalorder %s367, 15
      %s371 = scalar_select %p370, %s367, 15
      %s372 = smul.addr %s369, 16
      %s373 = sadd.s32 %s371, %s372
      %s374 = smul.addr %s373, 2
      %s375 = scalar_lea.vmem %s0, %s374
      %s376 = smul.u32 %s22, 4
      %s377 = ssub.s32 %s376, 1
      %p378 = scmp.gt.s32.totalorder %s377, 0
      %s379 = scalar_select %p378, %s377, 0
      %s380 = smul.u32 2, %s379
      %s381 = smul.u32 8, %s22
      %p382 = scmp.lt.s32.totalorder %s21, 1
      %s383 = scalar_select %p382, %s21, 1
      %p384 = scmp.lt.s32.totalorder %s381, 15
      %s385 = scalar_select %p384, %s381, 15
      %s386 = smul.addr %s383, 16
      %s387 = sadd.s32 %s385, %s386
      %s388 = smul.addr %s387, 2
      %s389 = scalar_lea.vmem %s1, %s388
      %s390 = smul.u32 8, %s22
      %s391 = smul.u32 %s22, 4
      %s392 = sadd.s32 %s391, 4
      %p393 = scmp.lt.s32.totalorder %s392, 7
      %s394 = scalar_select %p393, %s392, 7
      %s395 = smul.u32 2, %s394
      %p396 = scmp.lt.s32.totalorder %s21, 1
      %s397 = scalar_select %p396, %s21, 1
      %p398 = scmp.lt.s32.totalorder %s395, 15
      %s399 = scalar_select %p398, %s395, 15
      %s400 = smul.addr %s397, 16
      %s401 = sadd.s32 %s399, %s400
      %s402 = smul.addr %s401, 2
      %s403 = scalar_lea.vmem %s2, %s402
      %s404 = smul.u32 %s22, 4
      %s405 = sadd.s32 %s404, 4
      %p406 = scmp.lt.s32.totalorder %s405, 7
      %s407 = scalar_select %p406, %s405, 7
      %s408 = smul.u32 2, %s407
      %s409 = smul.u32 8, %s22
      %p410 = scmp.lt.s32.totalorder %s21, 1
      %s411 = scalar_select %p410, %s21, 1
      %p412 = scmp.lt.s32.totalorder %s409, 15
      %s413 = scalar_select %p412, %s409, 15
      %s414 = smul.addr %s411, 16
      %s415 = sadd.s32 %s413, %s414
      %s416 = smul.addr %s415, 8
      %s417 = scalar_lea.vmem %s6, %s416
      %s418 = smul.u32 8, %s22
      %v420 = vld [vmem:[%s389] sm:$0xff]
      %v421 = vld [vmem:[%s389 + $0x8] sm:$0xff]
      %p422 = scmp.gt.s32.totalorder %s22, 0
      %s423 = scalar_select %p422, 1.0, 0.0
      %p425 = scmp.ne.f32.partialorder %s423, %s423
      %s426 = sshrl.u32 %s423, 16
      %s427 = sand.u32 %s426, 1
      %s428 = sadd.s32 32767, %s427
      %s429 = sadd.s32 %s423, %s428
      %s430 = sand.u32 %s429, 4294901760
      %s431 = scalar_select %p425, 2143289344, %s430
      %s433 = sshrl.u32 %s431, 16
      %p434 = scmp.lt.s32.totalorder %s22, 1
      %s435 = scalar_select %p434, 1.0, 0.0
      %p437 = scmp.ne.f32.partialorder %s435, %s435
      %s438 = sshrl.u32 %s435, 16
      %s439 = sand.u32 %s438, 1
      %s440 = sadd.s32 32767, %s439
      %s441 = sadd.s32 %s435, %s440
      %s442 = sand.u32 %s441, 4294901760
      %s443 = scalar_select %p437, 2143289344, %s442
      %s445 = sshrl.u32 %s443, 16
      %v446 = vld [vmem:[%s375] sm:$0xf]
      %s447 = sshll.u32 %s433, 16
      %s448 = sor.u32 %s433, %s447
      %v449 = vstv %s448
      %v451 = vmul.bf16 %v446, %v449
      %v452 = vld [vmem:[%s403] sm:$0xf]
      %s453 = sshll.u32 %s445, 16
      %s454 = sor.u32 %s445, %s453
      %v455 = vstv %s454
      %v457 = vmul.bf16 %v452, %v455
      %v458 = vld [vmem:[%s5] sm:$0xff]
      %v459 = vld [vmem:[%s5 + $0x8] sm:$0xff]
      %v460 = vld [vmem:[%s5 + $0x10] sm:$0xff]
      %v461 = vld [vmem:[%s5 + $0x18] sm:$0xff]
      %v462 = vld [vmem:[%s5 + $0x20] sm:$0x11]
      %v463 = vld [vmem:[%s5 + $0x28] sm:$0x11]
      %v464 = vld [vmem:[%s5 + $0x30] sm:$0x11]
      %v465 = vld [vmem:[%s5 + $0x38] sm:$0x11]
      %v468 = vunpack.c.l.s4 1983009808
      %v469 = vunpack.c.0.s8 %v468
      %v470 = vlaneseq
      %v471 = vshrl.u32 %v470, 7
      %v472 = vsub.s32 %v469, %v471
      %v473 = vrot.slane %v451, %v472
      %v474 = vcombine.high %v473, %v473
      %v479 = vcombine.high %v420, %v420
      %v481 = vunpack.c.l.s4 1983009808
      %v482 = vunpack.c.0.s8 %v481
      %v483 = vlaneseq
      %v484 = vshrl.u32 %v483, 7
      %v485 = vsub.s32 %v482, %v484
      %v486 = vrot.slane %v420, %v485
      %v488 = vunpack.c.l.s4 1983009808
      %v489 = vunpack.c.0.s8 %v488
      %v490 = vlaneseq
      %v491 = vshrl.u32 %v490, 7
      %v492 = vsub.s32 %v489, %v491
      %v493 = vrot.slane %v479, %v492
      %v494 = vcombine.high %v486, %v486
      %v495 = vcombine.high %v493, %v493
      %v497 = vunpack.c.l.s4 1983009808
      %v498 = vunpack.c.0.s8 %v497
      %v499 = vlaneseq
      %v500 = vshrl.u32 %v499, 7
      %v501 = vsub.s32 %v498, %v500
      %v502 = vrot.slane %v421, %v501
      %v503 = vcombine.high %v502, %v502
      %510 = vrot.lane.b32.xlu0 %v503, 17
      %v511 = vpop.permute.xlu0 %510
      %512 = vrot.lane.b32.xlu0 %v473, 17
      %v513 = vpop.permute.xlu0 %512
      %514 = vrot.lane.b32.xlu0 %v474, 17
      %v515 = vpop.permute.xlu0 %514
      %516 = vrot.lane.b32.xlu0 %v486, 17
      %v517 = vpop.permute.xlu0 %516
      %518 = vrot.lane.b32.xlu0 %v494, 17
      %v519 = vpop.permute.xlu0 %518
      %520 = vrot.lane.b32.xlu0 %v493, 17
      %v521 = vpop.permute.xlu0 %520
      %522 = vrot.lane.b32.xlu0 %v495, 17
      %v523 = vpop.permute.xlu0 %522
      %524 = vrot.lane.b32.xlu0 %v502, 17
      %v525 = vpop.permute.xlu0 %524
      %vm526 = vcmask 138240
      %v527 = vsel %vm526, %v513, %v515
      %v528 = vsel %vm526, %v515, %v517
      %v529 = vsel %vm526, %v517, %v519
      %v530 = vsel %vm526, %v519, %v521
      %v531 = vsel %vm526, %v521, %v523
      %v532 = vsel %vm526, %v523, %v525
      %v533 = vsel %vm526, %v525, %v511
      %vm541 = vcmask 138240
      %v544 = vsel %vm541, %v511, %v513
      %v550 = vunpack.c.l.b16 %v458
      %v551 = vunpack.c.h.b16 %v458
      %v552 = vunpack.c.l.b16 %v459
      %v553 = vunpack.c.h.b16 %v459
      %v554 = vunpack.c.l.b16 %v460
      %v555 = vunpack.c.h.b16 %v460
      %v556 = vunpack.c.l.b16 %v461
      %v557 = vunpack.c.h.b16 %v461
      %v558 = vpack.c.b16 %v550, %v550
      %v559 = vpack.c.b16 %v551, %v551
      %v560 = vpack.c.b16 %v552, %v552
      %v561 = vpack.c.b16 %v553, %v553
      %v562 = vpack.c.b16 %v554, %v554
      %v563 = vpack.c.b16 %v555, %v555
      %v564 = vpack.c.b16 %v556, %v556
      %v565 = vpack.c.b16 %v557, %v557
      %v567 = vpack.i.b16 %v558, %v558
      %v569 = vlaneseq
      %v570 = vshrl.u32 %v569, 7
      %v571 = vsub.s32 0, %v570
      %v572 = vrot.slane %v567, %v571
      %v574 = vpack.i.b16 %v559, %v559
      %v576 = vlaneseq
      %v577 = vshrl.u32 %v576, 7
      %v578 = vsub.s32 0, %v577
      %v579 = vrot.slane %v574, %v578
      %v581 = vpack.i.b16 %v560, %v560
      %v583 = vlaneseq
      %v584 = vshrl.u32 %v583, 7
      %v585 = vsub.s32 0, %v584
      %v586 = vrot.slane %v581, %v585
      %v588 = vpack.i.b16 %v561, %v561
      %v590 = vlaneseq
      %v591 = vshrl.u32 %v590, 7
      %v592 = vsub.s32 0, %v591
      %v593 = vrot.slane %v588, %v592
      %v595 = vpack.i.b16 %v562, %v562
      %v597 = vlaneseq
      %v598 = vshrl.u32 %v597, 7
      %v599 = vsub.s32 0, %v598
      %v600 = vrot.slane %v595, %v599
      %v602 = vpack.i.b16 %v563, %v563
      %v604 = vlaneseq
      %v605 = vshrl.u32 %v604, 7
      %v606 = vsub.s32 0, %v605
      %v607 = vrot.slane %v602, %v606
      %v609 = vpack.i.b16 %v564, %v564
      %v611 = vlaneseq
      %v612 = vshrl.u32 %v611, 7
      %v613 = vsub.s32 0, %v612
      %v614 = vrot.slane %v609, %v613
      %v616 = vpack.i.b16 %v565, %v565
      %v618 = vlaneseq
      %v619 = vshrl.u32 %v618, 7
      %v620 = vsub.s32 0, %v619
      %v621 = vrot.slane %v616, %v620
      %v622 = vmul.bf16 %v544, %v572
      %v623 = vmul.bf16 %v527, %v579
      %v624 = vmul.bf16 %v528, %v586
      %v625 = vmul.bf16 %v529, %v593
      %v626 = vmul.bf16 %v530, %v600
      %v627 = vmul.bf16 %v531, %v607
      %v628 = vmul.bf16 %v532, %v614
      %v629 = vmul.bf16 %v533, %v621
      %v638 = vunpack.c.l.b16 %v622
      %v639 = vunpack.c.l.b16 %v623
      %v640 = vunpack.c.l.b16 %v624
      %v641 = vunpack.c.l.b16 %v625
      %v642 = vunpack.c.l.b16 %v626
      %v643 = vunpack.c.l.b16 %v627
      %v644 = vunpack.c.l.b16 %v628
      %v645 = vunpack.c.l.b16 %v629
      %v646 = vpack.c.b16 %v639, %v638
      %v647 = vpack.c.b16 %v641, %v640
      %v648 = vpack.c.b16 %v643, %v642
      %v649 = vpack.c.b16 %v645, %v644
      %654 = vst [vmem:[#allocation2] sm:$0x33] %v646
      %655 = vst [vmem:[#allocation2 + $0x8] sm:$0x33] %v647
      %656 = vst [vmem:[#allocation2 + $0x10] sm:$0x33] %v648
      %657 = vst [vmem:[#allocation2 + $0x18] sm:$0x33] %v649
      %658 = vrot.lane.b32.xlu0 %v503, 16
      %v659 = vpop.permute.xlu0 %658
      %660 = vrot.lane.b32.xlu0 %v473, 16
      %v661 = vpop.permute.xlu0 %660
      %662 = vrot.lane.b32.xlu0 %v474, 16
      %v663 = vpop.permute.xlu0 %662
      %664 = vrot.lane.b32.xlu0 %v486, 16
      %v665 = vpop.permute.xlu0 %664
      %666 = vrot.lane.b32.xlu0 %v494, 16
      %v667 = vpop.permute.xlu0 %666
      %668 = vrot.lane.b32.xlu0 %v493, 16
      %v669 = vpop.permute.xlu0 %668
      %670 = vrot.lane.b32.xlu0 %v495, 16
      %v671 = vpop.permute.xlu0 %670
      %672 = vrot.lane.b32.xlu0 %v502, 16
      %v673 = vpop.permute.xlu0 %672
      %vm674 = vcmask 130048
      %v675 = vsel %vm674, %v661, %v663
      %v676 = vsel %vm674, %v663, %v665
      %v677 = vsel %vm674, %v665, %v667
      %v678 = vsel %vm674, %v667, %v669
      %v679 = vsel %vm674, %v669, %v671
      %v680 = vsel %vm674, %v671, %v673
      %v681 = vsel %vm674, %v673, %v659
      %vm689 = vcmask 130048
      %v692 = vsel %vm689, %v659, %v661
      %v694 = vshrl.u32 %v558, 16
      %v695 = vpack.i.b16 %v694, %v694
      %v697 = vlaneseq
      %v698 = vshrl.u32 %v697, 7
      %v699 = vsub.s32 0, %v698
      %v700 = vrot.slane %v695, %v699
      %v701 = vshrl.u32 %v559, 16
      %v702 = vpack.i.b16 %v701, %v701
      %v704 = vlaneseq
      %v705 = vshrl.u32 %v704, 7
      %v706 = vsub.s32 0, %v705
      %v707 = vrot.slane %v702, %v706
      %v708 = vshrl.u32 %v560, 16
      %v709 = vpack.i.b16 %v708, %v708
      %v711 = vlaneseq
      %v712 = vshrl.u32 %v711, 7
      %v713 = vsub.s32 0, %v712
      %v714 = vrot.slane %v709, %v713
      %v715 = vshrl.u32 %v561, 16
      %v716 = vpack.i.b16 %v715, %v715
      %v718 = vlaneseq
      %v719 = vshrl.u32 %v718, 7
      %v720 = vsub.s32 0, %v719
      %v721 = vrot.slane %v716, %v720
      %v722 = vshrl.u32 %v562, 16
      %v723 = vpack.i.b16 %v722, %v722
      %v725 = vlaneseq
      %v726 = vshrl.u32 %v725, 7
      %v727 = vsub.s32 0, %v726
      %v728 = vrot.slane %v723, %v727
      %v729 = vshrl.u32 %v563, 16
      %v730 = vpack.i.b16 %v729, %v729
      %v732 = vlaneseq
      %v733 = vshrl.u32 %v732, 7
      %v734 = vsub.s32 0, %v733
      %v735 = vrot.slane %v730, %v734
      %v736 = vshrl.u32 %v564, 16
      %v737 = vpack.i.b16 %v736, %v736
      %v739 = vlaneseq
      %v740 = vshrl.u32 %v739, 7
      %v741 = vsub.s32 0, %v740
      %v742 = vrot.slane %v737, %v741
      %v743 = vshrl.u32 %v565, 16
      %v744 = vpack.i.b16 %v743, %v743
      %v746 = vlaneseq
      %v747 = vshrl.u32 %v746, 7
      %v748 = vsub.s32 0, %v747
      %v749 = vrot.slane %v744, %v748
      %v750 = vmul.bf16 %v692, %v700
      %v751 = vmul.bf16 %v675, %v707
      %v752 = vmul.bf16 %v676, %v714
      %v753 = vmul.bf16 %v677, %v721
      %v754 = vmul.bf16 %v678, %v728
      %v755 = vmul.bf16 %v679, %v735
      %v756 = vmul.bf16 %v680, %v742
      %v757 = vmul.bf16 %v681, %v749
      %v766 = vunpack.c.l.b16 %v750
      %v767 = vunpack.c.l.b16 %v751
      %v768 = vunpack.c.l.b16 %v752
      %v769 = vunpack.c.l.b16 %v753
      %v770 = vunpack.c.l.b16 %v754
      %v771 = vunpack.c.l.b16 %v755
      %v772 = vunpack.c.l.b16 %v756
      %v773 = vunpack.c.l.b16 %v757
      %v774 = vpack.c.b16 %v767, %v766
      %v775 = vpack.c.b16 %v769, %v768
      %v776 = vpack.c.b16 %v771, %v770
      %v777 = vpack.c.b16 %v773, %v772
      %v778 = vrot.slane %v774, 6
      %v779 = vrot.slane %v775, 6
      %v780 = vrot.slane %v776, 6
      %v781 = vrot.slane %v777, 6
      %786 = vst [vmem:[#allocation2] sm:$0xcc] %v778
      %787 = vst [vmem:[#allocation2 + $0x8] sm:$0xcc] %v779
      %788 = vst [vmem:[#allocation2 + $0x10] sm:$0xcc] %v780
      %789 = vst [vmem:[#allocation2 + $0x18] sm:$0xcc] %v781
      %790 = vrot.lane.b32.xlu0 %v503, 15
      %v791 = vpop.permute.xlu0 %790
      %792 = vrot.lane.b32.xlu0 %v473, 15
      %v793 = vpop.permute.xlu0 %792
      %794 = vrot.lane.b32.xlu0 %v474, 15
      %v795 = vpop.permute.xlu0 %794
      %796 = vrot.lane.b32.xlu0 %v486, 15
      %v797 = vpop.permute.xlu0 %796
      %798 = vrot.lane.b32.xlu0 %v494, 15
      %v799 = vpop.permute.xlu0 %798
      %800 = vrot.lane.b32.xlu0 %v493, 15
      %v801 = vpop.permute.xlu0 %800
      %802 = vrot.lane.b32.xlu0 %v495, 15
      %v803 = vpop.permute.xlu0 %802
      %804 = vrot.lane.b32.xlu0 %v502, 15
      %v805 = vpop.permute.xlu0 %804
      %vm806 = vcmask 121856
      %v807 = vsel %vm806, %v793, %v795
      %v808 = vsel %vm806, %v795, %v797
      %v809 = vsel %vm806, %v797, %v799
      %v810 = vsel %vm806, %v799, %v801
      %v811 = vsel %vm806, %v801, %v803
      %v812 = vsel %vm806, %v803, %v805
      %v813 = vsel %vm806, %v805, %v791
      %vm821 = vcmask 121856
      %v824 = vsel %vm821, %v791, %v793
      %v826 = vlaneseq
      %v827 = vshrl.u32 %v826, 7
      %v828 = vsub.s32 1, %v827
      %v829 = vrot.slane %v567, %v828
      %v830 = vlaneseq
      %v831 = vshrl.u32 %v830, 7
      %v832 = vsub.s32 1, %v831
      %v833 = vrot.slane %v574, %v832
      %v834 = vlaneseq
      %v835 = vshrl.u32 %v834, 7
      %v836 = vsub.s32 1, %v835
      %v837 = vrot.slane %v581, %v836
      %v838 = vlaneseq
      %v839 = vshrl.u32 %v838, 7
      %v840 = vsub.s32 1, %v839
      %v841 = vrot.slane %v588, %v840
      %v842 = vlaneseq
      %v843 = vshrl.u32 %v842, 7
      %v844 = vsub.s32 1, %v843
      %v845 = vrot.slane %v595, %v844
      %v846 = vlaneseq
      %v847 = vshrl.u32 %v846, 7
      %v848 = vsub.s32 1, %v847
      %v849 = vrot.slane %v602, %v848
      %v850 = vlaneseq
      %v851 = vshrl.u32 %v850, 7
      %v852 = vsub.s32 1, %v851
      %v853 = vrot.slane %v609, %v852
      %v854 = vlaneseq
      %v855 = vshrl.u32 %v854, 7
      %v856 = vsub.s32 1, %v855
      %v857 = vrot.slane %v616, %v856
      %v858 = vmul.bf16 %v824, %v829
      %v859 = vmul.bf16 %v807, %v833
      %v860 = vmul.bf16 %v808, %v837
      %v861 = vmul.bf16 %v809, %v841
      %v862 = vmul.bf16 %v810, %v845
      %v863 = vmul.bf16 %v811, %v849
      %v864 = vmul.bf16 %v812, %v853
      %v865 = vmul.bf16 %v813, %v857
      %v874 = vunpack.c.l.b16 %v858
      %v875 = vunpack.c.l.b16 %v859
      %v876 = vunpack.c.l.b16 %v860
      %v877 = vunpack.c.l.b16 %v861
      %v878 = vunpack.c.l.b16 %v862
      %v879 = vunpack.c.l.b16 %v863
      %v880 = vunpack.c.l.b16 %v864
      %v881 = vunpack.c.l.b16 %v865
      %v882 = vpack.c.b16 %v875, %v874
      %v883 = vpack.c.b16 %v877, %v876
      %v884 = vpack.c.b16 %v879, %v878
      %v885 = vpack.c.b16 %v881, %v880
      %890 = vst [vmem:[#allocation2 + $0x20] sm:$0x33] %v882
      %891 = vst [vmem:[#allocation2 + $0x28] sm:$0x33] %v883
      %892 = vst [vmem:[#allocation2 + $0x30] sm:$0x33] %v884
      %893 = vst [vmem:[#allocation2 + $0x38] sm:$0x33] %v885
      %894 = vrot.lane.b32.xlu0 %v503, 1
      %v895 = vpop.permute.xlu0 %894
      %896 = vrot.lane.b32.xlu0 %v473, 1
      %v897 = vpop.permute.xlu0 %896
      %898 = vrot.lane.b32.xlu0 %v474, 1
      %v899 = vpop.permute.xlu0 %898
      %900 = vrot.lane.b32.xlu0 %v486, 1
      %v901 = vpop.permute.xlu0 %900
      %902 = vrot.lane.b32.xlu0 %v494, 1
      %v903 = vpop.permute.xlu0 %902
      %904 = vrot.lane.b32.xlu0 %v493, 1
      %v905 = vpop.permute.xlu0 %904
      %906 = vrot.lane.b32.xlu0 %v495, 1
      %v907 = vpop.permute.xlu0 %906
      %908 = vrot.lane.b32.xlu0 %v502, 1
      %v909 = vpop.permute.xlu0 %908
      %vm910 = vcmask 7168
      %v911 = vsel %vm910, %v897, %v899
      %v912 = vsel %vm910, %v899, %v901
      %v913 = vsel %vm910, %v901, %v903
      %v914 = vsel %vm910, %v903, %v905
      %v915 = vsel %vm910, %v905, %v907
      %v916 = vsel %vm910, %v907, %v909
      %v917 = vsel %vm910, %v909, %v895
      %vm925 = vcmask 7168
      %v928 = vsel %vm925, %v895, %v897
      %v930 = vlaneseq
      %v931 = vshrl.u32 %v930, 7
      %v932 = vsub.s32 1, %v931
      %v933 = vrot.slane %v695, %v932
      %v934 = vlaneseq
      %v935 = vshrl.u32 %v934, 7
      %v936 = vsub.s32 1, %v935
      %v937 = vrot.slane %v702, %v936
      %v938 = vlaneseq
      %v939 = vshrl.u32 %v938, 7
      %v940 = vsub.s32 1, %v939
      %v941 = vrot.slane %v709, %v940
      %v942 = vlaneseq
      %v943 = vshrl.u32 %v942, 7
      %v944 = vsub.s32 1, %v943
      %v945 = vrot.slane %v716, %v944
      %v946 = vlaneseq
      %v947 = vshrl.u32 %v946, 7
      %v948 = vsub.s32 1, %v947
      %v949 = vrot.slane %v723, %v948
      %v950 = vlaneseq
      %v951 = vshrl.u32 %v950, 7
      %v952 = vsub.s32 1, %v951
      %v953 = vrot.slane %v730, %v952
      %v954 = vlaneseq
      %v955 = vshrl.u32 %v954, 7
      %v956 = vsub.s32 1, %v955
      %v957 = vrot.slane %v737, %v956
      %v958 = vlaneseq
      %v959 = vshrl.u32 %v958, 7
      %v960 = vsub.s32 1, %v959
      %v961 = vrot.slane %v744, %v960
      %v962 = vmul.bf16 %v928, %v933
      %v963 = vmul.bf16 %v911, %v937
      %v964 = vmul.bf16 %v912, %v941
      %v965 = vmul.bf16 %v913, %v945
      %v966 = vmul.bf16 %v914, %v949
      %v967 = vmul.bf16 %v915, %v953
      %v968 = vmul.bf16 %v916, %v957
      %v969 = vmul.bf16 %v917, %v961
      %v978 = vunpack.c.l.b16 %v962
      %v979 = vunpack.c.l.b16 %v963
      %v980 = vunpack.c.l.b16 %v964
      %v981 = vunpack.c.l.b16 %v965
      %v982 = vunpack.c.l.b16 %v966
      %v983 = vunpack.c.l.b16 %v967
      %v984 = vunpack.c.l.b16 %v968
      %v985 = vunpack.c.l.b16 %v969
      %v986 = vpack.c.b16 %v979, %v978
      %v987 = vpack.c.b16 %v981, %v980
      %v988 = vpack.c.b16 %v983, %v982
      %v989 = vpack.c.b16 %v985, %v984
      %v990 = vrot.slane %v986, 6
      %v991 = vrot.slane %v987, 6
      %v992 = vrot.slane %v988, 6
      %v993 = vrot.slane %v989, 6
      %998 = vst [vmem:[#allocation2 + $0x20] sm:$0xcc] %v990
      %999 = vst [vmem:[#allocation2 + $0x28] sm:$0xcc] %v991
      %1000 = vst [vmem:[#allocation2 + $0x30] sm:$0xcc] %v992
      %1001 = vst [vmem:[#allocation2 + $0x38] sm:$0xcc] %v993
      %v1002 = vlaneseq
      %v1003 = vshrl.u32 %v1002, 7
      %v1004 = vsub.s32 2, %v1003
      %v1005 = vrot.slane %v567, %v1004
      %v1006 = vlaneseq
      %v1007 = vshrl.u32 %v1006, 7
      %v1008 = vsub.s32 2, %v1007
      %v1009 = vrot.slane %v574, %v1008
      %v1010 = vlaneseq
      %v1011 = vshrl.u32 %v1010, 7
      %v1012 = vsub.s32 2, %v1011
      %v1013 = vrot.slane %v581, %v1012
      %v1014 = vlaneseq
      %v1015 = vshrl.u32 %v1014, 7
      %v1016 = vsub.s32 2, %v1015
      %v1017 = vrot.slane %v588, %v1016
      %v1018 = vlaneseq
      %v1019 = vshrl.u32 %v1018, 7
      %v1020 = vsub.s32 2, %v1019
      %v1021 = vrot.slane %v595, %v1020
      %v1022 = vlaneseq
      %v1023 = vshrl.u32 %v1022, 7
      %v1024 = vsub.s32 2, %v1023
      %v1025 = vrot.slane %v602, %v1024
      %v1026 = vlaneseq
      %v1027 = vshrl.u32 %v1026, 7
      %v1028 = vsub.s32 2, %v1027
      %v1029 = vrot.slane %v609, %v1028
      %v1030 = vlaneseq
      %v1031 = vshrl.u32 %v1030, 7
      %v1032 = vsub.s32 2, %v1031
      %v1033 = vrot.slane %v616, %v1032
      %v1034 = vmul.bf16 %v473, %v1005
      %v1035 = vmul.bf16 %v474, %v1009
      %v1036 = vmul.bf16 %v486, %v1013
      %v1037 = vmul.bf16 %v494, %v1017
      %v1038 = vmul.bf16 %v493, %v1021
      %v1039 = vmul.bf16 %v495, %v1025
      %v1040 = vmul.bf16 %v502, %v1029
      %v1041 = vmul.bf16 %v503, %v1033
      %v1050 = vunpack.c.l.b16 %v1034
      %v1051 = vunpack.c.l.b16 %v1035
      %v1052 = vunpack.c.l.b16 %v1036
      %v1053 = vunpack.c.l.b16 %v1037
      %v1054 = vunpack.c.l.b16 %v1038
      %v1055 = vunpack.c.l.b16 %v1039
      %v1056 = vunpack.c.l.b16 %v1040
      %v1057 = vunpack.c.l.b16 %v1041
      %v1058 = vpack.c.b16 %v1051, %v1050
      %v1059 = vpack.c.b16 %v1053, %v1052
      %v1060 = vpack.c.b16 %v1055, %v1054
      %v1061 = vpack.c.b16 %v1057, %v1056
      %1066 = vst [vmem:[#allocation2 + $0x40] sm:$0x33] %v1058
      %1067 = vst [vmem:[#allocation2 + $0x48] sm:$0x33] %v1059
      %1068 = vst [vmem:[#allocation2 + $0x50] sm:$0x33] %v1060
      %1069 = vst [vmem:[#allocation2 + $0x58] sm:$0x33] %v1061
      %1070 = vrot.lane.b32.xlu0 %v473, 127
      %v1071 = vpop.permute.xlu0 %1070
      %1072 = vrot.lane.b32.xlu0 %v474, 127
      %v1073 = vpop.permute.xlu0 %1072
      %1074 = vrot.lane.b32.xlu0 %v486, 127
      %v1075 = vpop.permute.xlu0 %1074
      %1076 = vrot.lane.b32.xlu0 %v494, 127
      %v1077 = vpop.permute.xlu0 %1076
      %1078 = vrot.lane.b32.xlu0 %v493, 127
      %v1079 = vpop.permute.xlu0 %1078
      %1080 = vrot.lane.b32.xlu0 %v495, 127
      %v1081 = vpop.permute.xlu0 %1080
      %1082 = vrot.lane.b32.xlu0 %v502, 127
      %v1083 = vpop.permute.xlu0 %1082
      %1084 = vrot.lane.b32.xlu0 %v503, 127
      %v1085 = vpop.permute.xlu0 %1084
      %vm1086 = vcmask 1039360
      %v1087 = vsel %vm1086, %v1071, %v1073
      %v1088 = vsel %vm1086, %v1073, %v1075
      %v1089 = vsel %vm1086, %v1075, %v1077
      %v1090 = vsel %vm1086, %v1077, %v1079
      %v1091 = vsel %vm1086, %v1079, %v1081
      %v1092 = vsel %vm1086, %v1081, %v1083
      %v1093 = vsel %vm1086, %v1083, %v1085
      %vm1101 = vcmask 1039360
      %v1104 = vsel %vm1101, %v1085, %v1071
      %v1106 = vlaneseq
      %v1107 = vshrl.u32 %v1106, 7
      %v1108 = vsub.s32 2, %v1107
      %v1109 = vrot.slane %v695, %v1108
      %v1110 = vlaneseq
      %v1111 = vshrl.u32 %v1110, 7
      %v1112 = vsub.s32 2, %v1111
      %v1113 = vrot.slane %v702, %v1112
      %v1114 = vlaneseq
      %v1115 = vshrl.u32 %v1114, 7
      %v1116 = vsub.s32 2, %v1115
      %v1117 = vrot.slane %v709, %v1116
      %v1118 = vlaneseq
      %v1119 = vshrl.u32 %v1118, 7
      %v1120 = vsub.s32 2, %v1119
      %v1121 = vrot.slane %v716, %v1120
      %v1122 = vlaneseq
      %v1123 = vshrl.u32 %v1122, 7
      %v1124 = vsub.s32 2, %v1123
      %v1125 = vrot.slane %v723, %v1124
      %v1126 = vlaneseq
      %v1127 = vshrl.u32 %v1126, 7
      %v1128 = vsub.s32 2, %v1127
      %v1129 = vrot.slane %v730, %v1128
      %v1130 = vlaneseq
      %v1131 = vshrl.u32 %v1130, 7
      %v1132 = vsub.s32 2, %v1131
      %v1133 = vrot.slane %v737, %v1132
      %v1134 = vlaneseq
      %v1135 = vshrl.u32 %v1134, 7
      %v1136 = vsub.s32 2, %v1135
      %v1137 = vrot.slane %v744, %v1136
      %v1138 = vmul.bf16 %v1087, %v1109
      %v1139 = vmul.bf16 %v1088, %v1113
      %v1140 = vmul.bf16 %v1089, %v1117
      %v1141 = vmul.bf16 %v1090, %v1121
      %v1142 = vmul.bf16 %v1091, %v1125
      %v1143 = vmul.bf16 %v1092, %v1129
      %v1144 = vmul.bf16 %v1093, %v1133
      %v1145 = vmul.bf16 %v1104, %v1137
      %v1154 = vunpack.c.l.b16 %v1138
      %v1155 = vunpack.c.l.b16 %v1139
      %v1156 = vunpack.c.l.b16 %v1140
      %v1157 = vunpack.c.l.b16 %v1141
      %v1158 = vunpack.c.l.b16 %v1142
      %v1159 = vunpack.c.l.b16 %v1143
      %v1160 = vunpack.c.l.b16 %v1144
      %v1161 = vunpack.c.l.b16 %v1145
      %v1162 = vpack.c.b16 %v1155, %v1154
      %v1163 = vpack.c.b16 %v1157, %v1156
      %v1164 = vpack.c.b16 %v1159, %v1158
      %v1165 = vpack.c.b16 %v1161, %v1160
      %v1166 = vrot.slane %v1162, 6
      %v1167 = vrot.slane %v1163, 6
      %v1168 = vrot.slane %v1164, 6
      %v1169 = vrot.slane %v1165, 6
      %1174 = vst [vmem:[#allocation2 + $0x40] sm:$0xcc] %v1166
      %1175 = vst [vmem:[#allocation2 + $0x48] sm:$0xcc] %v1167
      %1176 = vst [vmem:[#allocation2 + $0x50] sm:$0xcc] %v1168
      %1177 = vst [vmem:[#allocation2 + $0x58] sm:$0xcc] %v1169
      %1178 = vrot.lane.b32.xlu0 %v473, 113
      %v1179 = vpop.permute.xlu0 %1178
      %1180 = vrot.lane.b32.xlu0 %v474, 113
      %v1181 = vpop.permute.xlu0 %1180
      %1182 = vrot.lane.b32.xlu0 %v486, 113
      %v1183 = vpop.permute.xlu0 %1182
      %1184 = vrot.lane.b32.xlu0 %v494, 113
      %v1185 = vpop.permute.xlu0 %1184
      %1186 = vrot.lane.b32.xlu0 %v493, 113
      %v1187 = vpop.permute.xlu0 %1186
      %1188 = vrot.lane.b32.xlu0 %v495, 113
      %v1189 = vpop.permute.xlu0 %1188
      %1190 = vrot.lane.b32.xlu0 %v502, 113
      %v1191 = vpop.permute.xlu0 %1190
      %1192 = vrot.lane.b32.xlu0 %v503, 113
      %v1193 = vpop.permute.xlu0 %1192
      %vm1194 = vcmask 924672
      %v1195 = vsel %vm1194, %v1179, %v1181
      %v1196 = vsel %vm1194, %v1181, %v1183
      %v1197 = vsel %vm1194, %v1183, %v1185
      %v1198 = vsel %vm1194, %v1185, %v1187
      %v1199 = vsel %vm1194, %v1187, %v1189
      %v1200 = vsel %vm1194, %v1189, %v1191
      %v1201 = vsel %vm1194, %v1191, %v1193
      %vm1209 = vcmask 924672
      %v1212 = vsel %vm1209, %v1193, %v1179
      %v1214 = vlaneseq
      %v1215 = vshrl.u32 %v1214, 7
      %v1216 = vsub.s32 3, %v1215
      %v1217 = vrot.slane %v567, %v1216
      %v1218 = vlaneseq
      %v1219 = vshrl.u32 %v1218, 7
      %v1220 = vsub.s32 3, %v1219
      %v1221 = vrot.slane %v574, %v1220
      %v1222 = vlaneseq
      %v1223 = vshrl.u32 %v1222, 7
      %v1224 = vsub.s32 3, %v1223
      %v1225 = vrot.slane %v581, %v1224
      %v1226 = vlaneseq
      %v1227 = vshrl.u32 %v1226, 7
      %v1228 = vsub.s32 3, %v1227
      %v1229 = vrot.slane %v588, %v1228
      %v1230 = vlaneseq
      %v1231 = vshrl.u32 %v1230, 7
      %v1232 = vsub.s32 3, %v1231
      %v1233 = vrot.slane %v595, %v1232
      %v1234 = vlaneseq
      %v1235 = vshrl.u32 %v1234, 7
      %v1236 = vsub.s32 3, %v1235
      %v1237 = vrot.slane %v602, %v1236
      %v1238 = vlaneseq
      %v1239 = vshrl.u32 %v1238, 7
      %v1240 = vsub.s32 3, %v1239
      %v1241 = vrot.slane %v609, %v1240
      %v1242 = vlaneseq
      %v1243 = vshrl.u32 %v1242, 7
      %v1244 = vsub.s32 3, %v1243
      %v1245 = vrot.slane %v616, %v1244
      %v1246 = vmul.bf16 %v1195, %v1217
      %v1247 = vmul.bf16 %v1196, %v1221
      %v1248 = vmul.bf16 %v1197, %v1225
      %v1249 = vmul.bf16 %v1198, %v1229
      %v1250 = vmul.bf16 %v1199, %v1233
      %v1251 = vmul.bf16 %v1200, %v1237
      %v1252 = vmul.bf16 %v1201, %v1241
      %v1253 = vmul.bf16 %v1212, %v1245
      %v1262 = vunpack.c.l.b16 %v1246
      %v1263 = vunpack.c.l.b16 %v1247
      %v1264 = vunpack.c.l.b16 %v1248
      %v1265 = vunpack.c.l.b16 %v1249
      %v1266 = vunpack.c.l.b16 %v1250
      %v1267 = vunpack.c.l.b16 %v1251
      %v1268 = vunpack.c.l.b16 %v1252
      %v1269 = vunpack.c.l.b16 %v1253
      %v1270 = vpack.c.b16 %v1263, %v1262
      %v1271 = vpack.c.b16 %v1265, %v1264
      %v1272 = vpack.c.b16 %v1267, %v1266
      %v1273 = vpack.c.b16 %v1269, %v1268
      %1278 = vst [vmem:[#allocation2 + $0x60] sm:$0x33] %v1270
      %1279 = vst [vmem:[#allocation2 + $0x68] sm:$0x33] %v1271
      %1280 = vst [vmem:[#allocation2 + $0x70] sm:$0x33] %v1272
      %1281 = vst [vmem:[#allocation2 + $0x78] sm:$0x33] %v1273
      %1282 = vrot.lane.b32.xlu0 %v473, 112
      %v1283 = vpop.permute.xlu0 %1282
      %1284 = vrot.lane.b32.xlu0 %v474, 112
      %v1285 = vpop.permute.xlu0 %1284
      %1286 = vrot.lane.b32.xlu0 %v486, 112
      %v1287 = vpop.permute.xlu0 %1286
      %1288 = vrot.lane.b32.xlu0 %v494, 112
      %v1289 = vpop.permute.xlu0 %1288
      %1290 = vrot.lane.b32.xlu0 %v493, 112
      %v1291 = vpop.permute.xlu0 %1290
      %1292 = vrot.lane.b32.xlu0 %v495, 112
      %v1293 = vpop.permute.xlu0 %1292
      %1294 = vrot.lane.b32.xlu0 %v502, 112
      %v1295 = vpop.permute.xlu0 %1294
      %1296 = vrot.lane.b32.xlu0 %v503, 112
      %v1297 = vpop.permute.xlu0 %1296
      %vm1298 = vcmask 916480
      %v1299 = vsel %vm1298, %v1283, %v1285
      %v1300 = vsel %vm1298, %v1285, %v1287
      %v1301 = vsel %vm1298, %v1287, %v1289
      %v1302 = vsel %vm1298, %v1289, %v1291
      %v1303 = vsel %vm1298, %v1291, %v1293
      %v1304 = vsel %vm1298, %v1293, %v1295
      %v1305 = vsel %vm1298, %v1295, %v1297
      %vm1313 = vcmask 916480
      %v1316 = vsel %vm1313, %v1297, %v1283
      %v1318 = vlaneseq
      %v1319 = vshrl.u32 %v1318, 7
      %v1320 = vsub.s32 3, %v1319
      %v1321 = vrot.slane %v695, %v1320
      %v1322 = vlaneseq
      %v1323 = vshrl.u32 %v1322, 7
      %v1324 = vsub.s32 3, %v1323
      %v1325 = vrot.slane %v702, %v1324
      %v1326 = vlaneseq
      %v1327 = vshrl.u32 %v1326, 7
      %v1328 = vsub.s32 3, %v1327
      %v1329 = vrot.slane %v709, %v1328
      %v1330 = vlaneseq
      %v1331 = vshrl.u32 %v1330, 7
      %v1332 = vsub.s32 3, %v1331
      %v1333 = vrot.slane %v716, %v1332
      %v1334 = vlaneseq
      %v1335 = vshrl.u32 %v1334, 7
      %v1336 = vsub.s32 3, %v1335
      %v1337 = vrot.slane %v723, %v1336
      %v1338 = vlaneseq
      %v1339 = vshrl.u32 %v1338, 7
      %v1340 = vsub.s32 3, %v1339
      %v1341 = vrot.slane %v730, %v1340
      %v1342 = vlaneseq
      %v1343 = vshrl.u32 %v1342, 7
      %v1344 = vsub.s32 3, %v1343
      %v1345 = vrot.slane %v737, %v1344
      %v1346 = vlaneseq
      %v1347 = vshrl.u32 %v1346, 7
      %v1348 = vsub.s32 3, %v1347
      %v1349 = vrot.slane %v744, %v1348
      %v1350 = vmul.bf16 %v1299, %v1321
      %v1351 = vmul.bf16 %v1300, %v1325
      %v1352 = vmul.bf16 %v1301, %v1329
      %v1353 = vmul.bf16 %v1302, %v1333
      %v1354 = vmul.bf16 %v1303, %v1337
      %v1355 = vmul.bf16 %v1304, %v1341
      %v1356 = vmul.bf16 %v1305, %v1345
      %v1357 = vmul.bf16 %v1316, %v1349
      %v1366 = vunpack.c.l.b16 %v1350
      %v1367 = vunpack.c.l.b16 %v1351
      %v1368 = vunpack.c.l.b16 %v1352
      %v1369 = vunpack.c.l.b16 %v1353
      %v1370 = vunpack.c.l.b16 %v1354
      %v1371 = vunpack.c.l.b16 %v1355
      %v1372 = vunpack.c.l.b16 %v1356
      %v1373 = vunpack.c.l.b16 %v1357
      %v1374 = vpack.c.b16 %v1367, %v1366
      %v1375 = vpack.c.b16 %v1369, %v1368
      %v1376 = vpack.c.b16 %v1371, %v1370
      %v1377 = vpack.c.b16 %v1373, %v1372
      %v1378 = vrot.slane %v1374, 6
      %v1379 = vrot.slane %v1375, 6
      %v1380 = vrot.slane %v1376, 6
      %v1381 = vrot.slane %v1377, 6
      %1386 = vst [vmem:[#allocation2 + $0x60] sm:$0xcc] %v1378
      %1387 = vst [vmem:[#allocation2 + $0x68] sm:$0xcc] %v1379
      %1388 = vst [vmem:[#allocation2 + $0x70] sm:$0xcc] %v1380
      %1389 = vst [vmem:[#allocation2 + $0x78] sm:$0xcc] %v1381
      %1390 = vrot.lane.b32.xlu0 %v473, 111
      %v1391 = vpop.permute.xlu0 %1390
      %1392 = vrot.lane.b32.xlu0 %v474, 111
      %v1393 = vpop.permute.xlu0 %1392
      %1394 = vrot.lane.b32.xlu0 %v486, 111
      %v1395 = vpop.permute.xlu0 %1394
      %1396 = vrot.lane.b32.xlu0 %v494, 111
      %v1397 = vpop.permute.xlu0 %1396
      %1398 = vrot.lane.b32.xlu0 %v493, 111
      %v1399 = vpop.permute.xlu0 %1398
      %1400 = vrot.lane.b32.xlu0 %v495, 111
      %v1401 = vpop.permute.xlu0 %1400
      %1402 = vrot.lane.b32.xlu0 %v502, 111
      %v1403 = vpop.permute.xlu0 %1402
      %1404 = vrot.lane.b32.xlu0 %v503, 111
      %v1405 = vpop.permute.xlu0 %1404
      %vm1406 = vcmask 908288
      %v1407 = vsel %vm1406, %v1391, %v1393
      %v1408 = vsel %vm1406, %v1393, %v1395
      %v1409 = vsel %vm1406, %v1395, %v1397
      %v1410 = vsel %vm1406, %v1397, %v1399
      %v1411 = vsel %vm1406, %v1399, %v1401
      %v1412 = vsel %vm1406, %v1401, %v1403
      %v1413 = vsel %vm1406, %v1403, %v1405
      %vm1421 = vcmask 908288
      %v1424 = vsel %vm1421, %v1405, %v1391
      %v1430 = vunpack.c.l.b16 %v462
      %v1431 = vunpack.c.h.b16 %v462
      %v1432 = vunpack.c.l.b16 %v463
      %v1433 = vunpack.c.h.b16 %v463
      %v1434 = vunpack.c.l.b16 %v464
      %v1435 = vunpack.c.h.b16 %v464
      %v1436 = vunpack.c.l.b16 %v465
      %v1437 = vunpack.c.h.b16 %v465
      %v1438 = vpack.c.b16 %v1430, %v1430
      %v1439 = vpack.c.b16 %v1431, %v1431
      %v1440 = vpack.c.b16 %v1432, %v1432
      %v1441 = vpack.c.b16 %v1433, %v1433
      %v1442 = vpack.c.b16 %v1434, %v1434
      %v1443 = vpack.c.b16 %v1435, %v1435
      %v1444 = vpack.c.b16 %v1436, %v1436
      %v1445 = vpack.c.b16 %v1437, %v1437
      %v1447 = vpack.i.b16 %v1438, %v1438
      %v1449 = vlaneseq
      %v1450 = vshrl.u32 %v1449, 7
      %v1451 = vsub.s32 0, %v1450
      %v1452 = vrot.slane %v1447, %v1451
      %v1454 = vpack.i.b16 %v1439, %v1439
      %v1456 = vlaneseq
      %v1457 = vshrl.u32 %v1456, 7
      %v1458 = vsub.s32 0, %v1457
      %v1459 = vrot.slane %v1454, %v1458
      %v1461 = vpack.i.b16 %v1440, %v1440
      %v1463 = vlaneseq
      %v1464 = vshrl.u32 %v1463, 7
      %v1465 = vsub.s32 0, %v1464
      %v1466 = vrot.slane %v1461, %v1465
      %v1468 = vpack.i.b16 %v1441, %v1441
      %v1470 = vlaneseq
      %v1471 = vshrl.u32 %v1470, 7
      %v1472 = vsub.s32 0, %v1471
      %v1473 = vrot.slane %v1468, %v1472
      %v1475 = vpack.i.b16 %v1442, %v1442
      %v1477 = vlaneseq
      %v1478 = vshrl.u32 %v1477, 7
      %v1479 = vsub.s32 0, %v1478
      %v1480 = vrot.slane %v1475, %v1479
      %v1482 = vpack.i.b16 %v1443, %v1443
      %v1484 = vlaneseq
      %v1485 = vshrl.u32 %v1484, 7
      %v1486 = vsub.s32 0, %v1485
      %v1487 = vrot.slane %v1482, %v1486
      %v1489 = vpack.i.b16 %v1444, %v1444
      %v1491 = vlaneseq
      %v1492 = vshrl.u32 %v1491, 7
      %v1493 = vsub.s32 0, %v1492
      %v1494 = vrot.slane %v1489, %v1493
      %v1496 = vpack.i.b16 %v1445, %v1445
      %v1498 = vlaneseq
      %v1499 = vshrl.u32 %v1498, 7
      %v1500 = vsub.s32 0, %v1499
      %v1501 = vrot.slane %v1496, %v1500
      %v1502 = vmul.bf16 %v1407, %v1452
      %v1503 = vmul.bf16 %v1408, %v1459
      %v1504 = vmul.bf16 %v1409, %v1466
      %v1505 = vmul.bf16 %v1410, %v1473
      %v1506 = vmul.bf16 %v1411, %v1480
      %v1507 = vmul.bf16 %v1412, %v1487
      %v1508 = vmul.bf16 %v1413, %v1494
      %v1509 = vmul.bf16 %v1424, %v1501
      %v1518 = vunpack.c.l.b16 %v1502
      %v1519 = vunpack.c.l.b16 %v1503
      %v1520 = vunpack.c.l.b16 %v1504
      %v1521 = vunpack.c.l.b16 %v1505
      %v1522 = vunpack.c.l.b16 %v1506
      %v1523 = vunpack.c.l.b16 %v1507
      %v1524 = vunpack.c.l.b16 %v1508
      %v1525 = vunpack.c.l.b16 %v1509
      %v1526 = vpack.c.b16 %v1519, %v1518
      %v1527 = vpack.c.b16 %v1521, %v1520
      %v1528 = vpack.c.b16 %v1523, %v1522
      %v1529 = vpack.c.b16 %v1525, %v1524
      %1534 = vst [vmem:[#allocation2 + $0x80] sm:$0x33] %v1526
      %1535 = vst [vmem:[#allocation2 + $0x88] sm:$0x33] %v1527
      %1536 = vst [vmem:[#allocation2 + $0x90] sm:$0x33] %v1528
      %1537 = vst [vmem:[#allocation2 + $0x98] sm:$0x33] %v1529
      %v1538 = vld [vmem:[%s3] sm:$0xf]
      %v1539 = vld [vmem:[#allocation2] sm:$0xff]
      %v1540 = vld [vmem:[#allocation2 + $0x8] sm:$0xff]
      %v1541 = vld [vmem:[#allocation2 + $0x10] sm:$0xff]
      %v1542 = vld [vmem:[#allocation2 + $0x18] sm:$0xff]
      %v1543 = vld [vmem:[#allocation2 + $0x20] sm:$0xff]
      %v1544 = vld [vmem:[#allocation2 + $0x28] sm:$0xff]
      %v1545 = vld [vmem:[#allocation2 + $0x30] sm:$0xff]
      %v1546 = vld [vmem:[#allocation2 + $0x38] sm:$0xff]
      %v1547 = vld [vmem:[#allocation2 + $0x40] sm:$0xff]
      %v1548 = vld [vmem:[#allocation2 + $0x48] sm:$0xff]
      %v1549 = vld [vmem:[#allocation2 + $0x50] sm:$0xff]
      %v1550 = vld [vmem:[#allocation2 + $0x58] sm:$0xff]
      %v1551 = vld [vmem:[#allocation2 + $0x60] sm:$0xff]
      %v1552 = vld [vmem:[#allocation2 + $0x68] sm:$0xff]
      %v1553 = vld [vmem:[#allocation2 + $0x70] sm:$0xff]
      %v1554 = vld [vmem:[#allocation2 + $0x78] sm:$0xff]
      %v1555 = vld [vmem:[#allocation2 + $0x80] sm:$0x33]
      %v1556 = vld [vmem:[#allocation2 + $0x88] sm:$0x33]
      %v1557 = vld [vmem:[#allocation2 + $0x90] sm:$0x33]
      %v1558 = vld [vmem:[#allocation2 + $0x98] sm:$0x33]
      %v1559 = vcombine.high %v421, %v421
      %v1561 = vunpack.c.l.s4 1983009808
      %v1562 = vunpack.c.0.s8 %v1561
      %v1563 = vlaneseq
      %v1564 = vshrl.u32 %v1563, 7
      %v1565 = vsub.s32 %v1562, %v1564
      %v1566 = vrot.slane %v1559, %v1565
      %v1567 = vcombine.high %v1566, %v1566
      %1568 = vrot.lane.b32.xlu0 %v1567, 17
      %v1569 = vpop.permute.xlu0 %1568
      %1570 = vrot.lane.b32.xlu0 %v1566, 17
      %v1571 = vpop.permute.xlu0 %1570
      %v1572 = vsel %vm526, %v511, %v1571
      %v1573 = vsel %vm526, %v1571, %v1569
      %v1578 = vsel %vm541, %v1569, %v517
      %v1580 = vmul.bf16 %v1578, %v572
      %v1581 = vmul.bf16 %v529, %v579
      %v1582 = vmul.bf16 %v530, %v586
      %v1583 = vmul.bf16 %v531, %v593
      %v1584 = vmul.bf16 %v532, %v600
      %v1585 = vmul.bf16 %v533, %v607
      %v1586 = vmul.bf16 %v1572, %v614
      %v1587 = vmul.bf16 %v1573, %v621
      %v1596 = vunpack.c.l.b16 %v1580
      %v1597 = vunpack.c.l.b16 %v1581
      %v1598 = vunpack.c.l.b16 %v1582
      %v1599 = vunpack.c.l.b16 %v1583
      %v1600 = vunpack.c.l.b16 %v1584
      %v1601 = vunpack.c.l.b16 %v1585
      %v1602 = vunpack.c.l.b16 %v1586
      %v1603 = vunpack.c.l.b16 %v1587
      %v1604 = vpack.c.b16 %v1597, %v1596
      %v1605 = vpack.c.b16 %v1599, %v1598
      %v1606 = vpack.c.b16 %v1601, %v1600
      %v1607 = vpack.c.b16 %v1603, %v1602
      %1612 = vst [vmem:[#allocation2] sm:$0x33] %v1604
      %1613 = vst [vmem:[#allocation2 + $0x8] sm:$0x33] %v1605
      %1614 = vst [vmem:[#allocation2 + $0x10] sm:$0x33] %v1606
      %1615 = vst [vmem:[#allocation2 + $0x18] sm:$0x33] %v1607
      %1616 = vrot.lane.b32.xlu0 %v1567, 16
      %v1617 = vpop.permute.xlu0 %1616
      %1618 = vrot.lane.b32.xlu0 %v1566, 16
      %v1619 = vpop.permute.xlu0 %1618
      %v1620 = vsel %vm674, %v659, %v1619
      %v1621 = vsel %vm674, %v1619, %v1617
      %v1626 = vsel %vm689, %v1617, %v665
      %v1628 = vmul.bf16 %v1626, %v700
      %v1629 = vmul.bf16 %v677, %v707
      %v1630 = vmul.bf16 %v678, %v714
      %v1631 = vmul.bf16 %v679, %v721
      %v1632 = vmul.bf16 %v680, %v728
      %v1633 = vmul.bf16 %v681, %v735
      %v1634 = vmul.bf16 %v1620, %v742
      %v1635 = vmul.bf16 %v1621, %v749
      %v1644 = vunpack.c.l.b16 %v1628
      %v1645 = vunpack.c.l.b16 %v1629
      %v1646 = vunpack.c.l.b16 %v1630
      %v1647 = vunpack.c.l.b16 %v1631
      %v1648 = vunpack.c.l.b16 %v1632
      %v1649 = vunpack.c.l.b16 %v1633
      %v1650 = vunpack.c.l.b16 %v1634
      %v1651 = vunpack.c.l.b16 %v1635
      %v1652 = vpack.c.b16 %v1645, %v1644
      %v1653 = vpack.c.b16 %v1647, %v1646
      %v1654 = vpack.c.b16 %v1649, %v1648
      %v1655 = vpack.c.b16 %v1651, %v1650
      %v1656 = vrot.slane %v1652, 6
      %v1657 = vrot.slane %v1653, 6
      %v1658 = vrot.slane %v1654, 6
      %v1659 = vrot.slane %v1655, 6
      %1664 = vst [vmem:[#allocation2] sm:$0xcc] %v1656
      %1665 = vst [vmem:[#allocation2 + $0x8] sm:$0xcc] %v1657
      %1666 = vst [vmem:[#allocation2 + $0x10] sm:$0xcc] %v1658
      %1667 = vst [vmem:[#allocation2 + $0x18] sm:$0xcc] %v1659
      %1668 = vrot.lane.b32.xlu0 %v1567, 15
      %v1669 = vpop.permute.xlu0 %1668
      %1670 = vrot.lane.b32.xlu0 %v1566, 15
      %v1671 = vpop.permute.xlu0 %1670
      %v1672 = vsel %vm806, %v791, %v1671
      %v1673 = vsel %vm806, %v1671, %v1669
      %v1678 = vsel %vm821, %v1669, %v797
      %v1680 = vmul.bf16 %v1678, %v829
      %v1681 = vmul.bf16 %v809, %v833
      %v1682 = vmul.bf16 %v810, %v837
      %v1683 = vmul.bf16 %v811, %v841
      %v1684 = vmul.bf16 %v812, %v845
      %v1685 = vmul.bf16 %v813, %v849
      %v1686 = vmul.bf16 %v1672, %v853
      %v1687 = vmul.bf16 %v1673, %v857
      %v1696 = vunpack.c.l.b16 %v1680
      %v1697 = vunpack.c.l.b16 %v1681
      %v1698 = vunpack.c.l.b16 %v1682
      %v1699 = vunpack.c.l.b16 %v1683
      %v1700 = vunpack.c.l.b16 %v1684
      %v1701 = vunpack.c.l.b16 %v1685
      %v1702 = vunpack.c.l.b16 %v1686
      %v1703 = vunpack.c.l.b16 %v1687
      %v1704 = vpack.c.b16 %v1697, %v1696
      %v1705 = vpack.c.b16 %v1699, %v1698
      %v1706 = vpack.c.b16 %v1701, %v1700
      %v1707 = vpack.c.b16 %v1703, %v1702
      %1712 = vst [vmem:[#allocation2 + $0x20] sm:$0x33] %v1704
      %1713 = vst [vmem:[#allocation2 + $0x28] sm:$0x33] %v1705
      %1714 = vst [vmem:[#allocation2 + $0x30] sm:$0x33] %v1706
      %1715 = vst [vmem:[#allocation2 + $0x38] sm:$0x33] %v1707
      %1716 = vrot.lane.b32.xlu0 %v1567, 1
      %v1717 = vpop.permute.xlu0 %1716
      %1718 = vrot.lane.b32.xlu0 %v1566, 1
      %v1719 = vpop.permute.xlu0 %1718
      %v1720 = vsel %vm910, %v895, %v1719
      %v1721 = vsel %vm910, %v1719, %v1717
      %v1726 = vsel %vm925, %v1717, %v901
      %v1728 = vmul.bf16 %v1726, %v933
      %v1729 = vmul.bf16 %v913, %v937
      %v1730 = vmul.bf16 %v914, %v941
      %v1731 = vmul.bf16 %v915, %v945
      %v1732 = vmul.bf16 %v916, %v949
      %v1733 = vmul.bf16 %v917, %v953
      %v1734 = vmul.bf16 %v1720, %v957
      %v1735 = vmul.bf16 %v1721, %v961
      %v1744 = vunpack.c.l.b16 %v1728
      %v1745 = vunpack.c.l.b16 %v1729
      %v1746 = vunpack.c.l.b16 %v1730
      %v1747 = vunpack.c.l.b16 %v1731
      %v1748 = vunpack.c.l.b16 %v1732
      %v1749 = vunpack.c.l.b16 %v1733
      %v1750 = vunpack.c.l.b16 %v1734
      %v1751 = vunpack.c.l.b16 %v1735
      %v1752 = vpack.c.b16 %v1745, %v1744
      %v1753 = vpack.c.b16 %v1747, %v1746
      %v1754 = vpack.c.b16 %v1749, %v1748
      %v1755 = vpack.c.b16 %v1751, %v1750
      %v1756 = vrot.slane %v1752, 6
      %v1757 = vrot.slane %v1753, 6
      %v1758 = vrot.slane %v1754, 6
      %v1759 = vrot.slane %v1755, 6
      %1764 = vst [vmem:[#allocation2 + $0x20] sm:$0xcc] %v1756
      %1765 = vst [vmem:[#allocation2 + $0x28] sm:$0xcc] %v1757
      %1766 = vst [vmem:[#allocation2 + $0x30] sm:$0xcc] %v1758
      %1767 = vst [vmem:[#allocation2 + $0x38] sm:$0xcc] %v1759
      %v1776 = vcombine.low %v1005, %v1009
      %v1777 = vcombine.low %v1013, %v1017
      %v1779 = vunpack.c.l.s4 1983009808
      %v1780 = vunpack.c.0.s8 %v1779
      %v1781 = vlaneseq
      %v1782 = vshrl.u32 %v1781, 7
      %v1783 = vsub.s32 %v1780, %v1782
      %v1784 = vrot.slane %v1776, %v1783
      %v1786 = vunpack.c.l.s4 1983009808
      %v1787 = vunpack.c.0.s8 %v1786
      %v1788 = vlaneseq
      %v1789 = vshrl.u32 %v1788, 7
      %v1790 = vsub.s32 %v1787, %v1789
      %v1791 = vrot.slane %v1777, %v1790
      %v1792 = vcombine.low %v1784, %v1791
      %v1793 = vcombine.low %v1021, %v1025
      %v1794 = vcombine.low %v1029, %v1033
      %v1796 = vunpack.c.l.s4 1983009808
      %v1797 = vunpack.c.0.s8 %v1796
      %v1798 = vlaneseq
      %v1799 = vshrl.u32 %v1798, 7
      %v1800 = vsub.s32 %v1797, %v1799
      %v1801 = vrot.slane %v1793, %v1800
      %v1803 = vunpack.c.l.s4 1983009808
      %v1804 = vunpack.c.0.s8 %v1803
      %v1805 = vlaneseq
      %v1806 = vshrl.u32 %v1805, 7
      %v1807 = vsub.s32 %v1804, %v1806
      %v1808 = vrot.slane %v1794, %v1807
      %v1809 = vcombine.low %v1801, %v1808
      %v1812 = vmul.bf16 %v420, %v1792
      %v1813 = vmul.bf16 %v421, %v1809
      %v1816 = vcombine.high %v1812, %v1812
      %v1818 = vunpack.c.l.s4 1983009808
      %v1819 = vunpack.c.0.s8 %v1818
      %v1820 = vlaneseq
      %v1821 = vshrl.u32 %v1820, 7
      %v1822 = vsub.s32 %v1819, %v1821
      %v1823 = vrot.slane %v1812, %v1822
      %v1825 = vunpack.c.l.s4 1983009808
      %v1826 = vunpack.c.0.s8 %v1825
      %v1827 = vlaneseq
      %v1828 = vshrl.u32 %v1827, 7
      %v1829 = vsub.s32 %v1826, %v1828
      %v1830 = vrot.slane %v1816, %v1829
      %v1831 = vcombine.high %v1813, %v1813
      %v1833 = vunpack.c.l.s4 1983009808
      %v1834 = vunpack.c.0.s8 %v1833
      %v1835 = vlaneseq
      %v1836 = vshrl.u32 %v1835, 7
      %v1837 = vsub.s32 %v1834, %v1836
      %v1838 = vrot.slane %v1813, %v1837
      %v1840 = vunpack.c.l.s4 1983009808
      %v1841 = vunpack.c.0.s8 %v1840
      %v1842 = vlaneseq
      %v1843 = vshrl.u32 %v1842, 7
      %v1844 = vsub.s32 %v1841, %v1843
      %v1845 = vrot.slane %v1831, %v1844
      %1850 = vst [vmem:[#allocation2 + $0x40] sm:$0x33] %v1823
      %1851 = vst [vmem:[#allocation2 + $0x48] sm:$0x33] %v1830
      %1852 = vst [vmem:[#allocation2 + $0x50] sm:$0x33] %v1838
      %1853 = vst [vmem:[#allocation2 + $0x58] sm:$0x33] %v1845
      %1854 = vrot.lane.b32.xlu0 %v1566, 127
      %v1855 = vpop.permute.xlu0 %1854
      %1856 = vrot.lane.b32.xlu0 %v1567, 127
      %v1857 = vpop.permute.xlu0 %1856
      %v1858 = vsel %vm1086, %v1085, %v1855
      %v1859 = vsel %vm1086, %v1855, %v1857
      %v1864 = vsel %vm1101, %v1857, %v1075
      %v1866 = vmul.bf16 %v1089, %v1109
      %v1867 = vmul.bf16 %v1090, %v1113
      %v1868 = vmul.bf16 %v1091, %v1117
      %v1869 = vmul.bf16 %v1092, %v1121
      %v1870 = vmul.bf16 %v1093, %v1125
      %v1871 = vmul.bf16 %v1858, %v1129
      %v1872 = vmul.bf16 %v1859, %v1133
      %v1873 = vmul.bf16 %v1864, %v1137
      %v1882 = vunpack.c.l.b16 %v1866
      %v1883 = vunpack.c.l.b16 %v1867
      %v1884 = vunpack.c.l.b16 %v1868
      %v1885 = vunpack.c.l.b16 %v1869
      %v1886 = vunpack.c.l.b16 %v1870
      %v1887 = vunpack.c.l.b16 %v1871
      %v1888 = vunpack.c.l.b16 %v1872
      %v1889 = vunpack.c.l.b16 %v1873
      %v1890 = vpack.c.b16 %v1883, %v1882
      %v1891 = vpack.c.b16 %v1885, %v1884
      %v1892 = vpack.c.b16 %v1887, %v1886
      %v1893 = vpack.c.b16 %v1889, %v1888
      %v1894 = vrot.slane %v1890, 6
      %v1895 = vrot.slane %v1891, 6
      %v1896 = vrot.slane %v1892, 6
      %v1897 = vrot.slane %v1893, 6
      %1902 = vst [vmem:[#allocation2 + $0x40] sm:$0xcc] %v1894
      %1903 = vst [vmem:[#allocation2 + $0x48] sm:$0xcc] %v1895
      %1904 = vst [vmem:[#allocation2 + $0x50] sm:$0xcc] %v1896
      %1905 = vst [vmem:[#allocation2 + $0x58] sm:$0xcc] %v1897
      %1906 = vrot.lane.b32.xlu0 %v1566, 113
      %v1907 = vpop.permute.xlu0 %1906
      %1908 = vrot.lane.b32.xlu0 %v1567, 113
      %v1909 = vpop.permute.xlu0 %1908
      %v1910 = vsel %vm1194, %v1193, %v1907
      %v1911 = vsel %vm1194, %v1907, %v1909
      %v1916 = vsel %vm1209, %v1909, %v1183
      %v1918 = vmul.bf16 %v1197, %v1217
      %v1919 = vmul.bf16 %v1198, %v1221
      %v1920 = vmul.bf16 %v1199, %v1225
      %v1921 = vmul.bf16 %v1200, %v1229
      %v1922 = vmul.bf16 %v1201, %v1233
      %v1923 = vmul.bf16 %v1910, %v1237
      %v1924 = vmul.bf16 %v1911, %v1241
      %v1925 = vmul.bf16 %v1916, %v1245
      %v1934 = vunpack.c.l.b16 %v1918
      %v1935 = vunpack.c.l.b16 %v1919
      %v1936 = vunpack.c.l.b16 %v1920
      %v1937 = vunpack.c.l.b16 %v1921
      %v1938 = vunpack.c.l.b16 %v1922
      %v1939 = vunpack.c.l.b16 %v1923
      %v1940 = vunpack.c.l.b16 %v1924
      %v1941 = vunpack.c.l.b16 %v1925
      %v1942 = vpack.c.b16 %v1935, %v1934
      %v1943 = vpack.c.b16 %v1937, %v1936
      %v1944 = vpack.c.b16 %v1939, %v1938
      %v1945 = vpack.c.b16 %v1941, %v1940
      %1950 = vst [vmem:[#allocation2 + $0x60] sm:$0x33] %v1942
      %1951 = vst [vmem:[#allocation2 + $0x68] sm:$0x33] %v1943
      %1952 = vst [vmem:[#allocation2 + $0x70] sm:$0x33] %v1944
      %1953 = vst [vmem:[#allocation2 + $0x78] sm:$0x33] %v1945
      %1954 = vrot.lane.b32.xlu0 %v1566, 112
      %v1955 = vpop.permute.xlu0 %1954
      %1956 = vrot.lane.b32.xlu0 %v1567, 112
      %v1957 = vpop.permute.xlu0 %1956
      %v1958 = vsel %vm1298, %v1297, %v1955
      %v1959 = vsel %vm1298, %v1955, %v1957
      %v1964 = vsel %vm1313, %v1957, %v1287
      %v1966 = vmul.bf16 %v1301, %v1321
      %v1967 = vmul.bf16 %v1302, %v1325
      %v1968 = vmul.bf16 %v1303, %v1329
      %v1969 = vmul.bf16 %v1304, %v1333
      %v1970 = vmul.bf16 %v1305, %v1337
      %v1971 = vmul.bf16 %v1958, %v1341
      %v1972 = vmul.bf16 %v1959, %v1345
      %v1973 = vmul.bf16 %v1964, %v1349
      %v1982 = vunpack.c.l.b16 %v1966
      %v1983 = vunpack.c.l.b16 %v1967
      %v1984 = vunpack.c.l.b16 %v1968
      %v1985 = vunpack.c.l.b16 %v1969
      %v1986 = vunpack.c.l.b16 %v1970
      %v1987 = vunpack.c.l.b16 %v1971
      %v1988 = vunpack.c.l.b16 %v1972
      %v1989 = vunpack.c.l.b16 %v1973
      %v1990 = vpack.c.b16 %v1983, %v1982
      %v1991 = vpack.c.b16 %v1985, %v1984
      %v1992 = vpack.c.b16 %v1987, %v1986
      %v1993 = vpack.c.b16 %v1989, %v1988
      %v1994 = vrot.slane %v1990, 6
      %v1995 = vrot.slane %v1991, 6
      %v1996 = vrot.slane %v1992, 6
      %v1997 = vrot.slane %v1993, 6
      %2002 = vst [vmem:[#allocation2 + $0x60] sm:$0xcc] %v1994
      %2003 = vst [vmem:[#allocation2 + $0x68] sm:$0xcc] %v1995
      %2004 = vst [vmem:[#allocation2 + $0x70] sm:$0xcc] %v1996
      %2005 = vst [vmem:[#allocation2 + $0x78] sm:$0xcc] %v1997
      %2006 = vrot.lane.b32.xlu0 %v1566, 111
      %v2007 = vpop.permute.xlu0 %2006
      %2008 = vrot.lane.b32.xlu0 %v1567, 111
      %v2009 = vpop.permute.xlu0 %2008
      %v2010 = vsel %vm1406, %v1405, %v2007
      %v2011 = vsel %vm1406, %v2007, %v2009
      %v2016 = vsel %vm1421, %v2009, %v1395
      %v2018 = vmul.bf16 %v1409, %v1452
      %v2019 = vmul.bf16 %v1410, %v1459
      %v2020 = vmul.bf16 %v1411, %v1466
      %v2021 = vmul.bf16 %v1412, %v1473
      %v2022 = vmul.bf16 %v1413, %v1480
      %v2023 = vmul.bf16 %v2010, %v1487
      %v2024 = vmul.bf16 %v2011, %v1494
      %v2025 = vmul.bf16 %v2016, %v1501
      %v2034 = vunpack.c.l.b16 %v2018
      %v2035 = vunpack.c.l.b16 %v2019
      %v2036 = vunpack.c.l.b16 %v2020
      %v2037 = vunpack.c.l.b16 %v2021
      %v2038 = vunpack.c.l.b16 %v2022
      %v2039 = vunpack.c.l.b16 %v2023
      %v2040 = vunpack.c.l.b16 %v2024
      %v2041 = vunpack.c.l.b16 %v2025
      %v2042 = vpack.c.b16 %v2035, %v2034
      %v2043 = vpack.c.b16 %v2037, %v2036
      %v2044 = vpack.c.b16 %v2039, %v2038
      %v2045 = vpack.c.b16 %v2041, %v2040
      %2050 = vst [vmem:[#allocation2 + $0x80] sm:$0x33] %v2042
      %2051 = vst [vmem:[#allocation2 + $0x88] sm:$0x33] %v2043
      %2052 = vst [vmem:[#allocation2 + $0x90] sm:$0x33] %v2044
      %2053 = vst [vmem:[#allocation2 + $0x98] sm:$0x33] %v2045
      %v2054 = vld [vmem:[%s3] sm:$0xf]
      %v2055 = vld [vmem:[#allocation2] sm:$0xff]
      %v2056 = vld [vmem:[#allocation2 + $0x8] sm:$0xff]
      %v2057 = vld [vmem:[#allocation2 + $0x10] sm:$0xff]
      %v2058 = vld [vmem:[#allocation2 + $0x18] sm:$0xff]
      %v2059 = vld [vmem:[#allocation2 + $0x20] sm:$0xff]
      %v2060 = vld [vmem:[#allocation2 + $0x28] sm:$0xff]
      %v2061 = vld [vmem:[#allocation2 + $0x30] sm:$0xff]
      %v2062 = vld [vmem:[#allocation2 + $0x38] sm:$0xff]
      %v2063 = vld [vmem:[#allocation2 + $0x40] sm:$0xff]
      %v2064 = vld [vmem:[#allocation2 + $0x48] sm:$0xff]
      %v2065 = vld [vmem:[#allocation2 + $0x50] sm:$0xff]
      %v2066 = vld [vmem:[#allocation2 + $0x58] sm:$0xff]
      %v2067 = vld [vmem:[#allocation2 + $0x60] sm:$0xff]
      %v2068 = vld [vmem:[#allocation2 + $0x68] sm:$0xff]
      %v2069 = vld [vmem:[#allocation2 + $0x70] sm:$0xff]
      %v2070 = vld [vmem:[#allocation2 + $0x78] sm:$0xff]
      %v2071 = vld [vmem:[#allocation2 + $0x80] sm:$0x33]
      %v2072 = vld [vmem:[#allocation2 + $0x88] sm:$0x33]
      %v2073 = vld [vmem:[#allocation2 + $0x90] sm:$0x33]
      %v2074 = vld [vmem:[#allocation2 + $0x98] sm:$0x33]
      %v2076 = vunpack.c.l.b16 %v2054
      %v2077 = vpack.c.b16 %v2076, %v2076
      %2078 = vrot.lane.b32.xlu0 %v2077, 92
      %v2079 = vpop.permute.xlu0 %2078
      %v2100 = vunpack.c.l.b16 %v2055
      %v2101 = vunpack.c.h.b16 %v2055
      %v2102 = vunpack.c.l.b16 %v2056
      %v2103 = vunpack.c.h.b16 %v2056
      %v2104 = vunpack.c.l.b16 %v2057
      %v2105 = vunpack.c.h.b16 %v2057
      %v2106 = vunpack.c.l.b16 %v2058
      %v2107 = vunpack.c.h.b16 %v2058
      %v2108 = vunpack.c.l.b16 %v2059
      %v2109 = vunpack.c.h.b16 %v2059
      %v2110 = vunpack.c.l.b16 %v2060
      %v2111 = vunpack.c.h.b16 %v2060
      %v2112 = vunpack.c.l.b16 %v2061
      %v2113 = vunpack.c.h.b16 %v2061
      %v2114 = vunpack.c.l.b16 %v2062
      %v2115 = vunpack.c.h.b16 %v2062
      %v2116 = vunpack.c.l.b16 %v2063
      %v2117 = vunpack.c.h.b16 %v2063
      %v2118 = vunpack.c.l.b16 %v2064
      %v2119 = vunpack.c.h.b16 %v2064
      %v2120 = vunpack.c.l.b16 %v2065
      %v2121 = vunpack.c.h.b16 %v2065
      %v2122 = vunpack.c.l.b16 %v2066
      %v2123 = vunpack.c.h.b16 %v2066
      %v2124 = vunpack.c.l.b16 %v2067
      %v2125 = vunpack.c.h.b16 %v2067
      %v2126 = vunpack.c.l.b16 %v2068
      %v2127 = vunpack.c.h.b16 %v2068
      %v2128 = vunpack.c.l.b16 %v2069
      %v2129 = vunpack.c.h.b16 %v2069
      %v2130 = vunpack.c.l.b16 %v2070
      %v2131 = vunpack.c.h.b16 %v2070
      %v2132 = vunpack.c.l.b16 %v2071
      %v2133 = vunpack.c.h.b16 %v2071
      %v2134 = vunpack.c.l.b16 %v2072
      %v2135 = vunpack.c.h.b16 %v2072
      %v2136 = vunpack.c.l.b16 %v2073
      %v2137 = vunpack.c.h.b16 %v2073
      %v2138 = vunpack.c.l.b16 %v2074
      %v2139 = vunpack.c.h.b16 %v2074
      %v2140 = vpack.c.b16 %v2108, %v2100
      %v2141 = vpack.c.b16 %v2109, %v2101
      %v2142 = vpack.c.b16 %v2110, %v2102
      %v2143 = vpack.c.b16 %v2111, %v2103
      %v2144 = vpack.c.b16 %v2112, %v2104
      %v2145 = vpack.c.b16 %v2113, %v2105
      %v2146 = vpack.c.b16 %v2114, %v2106
      %v2147 = vpack.c.b16 %v2115, %v2107
      %v2148 = vpack.c.b16 %v2124, %v2116
      %v2149 = vpack.c.b16 %v2125, %v2117
      %v2150 = vpack.c.b16 %v2126, %v2118
      %v2151 = vpack.c.b16 %v2127, %v2119
      %v2152 = vpack.c.b16 %v2128, %v2120
      %v2153 = vpack.c.b16 %v2129, %v2121
      %v2154 = vpack.c.b16 %v2130, %v2122
      %v2155 = vpack.c.b16 %v2131, %v2123
      %v2156 = vpack.c.b16 %v2132, %v2132
      %v2157 = vpack.c.b16 %v2133, %v2133
      %v2158 = vpack.c.b16 %v2134, %v2134
      %v2159 = vpack.c.b16 %v2135, %v2135
      %v2160 = vpack.c.b16 %v2136, %v2136
      %v2161 = vpack.c.b16 %v2137, %v2137
      %v2162 = vpack.c.b16 %v2138, %v2138
      %v2163 = vpack.c.b16 %v2139, %v2139
      %vm2180 = vcmask 293888
      %v2182 = vsel %vm2180, %v2079, 0
      %vm2184 = vcmask 1041408
      %v2186 = vsel %vm2184, %v2156, 0
      %v2189 = vsel %vm2184, %v2157, 0
      %v2192 = vsel %vm2184, %v2158, 0
      %v2195 = vsel %vm2184, %v2159, 0
      %v2198 = vsel %vm2184, %v2160, 0
      %v2201 = vsel %vm2184, %v2161, 0
      %v2204 = vsel %vm2184, %v2162, 0
      %v2207 = vsel %vm2184, %v2163, 0
      %2209 = vmatprep.subr.bf16.mxu0 %v2141
      %2210 = vmatpush1.bf16.msra.mxu0 %v2140
      %2211 = vmatprep.subr.bf16.mxu0 %v2149
      %2212 = vmatpush1.bf16.msra.mxu0 %v2148
      %2213 = vmatprep.subr.bf16.mxu0 %v2189
      %2214 = vmatpush1.bf16.msra.mxu0 %v2186
      %2215 = vmatprep.subr.bf16.mxu0 0
      %2216 = vmatpush1.bf16.msra.mxu0 0
      %2217 = vmatprep.subr.bf16.mxu0 0
      %2218 = vmatpush1.bf16.msra.mxu0 0
      %2219 = vmatprep.subr.bf16.mxu0 0
      %2220 = vmatpush1.bf16.msra.mxu0 0
      %2221 = vmatprep.subr.bf16.mxu0 0
      %2222 = vmatpush1.bf16.msra.mxu0 0
      %2223 = vmatprep.subr.bf16.mxu0 0
      %2224 = vmatpush1.bf16.msra.mxu0 0
      %2225 = vmatprep.subr.bf16.mxu0 0
      %2226 = vmatpush1.bf16.msra.mxu0 0
      %2227 = vmatprep.subr.bf16.mxu0 0
      %2228 = vmatpush1.bf16.msra.mxu0 0
      %2229 = vmatprep.subr.bf16.mxu0 0
      %2230 = vmatpush1.bf16.msra.mxu0 0
      %2231 = vmatprep.subr.bf16.mxu0 0
      %2232 = vmatpush1.bf16.msra.mxu0 0
      %2233 = vmatprep.subr.bf16.mxu0 0
      %2234 = vmatpush1.bf16.msra.mxu0 0
      %2235 = vmatprep.subr.bf16.mxu0 0
      %2236 = vmatpush1.bf16.msra.mxu0 0
      %2237 = vmatprep.subr.bf16.mxu0 0
      %2238 = vmatpush1.bf16.msra.mxu0 0
      %2239 = vmatprep.subr.bf16.mxu0 0
      %2240 = vmatpush1.bf16.msra.mxu0 0
      %2241 = vmatprep.mubr.bf16.mxu0 0
      %2242 = vmatmul.mubr.bf16.gmra.mrb[0].mxu0 %v2182
      %v2243 = vpop.f32.mrb[0].mxu0
      %v2244 = vadd.f32 0.0, %v2243
      %v2245 = vpop.f32.mrb[0].mxu0
      %v2246 = vadd.f32 0.0, %v2245
      %v2247 = vpop.f32.mrb[0].mxu0
      %v2248 = vpop.f32.mrb[0].mxu0
      %2249 = vdwg.mxu0
      %2250 = vmatprep.subr.bf16.mxu0 %v2143
      %2251 = vmatpush1.bf16.msra.mxu0 %v2142
      %2252 = vmatprep.subr.bf16.mxu0 %v2151
      %2253 = vmatpush1.bf16.msra.mxu0 %v2150
      %2254 = vmatprep.subr.bf16.mxu0 %v2195
      %2255 = vmatpush1.bf16.msra.mxu0 %v2192
      %2256 = vmatprep.subr.bf16.mxu0 0
      %2257 = vmatpush1.bf16.msra.mxu0 0
      %2258 = vmatprep.subr.bf16.mxu0 0
      %2259 = vmatpush1.bf16.msra.mxu0 0
      %2260 = vmatprep.subr.bf16.mxu0 0
      %2261 = vmatpush1.bf16.msra.mxu0 0
      %2262 = vmatprep.subr.bf16.mxu0 0
      %2263 = vmatpush1.bf16.msra.mxu0 0
      %2264 = vmatprep.subr.bf16.mxu0 0
      %2265 = vmatpush1.bf16.msra.mxu0 0
      %2266 = vmatprep.subr.bf16.mxu0 0
      %2267 = vmatpush1.bf16.msra.mxu0 0
      %2268 = vmatprep.subr.bf16.mxu0 0
      %2269 = vmatpush1.bf16.msra.mxu0 0
      %2270 = vmatprep.subr.bf16.mxu0 0
      %2271 = vmatpush1.bf16.msra.mxu0 0
      %2272 = vmatprep.subr.bf16.mxu0 0
      %2273 = vmatpush1.bf16.msra.mxu0 0
      %2274 = vmatprep.subr.bf16.mxu0 0
      %2275 = vmatpush1.bf16.msra.mxu0 0
      %2276 = vmatprep.subr.bf16.mxu0 0
      %2277 = vmatpush1.bf16.msra.mxu0 0
      %2278 = vmatprep.subr.bf16.mxu0 0
      %2279 = vmatpush1.bf16.msra.mxu0 0
      %2280 = vmatprep.subr.bf16.mxu0 0
      %2281 = vmatpush1.bf16.msra.mxu0 0
      %2282 = vmatprep.mubr.bf16.mxu0 0
      %2283 = vmatmul.mubr.bf16.gmra.mrb[0].mxu0 %v2182
      %v2284 = vpop.f32.mrb[0].mxu0
      %v2285 = vadd.f32 0.0, %v2284
      %v2286 = vpop.f32.mrb[0].mxu0
      %v2287 = vadd.f32 0.0, %v2286
      %v2288 = vpop.f32.mrb[0].mxu0
      %v2289 = vpop.f32.mrb[0].mxu0
      %2290 = vdwg.mxu0
      %2291 = vmatprep.subr.bf16.mxu0 %v2145
      %2292 = vmatpush1.bf16.msra.mxu0 %v2144
      %2293 = vmatprep.subr.bf16.mxu0 %v2153
      %2294 = vmatpush1.bf16.msra.mxu0 %v2152
      %2295 = vmatprep.subr.bf16.mxu0 %v2201
      %2296 = vmatpush1.bf16.msra.mxu0 %v2198
      %2297 = vmatprep.subr.bf16.mxu0 0
      %2298 = vmatpush1.bf16.msra.mxu0 0
      %2299 = vmatprep.subr.bf16.mxu0 0
      %2300 = vmatpush1.bf16.msra.mxu0 0
      %2301 = vmatprep.subr.bf16.mxu0 0
      %2302 = vmatpush1.bf16.msra.mxu0 0
      %2303 = vmatprep.subr.bf16.mxu0 0
      %2304 = vmatpush1.bf16.msra.mxu0 0
      %2305 = vmatprep.subr.bf16.mxu0 0
      %2306 = vmatpush1.bf16.msra.mxu0 0
      %2307 = vmatprep.subr.bf16.mxu0 0
      %2308 = vmatpush1.bf16.msra.mxu0 0
      %2309 = vmatprep.subr.bf16.mxu0 0
      %2310 = vmatpush1.bf16.msra.mxu0 0
      %2311 = vmatprep.subr.bf16.mxu0 0
      %2312 = vmatpush1.bf16.msra.mxu0 0
      %2313 = vmatprep.subr.bf16.mxu0 0
      %2314 = vmatpush1.bf16.msra.mxu0 0
      %2315 = vmatprep.subr.bf16.mxu0 0
      %2316 = vmatpush1.bf16.msra.mxu0 0
      %2317 = vmatprep.subr.bf16.mxu0 0
      %2318 = vmatpush1.bf16.msra.mxu0 0
      %2319 = vmatprep.subr.bf16.mxu0 0
      %2320 = vmatpush1.bf16.msra.mxu0 0
      %2321 = vmatprep.subr.bf16.mxu0 0
      %2322 = vmatpush1.bf16.msra.mxu0 0
      %2323 = vmatprep.mubr.bf16.mxu0 0
      %2324 = vmatmul.mubr.bf16.gmra.mrb[0].mxu0 %v2182
      %v2325 = vpop.f32.mrb[0].mxu0
      %v2326 = vadd.f32 0.0, %v2325
      %v2327 = vpop.f32.mrb[0].mxu0
      %v2328 = vadd.f32 0.0, %v2327
      %v2329 = vpop.f32.mrb[0].mxu0
      %v2330 = vpop.f32.mrb[0].mxu0
      %2331 = vdwg.mxu0
      %2332 = vmatprep.subr.bf16.mxu0 %v2147
      %2333 = vmatpush1.bf16.msra.mxu0 %v2146
      %2334 = vmatprep.subr.bf16.mxu0 %v2155
      %2335 = vmatpush1.bf16.msra.mxu0 %v2154
      %2336 = vmatprep.subr.bf16.mxu0 %v2207
      %2337 = vmatpush1.bf16.msra.mxu0 %v2204
      %2338 = vmatprep.subr.bf16.mxu0 0
      %2339 = vmatpush1.bf16.msra.mxu0 0
      %2340 = vmatprep.subr.bf16.mxu0 0
      %2341 = vmatpush1.bf16.msra.mxu0 0
      %2342 = vmatprep.subr.bf16.mxu0 0
      %2343 = vmatpush1.bf16.msra.mxu0 0
      %2344 = vmatprep.subr.bf16.mxu0 0
      %2345 = vmatpush1.bf16.msra.mxu0 0
      %2346 = vmatprep.subr.bf16.mxu0 0
      %2347 = vmatpush1.bf16.msra.mxu0 0
      %2348 = vmatprep.subr.bf16.mxu0 0
      %2349 = vmatpush1.bf16.msra.mxu0 0
      %2350 = vmatprep.subr.bf16.mxu0 0
      %2351 = vmatpush1.bf16.msra.mxu0 0
      %2352 = vmatprep.subr.bf16.mxu0 0
      %2353 = vmatpush1.bf16.msra.mxu0 0
      %2354 = vmatprep.subr.bf16.mxu0 0
      %2355 = vmatpush1.bf16.msra.mxu0 0
      %2356 = vmatprep.subr.bf16.mxu0 0
      %2357 = vmatpush1.bf16.msra.mxu0 0
      %2358 = vmatprep.subr.bf16.mxu0 0
      %2359 = vmatpush1.bf16.msra.mxu0 0
      %2360 = vmatprep.subr.bf16.mxu0 0
      %2361 = vmatpush1.bf16.msra.mxu0 0
      %2362 = vmatprep.subr.bf16.mxu0 0
      %2363 = vmatpush1.bf16.msra.mxu0 0
      %2364 = vmatprep.mubr.bf16.mxu0 0
      %2365 = vmatmul.mubr.bf16.gmra.mrb[0].mxu0 %v2182
      %v2366 = vpop.f32.mrb[0].mxu0
      %v2367 = vadd.f32 0.0, %v2366
      %v2368 = vpop.f32.mrb[0].mxu0
      %v2369 = vadd.f32 0.0, %v2368
      %v2370 = vpop.f32.mrb[0].mxu0
      %v2371 = vpop.f32.mrb[0].mxu0
      %2372 = vdwg.mxu0
      %v2393 = vunpack.c.l.b16 %v1539
      %v2394 = vunpack.c.h.b16 %v1539
      %v2395 = vunpack.c.l.b16 %v1540
      %v2396 = vunpack.c.h.b16 %v1540
      %v2397 = vunpack.c.l.b16 %v1541
      %v2398 = vunpack.c.h.b16 %v1541
      %v2399 = vunpack.c.l.b16 %v1542
      %v2400 = vunpack.c.h.b16 %v1542
      %v2401 = vunpack.c.l.b16 %v1543
      %v2402 = vunpack.c.h.b16 %v1543
      %v2403 = vunpack.c.l.b16 %v1544
      %v2404 = vunpack.c.h.b16 %v1544
      %v2405 = vunpack.c.l.b16 %v1545
      %v2406 = vunpack.c.h.b16 %v1545
      %v2407 = vunpack.c.l.b16 %v1546
      %v2408 = vunpack.c.h.b16 %v1546
      %v2409 = vunpack.c.l.b16 %v1547
      %v2410 = vunpack.c.h.b16 %v1547
      %v2411 = vunpack.c.l.b16 %v1548
      %v2412 = vunpack.c.h.b16 %v1548
      %v2413 = vunpack.c.l.b16 %v1549
      %v2414 = vunpack.c.h.b16 %v1549
      %v2415 = vunpack.c.l.b16 %v1550
      %v2416 = vunpack.c.h.b16 %v1550
      %v2417 = vunpack.c.l.b16 %v1551
      %v2418 = vunpack.c.h.b16 %v1551
      %v2419 = vunpack.c.l.b16 %v1552
      %v2420 = vunpack.c.h.b16 %v1552
      %v2421 = vunpack.c.l.b16 %v1553
      %v2422 = vunpack.c.h.b16 %v1553
      %v2423 = vunpack.c.l.b16 %v1554
      %v2424 = vunpack.c.h.b16 %v1554
      %v2425 = vunpack.c.l.b16 %v1555
      %v2426 = vunpack.c.h.b16 %v1555
      %v2427 = vunpack.c.l.b16 %v1556
      %v2428 = vunpack.c.h.b16 %v1556
      %v2429 = vunpack.c.l.b16 %v1557
      %v2430 = vunpack.c.h.b16 %v1557
      %v2431 = vunpack.c.l.b16 %v1558
      %v2432 = vunpack.c.h.b16 %v1558
      %v2433 = vpack.c.b16 %v2401, %v2393
      %v2434 = vpack.c.b16 %v2402, %v2394
      %v2435 = vpack.c.b16 %v2403, %v2395
      %v2436 = vpack.c.b16 %v2404, %v2396
      %v2437 = vpack.c.b16 %v2405, %v2397
      %v2438 = vpack.c.b16 %v2406, %v2398
      %v2439 = vpack.c.b16 %v2407, %v2399
      %v2440 = vpack.c.b16 %v2408, %v2400
      %v2441 = vpack.c.b16 %v2417, %v2409
      %v2442 = vpack.c.b16 %v2418, %v2410
      %v2443 = vpack.c.b16 %v2419, %v2411
      %v2444 = vpack.c.b16 %v2420, %v2412
      %v2445 = vpack.c.b16 %v2421, %v2413
      %v2446 = vpack.c.b16 %v2422, %v2414
      %v2447 = vpack.c.b16 %v2423, %v2415
      %v2448 = vpack.c.b16 %v2424, %v2416
      %v2449 = vpack.c.b16 %v2425, %v2425
      %v2450 = vpack.c.b16 %v2426, %v2426
      %v2451 = vpack.c.b16 %v2427, %v2427
      %v2452 = vpack.c.b16 %v2428, %v2428
      %v2453 = vpack.c.b16 %v2429, %v2429
      %v2454 = vpack.c.b16 %v2430, %v2430
      %v2455 = vpack.c.b16 %v2431, %v2431
      %v2456 = vpack.c.b16 %v2432, %v2432
      %v2474 = vsel %vm2180, %v1538, 0
      %v2477 = vsel %vm2184, %v2449, 0
      %v2480 = vsel %vm2184, %v2450, 0
      %v2483 = vsel %vm2184, %v2451, 0
      %v2486 = vsel %vm2184, %v2452, 0
      %v2489 = vsel %vm2184, %v2453, 0
      %v2492 = vsel %vm2184, %v2454, 0
      %v2495 = vsel %vm2184, %v2455, 0
      %v2498 = vsel %vm2184, %v2456, 0
      %2500 = vmatprep.subr.bf16.mxu0 %v2434
      %2501 = vmatpush1.bf16.msra.mxu0 %v2433
      %2502 = vmatprep.subr.bf16.mxu0 %v2442
      %2503 = vmatpush1.bf16.msra.mxu0 %v2441
      %2504 = vmatprep.subr.bf16.mxu0 %v2480
      %2505 = vmatpush1.bf16.msra.mxu0 %v2477
      %2506 = vmatprep.subr.bf16.mxu0 0
      %2507 = vmatpush1.bf16.msra.mxu0 0
      %2508 = vmatprep.subr.bf16.mxu0 0
      %2509 = vmatpush1.bf16.msra.mxu0 0
      %2510 = vmatprep.subr.bf16.mxu0 0
      %2511 = vmatpush1.bf16.msra.mxu0 0
      %2512 = vmatprep.subr.bf16.mxu0 0
      %2513 = vmatpush1.bf16.msra.mxu0 0
      %2514 = vmatprep.subr.bf16.mxu0 0
      %2515 = vmatpush1.bf16.msra.mxu0 0
      %2516 = vmatprep.subr.bf16.mxu0 0
      %2517 = vmatpush1.bf16.msra.mxu0 0
      %2518 = vmatprep.subr.bf16.mxu0 0
      %2519 = vmatpush1.bf16.msra.mxu0 0
      %2520 = vmatprep.subr.bf16.mxu0 0
      %2521 = vmatpush1.bf16.msra.mxu0 0
      %2522 = vmatprep.subr.bf16.mxu0 0
      %2523 = vmatpush1.bf16.msra.mxu0 0
      %2524 = vmatprep.subr.bf16.mxu0 0
      %2525 = vmatpush1.bf16.msra.mxu0 0
      %2526 = vmatprep.subr.bf16.mxu0 0
      %2527 = vmatpush1.bf16.msra.mxu0 0
      %2528 = vmatprep.subr.bf16.mxu0 0
      %2529 = vmatpush1.bf16.msra.mxu0 0
      %2530 = vmatprep.subr.bf16.mxu0 0
      %2531 = vmatpush1.bf16.msra.mxu0 0
      %2532 = vmatprep.mubr.bf16.mxu0 0
      %2533 = vmatmul.mubr.bf16.gmra.mrb[0].mxu0 %v2474
      %v2534 = vpop.f32.mrb[0].mxu0
      %v2535 = vadd.f32 %v2244, %v2534
      %v2536 = vpop.f32.mrb[0].mxu0
      %v2537 = vadd.f32 %v2246, %v2536
      %v2538 = vpop.f32.mrb[0].mxu0
      %v2539 = vpop.f32.mrb[0].mxu0
      %2540 = vdwg.mxu0
      %2541 = vmatprep.subr.bf16.mxu0 %v2436
      %2542 = vmatpush1.bf16.msra.mxu0 %v2435
      %2543 = vmatprep.subr.bf16.mxu0 %v2444
      %2544 = vmatpush1.bf16.msra.mxu0 %v2443
      %2545 = vmatprep.subr.bf16.mxu0 %v2486
      %2546 = vmatpush1.bf16.msra.mxu0 %v2483
      %2547 = vmatprep.subr.bf16.mxu0 0
      %2548 = vmatpush1.bf16.msra.mxu0 0
      %2549 = vmatprep.subr.bf16.mxu0 0
      %2550 = vmatpush1.bf16.msra.mxu0 0
      %2551 = vmatprep.subr.bf16.mxu0 0
      %2552 = vmatpush1.bf16.msra.mxu0 0
      %2553 = vmatprep.subr.bf16.mxu0 0
      %2554 = vmatpush1.bf16.msra.mxu0 0
      %2555 = vmatprep.subr.bf16.mxu0 0
      %2556 = vmatpush1.bf16.msra.mxu0 0
      %2557 = vmatprep.subr.bf16.mxu0 0
      %2558 = vmatpush1.bf16.msra.mxu0 0
      %2559 = vmatprep.subr.bf16.mxu0 0
      %2560 = vmatpush1.bf16.msra.mxu0 0
      %2561 = vmatprep.subr.bf16.mxu0 0
      %2562 = vmatpush1.bf16.msra.mxu0 0
      %2563 = vmatprep.subr.bf16.mxu0 0
      %2564 = vmatpush1.bf16.msra.mxu0 0
      %2565 = vmatprep.subr.bf16.mxu0 0
      %2566 = vmatpush1.bf16.msra.mxu0 0
      %2567 = vmatprep.subr.bf16.mxu0 0
      %2568 = vmatpush1.bf16.msra.mxu0 0
      %2569 = vmatprep.subr.bf16.mxu0 0
      %2570 = vmatpush1.bf16.msra.mxu0 0
      %2571 = vmatprep.subr.bf16.mxu0 0
      %2572 = vmatpush1.bf16.msra.mxu0 0
      %2573 = vmatprep.mubr.bf16.mxu0 0
      %2574 = vmatmul.mubr.bf16.gmra.mrb[0].mxu0 %v2474
      %v2575 = vpop.f32.mrb[0].mxu0
      %v2576 = vadd.f32 %v2285, %v2575
      %v2577 = vpop.f32.mrb[0].mxu0
      %v2578 = vadd.f32 %v2287, %v2577
      %v2579 = vpop.f32.mrb[0].mxu0
      %v2580 = vpop.f32.mrb[0].mxu0
      %2581 = vdwg.mxu0
      %2582 = vmatprep.subr.bf16.mxu0 %v2438
      %2583 = vmatpush1.bf16.msra.mxu0 %v2437
      %2584 = vmatprep.subr.bf16.mxu0 %v2446
      %2585 = vmatpush1.bf16.msra.mxu0 %v2445
      %2586 = vmatprep.subr.bf16.mxu0 %v2492
      %2587 = vmatpush1.bf16.msra.mxu0 %v2489
      %2588 = vmatprep.subr.bf16.mxu0 0
      %2589 = vmatpush1.bf16.msra.mxu0 0
      %2590 = vmatprep.subr.bf16.mxu0 0
      %2591 = vmatpush1.bf16.msra.mxu0 0
      %2592 = vmatprep.subr.bf16.mxu0 0
      %2593 = vmatpush1.bf16.msra.mxu0 0
      %2594 = vmatprep.subr.bf16.mxu0 0
      %2595 = vmatpush1.bf16.msra.mxu0 0
      %2596 = vmatprep.subr.bf16.mxu0 0
      %2597 = vmatpush1.bf16.msra.mxu0 0
      %2598 = vmatprep.subr.bf16.mxu0 0
      %2599 = vmatpush1.bf16.msra.mxu0 0
      %2600 = vmatprep.subr.bf16.mxu0 0
      %2601 = vmatpush1.bf16.msra.mxu0 0
      %2602 = vmatprep.subr.bf16.mxu0 0
      %2603 = vmatpush1.bf16.msra.mxu0 0
      %2604 = vmatprep.subr.bf16.mxu0 0
      %2605 = vmatpush1.bf16.msra.mxu0 0
      %2606 = vmatprep.subr.bf16.mxu0 0
      %2607 = vmatpush1.bf16.msra.mxu0 0
      %2608 = vmatprep.subr.bf16.mxu0 0
      %2609 = vmatpush1.bf16.msra.mxu0 0
      %2610 = vmatprep.subr.bf16.mxu0 0
      %2611 = vmatpush1.bf16.msra.mxu0 0
      %2612 = vmatprep.subr.bf16.mxu0 0
      %2613 = vmatpush1.bf16.msra.mxu0 0
      %2614 = vmatprep.mubr.bf16.mxu0 0
      %2615 = vmatmul.mubr.bf16.gmra.mrb[0].mxu0 %v2474
      %v2616 = vpop.f32.mrb[0].mxu0
      %v2617 = vadd.f32 %v2326, %v2616
      %v2618 = vpop.f32.mrb[0].mxu0
      %v2619 = vadd.f32 %v2328, %v2618
      %v2620 = vpop.f32.mrb[0].mxu0
      %v2621 = vpop.f32.mrb[0].mxu0
      %2622 = vdwg.mxu0
      %2623 = vmatprep.subr.bf16.mxu0 %v2440
      %2624 = vmatpush1.bf16.msra.mxu0 %v2439
      %2625 = vmatprep.subr.bf16.mxu0 %v2448
      %2626 = vmatpush1.bf16.msra.mxu0 %v2447
      %2627 = vmatprep.subr.bf16.mxu0 %v2498
      %2628 = vmatpush1.bf16.msra.mxu0 %v2495
      %2629 = vmatprep.subr.bf16.mxu0 0
      %2630 = vmatpush1.bf16.msra.mxu0 0
      %2631 = vmatprep.subr.bf16.mxu0 0
      %2632 = vmatpush1.bf16.msra.mxu0 0
      %2633 = vmatprep.subr.bf16.mxu0 0
      %2634 = vmatpush1.bf16.msra.mxu0 0
      %2635 = vmatprep.subr.bf16.mxu0 0
      %2636 = vmatpush1.bf16.msra.mxu0 0
      %2637 = vmatprep.subr.bf16.mxu0 0
      %2638 = vmatpush1.bf16.msra.mxu0 0
      %2639 = vmatprep.subr.bf16.mxu0 0
      %2640 = vmatpush1.bf16.msra.mxu0 0
      %2641 = vmatprep.subr.bf16.mxu0 0
      %2642 = vmatpush1.bf16.msra.mxu0 0
      %2643 = vmatprep.subr.bf16.mxu0 0
      %2644 = vmatpush1.bf16.msra.mxu0 0
      %2645 = vmatprep.subr.bf16.mxu0 0
      %2646 = vmatpush1.bf16.msra.mxu0 0
      %2647 = vmatprep.subr.bf16.mxu0 0
      %2648 = vmatpush1.bf16.msra.mxu0 0
      %2649 = vmatprep.subr.bf16.mxu0 0
      %2650 = vmatpush1.bf16.msra.mxu0 0
      %2651 = vmatprep.subr.bf16.mxu0 0
      %2652 = vmatpush1.bf16.msra.mxu0 0
      %2653 = vmatprep.subr.bf16.mxu0 0
      %2654 = vmatpush1.bf16.msra.mxu0 0
      %2655 = vmatprep.mubr.bf16.mxu0 0
      %2656 = vmatmul.mubr.bf16.gmra.mrb[0].mxu0 %v2474
      %v2657 = vpop.f32.mrb[0].mxu0
      %v2658 = vadd.f32 %v2367, %v2657
      %v2659 = vpop.f32.mrb[0].mxu0
      %v2660 = vadd.f32 %v2369, %v2659
      %v2661 = vpop.f32.mrb[0].mxu0
      %v2662 = vpop.f32.mrb[0].mxu0
      %2663 = vdwg.mxu0
      %v2668 = vunpack.c.l.s4 1983009808
      %v2669 = vunpack.c.0.s8 %v2668
      %v2670 = vlaneseq
      %v2671 = vshrl.u32 %v2670, 7
      %v2672 = vsub.s32 %v2669, %v2671
      %v2673 = vrot.slane %v457, %v2672
      %v2674 = vcombine.high %v2673, %v2673
      %2677 = vrot.lane.b32.xlu0 %v2674, 17
      %v2678 = vpop.permute.xlu0 %2677
      %2679 = vrot.lane.b32.xlu0 %v2673, 17
      %v2680 = vpop.permute.xlu0 %2679
      %v2681 = vsel %vm526, %v1569, %v2680
      %v2682 = vsel %vm526, %v2680, %v2678
      %v2687 = vsel %vm541, %v2678, %v521
      %v2689 = vmul.bf16 %v2687, %v572
      %v2690 = vmul.bf16 %v531, %v579
      %v2691 = vmul.bf16 %v532, %v586
      %v2692 = vmul.bf16 %v533, %v593
      %v2693 = vmul.bf16 %v1572, %v600
      %v2694 = vmul.bf16 %v1573, %v607
      %v2695 = vmul.bf16 %v2681, %v614
      %v2696 = vmul.bf16 %v2682, %v621
      %v2705 = vunpack.c.l.b16 %v2689
      %v2706 = vunpack.c.l.b16 %v2690
      %v2707 = vunpack.c.l.b16 %v2691
      %v2708 = vunpack.c.l.b16 %v2692
      %v2709 = vunpack.c.l.b16 %v2693
      %v2710 = vunpack.c.l.b16 %v2694
      %v2711 = vunpack.c.l.b16 %v2695
      %v2712 = vunpack.c.l.b16 %v2696
      %v2713 = vpack.c.b16 %v2706, %v2705
      %v2714 = vpack.c.b16 %v2708, %v2707
      %v2715 = vpack.c.b16 %v2710, %v2709
      %v2716 = vpack.c.b16 %v2712, %v2711
      %2721 = vst [vmem:[#allocation2] sm:$0x33] %v2713
      %2722 = vst [vmem:[#allocation2 + $0x8] sm:$0x33] %v2714
      %2723 = vst [vmem:[#allocation2 + $0x10] sm:$0x33] %v2715
      %2724 = vst [vmem:[#allocation2 + $0x18] sm:$0x33] %v2716
      %2725 = vrot.lane.b32.xlu0 %v2674, 16
      %v2726 = vpop.permute.xlu0 %2725
      %2727 = vrot.lane.b32.xlu0 %v2673, 16
      %v2728 = vpop.permute.xlu0 %2727
      %v2729 = vsel %vm674, %v1617, %v2728
      %v2730 = vsel %vm674, %v2728, %v2726
      %v2735 = vsel %vm689, %v2726, %v669
      %v2737 = vmul.bf16 %v2735, %v700
      %v2738 = vmul.bf16 %v679, %v707
      %v2739 = vmul.bf16 %v680, %v714
      %v2740 = vmul.bf16 %v681, %v721
      %v2741 = vmul.bf16 %v1620, %v728
      %v2742 = vmul.bf16 %v1621, %v735
      %v2743 = vmul.bf16 %v2729, %v742
      %v2744 = vmul.bf16 %v2730, %v749
      %v2753 = vunpack.c.l.b16 %v2737
      %v2754 = vunpack.c.l.b16 %v2738
      %v2755 = vunpack.c.l.b16 %v2739
      %v2756 = vunpack.c.l.b16 %v2740
      %v2757 = vunpack.c.l.b16 %v2741
      %v2758 = vunpack.c.l.b16 %v2742
      %v2759 = vunpack.c.l.b16 %v2743
      %v2760 = vunpack.c.l.b16 %v2744
      %v2761 = vpack.c.b16 %v2754, %v2753
      %v2762 = vpack.c.b16 %v2756, %v2755
      %v2763 = vpack.c.b16 %v2758, %v2757
      %v2764 = vpack.c.b16 %v2760, %v2759
      %v2765 = vrot.slane %v2761, 6
      %v2766 = vrot.slane %v2762, 6
      %v2767 = vrot.slane %v2763, 6
      %v2768 = vrot.slane %v2764, 6
      %2773 = vst [vmem:[#allocation2] sm:$0xcc] %v2765
      %2774 = vst [vmem:[#allocation2 + $0x8] sm:$0xcc] %v2766
      %2775 = vst [vmem:[#allocation2 + $0x10] sm:$0xcc] %v2767
      %2776 = vst [vmem:[#allocation2 + $0x18] sm:$0xcc] %v2768
      %2777 = vrot.lane.b32.xlu0 %v2674, 15
      %v2778 = vpop.permute.xlu0 %2777
      %2779 = vrot.lane.b32.xlu0 %v2673, 15
      %v2780 = vpop.permute.xlu0 %2779
      %v2781 = vsel %vm806, %v1669, %v2780
      %v2782 = vsel %vm806, %v2780, %v2778
      %v2787 = vsel %vm821, %v2778, %v801
      %v2789 = vmul.bf16 %v2787, %v829
      %v2790 = vmul.bf16 %v811, %v833
      %v2791 = vmul.bf16 %v812, %v837
      %v2792 = vmul.bf16 %v813, %v841
      %v2793 = vmul.bf16 %v1672, %v845
      %v2794 = vmul.bf16 %v1673, %v849
      %v2795 = vmul.bf16 %v2781, %v853
      %v2796 = vmul.bf16 %v2782, %v857
      %v2805 = vunpack.c.l.b16 %v2789
      %v2806 = vunpack.c.l.b16 %v2790
      %v2807 = vunpack.c.l.b16 %v2791
      %v2808 = vunpack.c.l.b16 %v2792
      %v2809 = vunpack.c.l.b16 %v2793
      %v2810 = vunpack.c.l.b16 %v2794
      %v2811 = vunpack.c.l.b16 %v2795
      %v2812 = vunpack.c.l.b16 %v2796
      %v2813 = vpack.c.b16 %v2806, %v2805
      %v2814 = vpack.c.b16 %v2808, %v2807
      %v2815 = vpack.c.b16 %v2810, %v2809
      %v2816 = vpack.c.b16 %v2812, %v2811
      %2821 = vst [vmem:[#allocation2 + $0x20] sm:$0x33] %v2813
      %2822 = vst [vmem:[#allocation2 + $0x28] sm:$0x33] %v2814
      %2823 = vst [vmem:[#allocation2 + $0x30] sm:$0x33] %v2815
      %2824 = vst [vmem:[#allocation2 + $0x38] sm:$0x33] %v2816
      %2825 = vrot.lane.b32.xlu0 %v2674, 1
      %v2826 = vpop.permute.xlu0 %2825
      %2827 = vrot.lane.b32.xlu0 %v2673, 1
      %v2828 = vpop.permute.xlu0 %2827
      %v2829 = vsel %vm910, %v1717, %v2828
      %v2830 = vsel %vm910, %v2828, %v2826
      %v2835 = vsel %vm925, %v2826, %v905
      %v2837 = vmul.bf16 %v2835, %v933
      %v2838 = vmul.bf16 %v915, %v937
      %v2839 = vmul.bf16 %v916, %v941
      %v2840 = vmul.bf16 %v917, %v945
      %v2841 = vmul.bf16 %v1720, %v949
      %v2842 = vmul.bf16 %v1721, %v953
      %v2843 = vmul.bf16 %v2829, %v957
      %v2844 = vmul.bf16 %v2830, %v961
      %v2853 = vunpack.c.l.b16 %v2837
      %v2854 = vunpack.c.l.b16 %v2838
      %v2855 = vunpack.c.l.b16 %v2839
      %v2856 = vunpack.c.l.b16 %v2840
      %v2857 = vunpack.c.l.b16 %v2841
      %v2858 = vunpack.c.l.b16 %v2842
      %v2859 = vunpack.c.l.b16 %v2843
      %v2860 = vunpack.c.l.b16 %v2844
      %v2861 = vpack.c.b16 %v2854, %v2853
      %v2862 = vpack.c.b16 %v2856, %v2855
      %v2863 = vpack.c.b16 %v2858, %v2857
      %v2864 = vpack.c.b16 %v2860, %v2859
      %v2865 = vrot.slane %v2861, 6
      %v2866 = vrot.slane %v2862, 6
      %v2867 = vrot.slane %v2863, 6
      %v2868 = vrot.slane %v2864, 6
      %2873 = vst [vmem:[#allocation2 + $0x20] sm:$0xcc] %v2865
      %2874 = vst [vmem:[#allocation2 + $0x28] sm:$0xcc] %v2866
      %2875 = vst [vmem:[#allocation2 + $0x30] sm:$0xcc] %v2867
      %2876 = vst [vmem:[#allocation2 + $0x38] sm:$0xcc] %v2868
      %v2877 = vmul.bf16 %v493, %v1005
      %v2878 = vmul.bf16 %v495, %v1009
      %v2879 = vmul.bf16 %v502, %v1013
      %v2880 = vmul.bf16 %v503, %v1017
      %v2881 = vmul.bf16 %v1566, %v1021
      %v2882 = vmul.bf16 %v1567, %v1025
      %v2883 = vmul.bf16 %v2673, %v1029
      %v2884 = vmul.bf16 %v2674, %v1033
      %v2893 = vunpack.c.l.b16 %v2877
      %v2894 = vunpack.c.l.b16 %v2878
      %v2895 = vunpack.c.l.b16 %v2879
      %v2896 = vunpack.c.l.b16 %v2880
      %v2897 = vunpack.c.l.b16 %v2881
      %v2898 = vunpack.c.l.b16 %v2882
      %v2899 = vunpack.c.l.b16 %v2883
      %v2900 = vunpack.c.l.b16 %v2884
      %v2901 = vpack.c.b16 %v2894, %v2893
      %v2902 = vpack.c.b16 %v2896, %v2895
      %v2903 = vpack.c.b16 %v2898, %v2897
      %v2904 = vpack.c.b16 %v2900, %v2899
      %2909 = vst [vmem:[#allocation2 + $0x40] sm:$0x33] %v2901
      %2910 = vst [vmem:[#allocation2 + $0x48] sm:$0x33] %v2902
      %2911 = vst [vmem:[#allocation2 + $0x50] sm:$0x33] %v2903
      %2912 = vst [vmem:[#allocation2 + $0x58] sm:$0x33] %v2904
      %2913 = vrot.lane.b32.xlu0 %v2673, 127
      %v2914 = vpop.permute.xlu0 %2913
      %2915 = vrot.lane.b32.xlu0 %v2674, 127
      %v2916 = vpop.permute.xlu0 %2915
      %v2917 = vsel %vm1086, %v1857, %v2914
      %v2918 = vsel %vm1086, %v2914, %v2916
      %v2923 = vsel %vm1101, %v2916, %v1079
      %v2925 = vmul.bf16 %v1091, %v1109
      %v2926 = vmul.bf16 %v1092, %v1113
      %v2927 = vmul.bf16 %v1093, %v1117
      %v2928 = vmul.bf16 %v1858, %v1121
      %v2929 = vmul.bf16 %v1859, %v1125
      %v2930 = vmul.bf16 %v2917, %v1129
      %v2931 = vmul.bf16 %v2918, %v1133
      %v2932 = vmul.bf16 %v2923, %v1137
      %v2941 = vunpack.c.l.b16 %v2925
      %v2942 = vunpack.c.l.b16 %v2926
      %v2943 = vunpack.c.l.b16 %v2927
      %v2944 = vunpack.c.l.b16 %v2928
      %v2945 = vunpack.c.l.b16 %v2929
      %v2946 = vunpack.c.l.b16 %v2930
      %v2947 = vunpack.c.l.b16 %v2931
      %v2948 = vunpack.c.l.b16 %v2932
      %v2949 = vpack.c.b16 %v2942, %v2941
      %v2950 = vpack.c.b16 %v2944, %v2943
      %v2951 = vpack.c.b16 %v2946, %v2945
      %v2952 = vpack.c.b16 %v2948, %v2947
      %v2953 = vrot.slane %v2949, 6
      %v2954 = vrot.slane %v2950, 6
      %v2955 = vrot.slane %v2951, 6
      %v2956 = vrot.slane %v2952, 6
      %2961 = vst [vmem:[#allocation2 + $0x40] sm:$0xcc] %v2953
      %2962 = vst [vmem:[#allocation2 + $0x48] sm:$0xcc] %v2954
      %2963 = vst [vmem:[#allocation2 + $0x50] sm:$0xcc] %v2955
      %2964 = vst [vmem:[#allocation2 + $0x58] sm:$0xcc] %v2956
      %2965 = vrot.lane.b32.xlu0 %v2673, 113
      %v2966 = vpop.permute.xlu0 %2965
      %2967 = vrot.lane.b32.xlu0 %v2674, 113
      %v2968 = vpop.permute.xlu0 %2967
      %v2969 = vsel %vm1194, %v1909, %v2966
      %v2970 = vsel %vm1194, %v2966, %v2968
      %v2975 = vsel %vm1209, %v2968, %v1187
      %v2977 = vmul.bf16 %v1199, %v1217
      %v2978 = vmul.bf16 %v1200, %v1221
      %v2979 = vmul.bf16 %v1201, %v1225
      %v2980 = vmul.bf16 %v1910, %v1229
      %v2981 = vmul.bf16 %v1911, %v1233
      %v2982 = vmul.bf16 %v2969, %v1237
      %v2983 = vmul.bf16 %v2970, %v1241
      %v2984 = vmul.bf16 %v2975, %v1245
      %v2993 = vunpack.c.l.b16 %v2977
      %v2994 = vunpack.c.l.b16 %v2978
      %v2995 = vunpack.c.l.b16 %v2979
      %v2996 = vunpack.c.l.b16 %v2980
      %v2997 = vunpack.c.l.b16 %v2981
      %v2998 = vunpack.c.l.b16 %v2982
      %v2999 = vunpack.c.l.b16 %v2983
      %v3000 = vunpack.c.l.b16 %v2984
      %v3001 = vpack.c.b16 %v2994, %v2993
      %v3002 = vpack.c.b16 %v2996, %v2995
      %v3003 = vpack.c.b16 %v2998, %v2997
      %v3004 = vpack.c.b16 %v3000, %v2999
      %3009 = vst [vmem:[#allocation2 + $0x60] sm:$0x33] %v3001
      %3010 = vst [vmem:[#allocation2 + $0x68] sm:$0x33] %v3002
      %3011 = vst [vmem:[#allocation2 + $0x70] sm:$0x33] %v3003
      %3012 = vst [vmem:[#allocation2 + $0x78] sm:$0x33] %v3004
      %3013 = vrot.lane.b32.xlu0 %v2673, 112
      %v3014 = vpop.permute.xlu0 %3013
      %3015 = vrot.lane.b32.xlu0 %v2674, 112
      %v3016 = vpop.permute.xlu0 %3015
      %v3017 = vsel %vm1298, %v1957, %v3014
      %v3018 = vsel %vm1298, %v3014, %v3016
      %v3023 = vsel %vm1313, %v3016, %v1291
      %v3025 = vmul.bf16 %v1303, %v1321
      %v3026 = vmul.bf16 %v1304, %v1325
      %v3027 = vmul.bf16 %v1305, %v1329
      %v3028 = vmul.bf16 %v1958, %v1333
      %v3029 = vmul.bf16 %v1959, %v1337
      %v3030 = vmul.bf16 %v3017, %v1341
      %v3031 = vmul.bf16 %v3018, %v1345
      %v3032 = vmul.bf16 %v3023, %v1349
      %v3041 = vunpack.c.l.b16 %v3025
      %v3042 = vunpack.c.l.b16 %v3026
      %v3043 = vunpack.c.l.b16 %v3027
      %v3044 = vunpack.c.l.b16 %v3028
      %v3045 = vunpack.c.l.b16 %v3029
      %v3046 = vunpack.c.l.b16 %v3030
      %v3047 = vunpack.c.l.b16 %v3031
      %v3048 = vunpack.c.l.b16 %v3032
      %v3049 = vpack.c.b16 %v3042, %v3041
      %v3050 = vpack.c.b16 %v3044, %v3043
      %v3051 = vpack.c.b16 %v3046, %v3045
      %v3052 = vpack.c.b16 %v3048, %v3047
      %v3053 = vrot.slane %v3049, 6
      %v3054 = vrot.slane %v3050, 6
      %v3055 = vrot.slane %v3051, 6
      %v3056 = vrot.slane %v3052, 6
      %3061 = vst [vmem:[#allocation2 + $0x60] sm:$0xcc] %v3053
      %3062 = vst [vmem:[#allocation2 + $0x68] sm:$0xcc] %v3054
      %3063 = vst [vmem:[#allocation2 + $0x70] sm:$0xcc] %v3055
      %3064 = vst [vmem:[#allocation2 + $0x78] sm:$0xcc] %v3056
      %3065 = vrot.lane.b32.xlu0 %v2673, 111
      %v3066 = vpop.permute.xlu0 %3065
      %3067 = vrot.lane.b32.xlu0 %v2674, 111
      %v3068 = vpop.permute.xlu0 %3067
      %v3069 = vsel %vm1406, %v2009, %v3066
      %v3070 = vsel %vm1406, %v3066, %v3068
      %v3075 = vsel %vm1421, %v3068, %v1399
      %v3077 = vmul.bf16 %v1411, %v1452
      %v3078 = vmul.bf16 %v1412, %v1459
      %v3079 = vmul.bf16 %v1413, %v1466
      %v3080 = vmul.bf16 %v2010, %v1473
      %v3081 = vmul.bf16 %v2011, %v1480
      %v3082 = vmul.bf16 %v3069, %v1487
      %v3083 = vmul.bf16 %v3070, %v1494
      %v3084 = vmul.bf16 %v3075, %v1501
      %v3093 = vunpack.c.l.b16 %v3077
      %v3094 = vunpack.c.l.b16 %v3078
      %v3095 = vunpack.c.l.b16 %v3079
      %v3096 = vunpack.c.l.b16 %v3080
      %v3097 = vunpack.c.l.b16 %v3081
      %v3098 = vunpack.c.l.b16 %v3082
      %v3099 = vunpack.c.l.b16 %v3083
      %v3100 = vunpack.c.l.b16 %v3084
      %v3101 = vpack.c.b16 %v3094, %v3093
      %v3102 = vpack.c.b16 %v3096, %v3095
      %v3103 = vpack.c.b16 %v3098, %v3097
      %v3104 = vpack.c.b16 %v3100, %v3099
      %3109 = vst [vmem:[#allocation2 + $0x80] sm:$0x33] %v3101
      %3110 = vst [vmem:[#allocation2 + $0x88] sm:$0x33] %v3102
      %3111 = vst [vmem:[#allocation2 + $0x90] sm:$0x33] %v3103
      %3112 = vst [vmem:[#allocation2 + $0x98] sm:$0x33] %v3104
      %v3113 = vld [vmem:[%s3] sm:$0xf]
      %v3114 = vld [vmem:[#allocation2] sm:$0xff]
      %v3115 = vld [vmem:[#allocation2 + $0x8] sm:$0xff]
      %v3116 = vld [vmem:[#allocation2 + $0x10] sm:$0xff]
      %v3117 = vld [vmem:[#allocation2 + $0x18] sm:$0xff]
      %v3118 = vld [vmem:[#allocation2 + $0x20] sm:$0xff]
      %v3119 = vld [vmem:[#allocation2 + $0x28] sm:$0xff]
      %v3120 = vld [vmem:[#allocation2 + $0x30] sm:$0xff]
      %v3121 = vld [vmem:[#allocation2 + $0x38] sm:$0xff]
      %v3122 = vld [vmem:[#allocation2 + $0x40] sm:$0xff]
      %v3123 = vld [vmem:[#allocation2 + $0x48] sm:$0xff]
      %v3124 = vld [vmem:[#allocation2 + $0x50] sm:$0xff]
      %v3125 = vld [vmem:[#allocation2 + $0x58] sm:$0xff]
      %v3126 = vld [vmem:[#allocation2 + $0x60] sm:$0xff]
      %v3127 = vld [vmem:[#allocation2 + $0x68] sm:$0xff]
      %v3128 = vld [vmem:[#allocation2 + $0x70] sm:$0xff]
      %v3129 = vld [vmem:[#allocation2 + $0x78] sm:$0xff]
      %v3130 = vld [vmem:[#allocation2 + $0x80] sm:$0x33]
      %v3131 = vld [vmem:[#allocation2 + $0x88] sm:$0x33]
      %v3132 = vld [vmem:[#allocation2 + $0x90] sm:$0x33]
      %v3133 = vld [vmem:[#allocation2 + $0x98] sm:$0x33]
      %v3135 = vunpack.c.l.b16 %v3113
      %v3136 = vpack.c.b16 %v3135, %v3135
      %3137 = vrot.lane.b32.xlu0 %v3136, 56
      %v3138 = vpop.permute.xlu0 %3137
      %v3159 = vunpack.c.l.b16 %v3114
      %v3160 = vunpack.c.h.b16 %v3114
      %v3161 = vunpack.c.l.b16 %v3115
      %v3162 = vunpack.c.h.b16 %v3115
      %v3163 = vunpack.c.l.b16 %v3116
      %v3164 = vunpack.c.h.b16 %v3116
      %v3165 = vunpack.c.l.b16 %v3117
      %v3166 = vunpack.c.h.b16 %v3117
      %v3167 = vunpack.c.l.b16 %v3118
      %v3168 = vunpack.c.h.b16 %v3118
      %v3169 = vunpack.c.l.b16 %v3119
      %v3170 = vunpack.c.h.b16 %v3119
      %v3171 = vunpack.c.l.b16 %v3120
      %v3172 = vunpack.c.h.b16 %v3120
      %v3173 = vunpack.c.l.b16 %v3121
      %v3174 = vunpack.c.h.b16 %v3121
      %v3175 = vunpack.c.l.b16 %v3122
      %v3176 = vunpack.c.h.b16 %v3122
      %v3177 = vunpack.c.l.b16 %v3123
      %v3178 = vunpack.c.h.b16 %v3123
      %v3179 = vunpack.c.l.b16 %v3124
      %v3180 = vunpack.c.h.b16 %v3124
      %v3181 = vunpack.c.l.b16 %v3125
      %v3182 = vunpack.c.h.b16 %v3125
      %v3183 = vunpack.c.l.b16 %v3126
      %v3184 = vunpack.c.h.b16 %v3126
      %v3185 = vunpack.c.l.b16 %v3127
      %v3186 = vunpack.c.h.b16 %v3127
      %v3187 = vunpack.c.l.b16 %v3128
      %v3188 = vunpack.c.h.b16 %v3128
      %v3189 = vunpack.c.l.b16 %v3129
      %v3190 = vunpack.c.h.b16 %v3129
      %v3191 = vunpack.c.l.b16 %v3130
      %v3192 = vunpack.c.h.b16 %v3130
      %v3193 = vunpack.c.l.b16 %v3131
      %v3194 = vunpack.c.h.b16 %v3131
      %v3195 = vunpack.c.l.b16 %v3132
      %v3196 = vunpack.c.h.b16 %v3132
      %v3197 = vunpack.c.l.b16 %v3133
      %v3198 = vunpack.c.h.b16 %v3133
      %v3199 = vpack.c.b16 %v3167, %v3159
      %v3200 = vpack.c.b16 %v3168, %v3160
      %v3201 = vpack.c.b16 %v3169, %v3161
      %v3202 = vpack.c.b16 %v3170, %v3162
      %v3203 = vpack.c.b16 %v3171, %v3163
      %v3204 = vpack.c.b16 %v3172, %v3164
      %v3205 = vpack.c.b16 %v3173, %v3165
      %v3206 = vpack.c.b16 %v3174, %v3166
      %v3207 = vpack.c.b16 %v3183, %v3175
      %v3208 = vpack.c.b16 %v3184, %v3176
      %v3209 = vpack.c.b16 %v3185, %v3177
      %v3210 = vpack.c.b16 %v3186, %v3178
      %v3211 = vpack.c.b16 %v3187, %v3179
      %v3212 = vpack.c.b16 %v3188, %v3180
      %v3213 = vpack.c.b16 %v3189, %v3181
      %v3214 = vpack.c.b16 %v3190, %v3182
      %v3215 = vpack.c.b16 %v3191, %v3191
      %v3216 = vpack.c.b16 %v3192, %v3192
      %v3217 = vpack.c.b16 %v3193, %v3193
      %v3218 = vpack.c.b16 %v3194, %v3194
      %v3219 = vpack.c.b16 %v3195, %v3195
      %v3220 = vpack.c.b16 %v3196, %v3196
      %v3221 = vpack.c.b16 %v3197, %v3197
      %v3222 = vpack.c.b16 %v3198, %v3198
      %v3240 = vsel %vm2180, %v3138, 0
      %v3243 = vsel %vm2184, %v3215, 0
      %v3246 = vsel %vm2184, %v3216, 0
      %v3249 = vsel %vm2184, %v3217, 0
      %v3252 = vsel %vm2184, %v3218, 0
      %v3255 = vsel %vm2184, %v3219, 0
      %v3258 = vsel %vm2184, %v3220, 0
      %v3261 = vsel %vm2184, %v3221, 0
      %v3264 = vsel %vm2184, %v3222, 0
      %3266 = vmatprep.subr.bf16.mxu0 %v3200
      %3267 = vmatpush1.bf16.msra.mxu0 %v3199
      %3268 = vmatprep.subr.bf16.mxu0 %v3208
      %3269 = vmatpush1.bf16.msra.mxu0 %v3207
      %3270 = vmatprep.subr.bf16.mxu0 %v3246
      %3271 = vmatpush1.bf16.msra.mxu0 %v3243
      %3272 = vmatprep.subr.bf16.mxu0 0
      %3273 = vmatpush1.bf16.msra.mxu0 0
      %3274 = vmatprep.subr.bf16.mxu0 0
      %3275 = vmatpush1.bf16.msra.mxu0 0
      %3276 = vmatprep.subr.bf16.mxu0 0
      %3277 = vmatpush1.bf16.msra.mxu0 0
      %3278 = vmatprep.subr.bf16.mxu0 0
      %3279 = vmatpush1.bf16.msra.mxu0 0
      %3280 = vmatprep.subr.bf16.mxu0 0
      %3281 = vmatpush1.bf16.msra.mxu0 0
      %3282 = vmatprep.subr.bf16.mxu0 0
      %3283 = vmatpush1.bf16.msra.mxu0 0
      %3284 = vmatprep.subr.bf16.mxu0 0
      %3285 = vmatpush1.bf16.msra.mxu0 0
      %3286 = vmatprep.subr.bf16.mxu0 0
      %3287 = vmatpush1.bf16.msra.mxu0 0
      %3288 = vmatprep.subr.bf16.mxu0 0
      %3289 = vmatpush1.bf16.msra.mxu0 0
      %3290 = vmatprep.subr.bf16.mxu0 0
      %3291 = vmatpush1.bf16.msra.mxu0 0
      %3292 = vmatprep.subr.bf16.mxu0 0
      %3293 = vmatpush1.bf16.msra.mxu0 0
      %3294 = vmatprep.subr.bf16.mxu0 0
      %3295 = vmatpush1.bf16.msra.mxu0 0
      %3296 = vmatprep.subr.bf16.mxu0 0
      %3297 = vmatpush1.bf16.msra.mxu0 0
      %3298 = vmatprep.mubr.bf16.mxu0 0
      %3299 = vmatmul.mubr.bf16.gmra.mrb[0].mxu0 %v3240
      %v3300 = vpop.f32.mrb[0].mxu0
      %v3301 = vadd.f32 0.0, %v3300
      %v3302 = vpop.f32.mrb[0].mxu0
      %v3303 = vadd.f32 0.0, %v3302
      %v3304 = vpop.f32.mrb[0].mxu0
      %v3305 = vpop.f32.mrb[0].mxu0
      %3306 = vdwg.mxu0
      %3307 = vmatprep.subr.bf16.mxu0 %v3202
      %3308 = vmatpush1.bf16.msra.mxu0 %v3201
      %3309 = vmatprep.subr.bf16.mxu0 %v3210
      %3310 = vmatpush1.bf16.msra.mxu0 %v3209
      %3311 = vmatprep.subr.bf16.mxu0 %v3252
      %3312 = vmatpush1.bf16.msra.mxu0 %v3249
      %3313 = vmatprep.subr.bf16.mxu0 0
      %3314 = vmatpush1.bf16.msra.mxu0 0
      %3315 = vmatprep.subr.bf16.mxu0 0
      %3316 = vmatpush1.bf16.msra.mxu0 0
      %3317 = vmatprep.subr.bf16.mxu0 0
      %3318 = vmatpush1.bf16.msra.mxu0 0
      %3319 = vmatprep.subr.bf16.mxu0 0
      %3320 = vmatpush1.bf16.msra.mxu0 0
      %3321 = vmatprep.subr.bf16.mxu0 0
      %3322 = vmatpush1.bf16.msra.mxu0 0
      %3323 = vmatprep.subr.bf16.mxu0 0
      %3324 = vmatpush1.bf16.msra.mxu0 0
      %3325 = vmatprep.subr.bf16.mxu0 0
      %3326 = vmatpush1.bf16.msra.mxu0 0
      %3327 = vmatprep.subr.bf16.mxu0 0
      %3328 = vmatpush1.bf16.msra.mxu0 0
      %3329 = vmatprep.subr.bf16.mxu0 0
      %3330 = vmatpush1.bf16.msra.mxu0 0
      %3331 = vmatprep.subr.bf16.mxu0 0
      %3332 = vmatpush1.bf16.msra.mxu0 0
      %3333 = vmatprep.subr.bf16.mxu0 0
      %3334 = vmatpush1.bf16.msra.mxu0 0
      %3335 = vmatprep.subr.bf16.mxu0 0
      %3336 = vmatpush1.bf16.msra.mxu0 0
      %3337 = vmatprep.subr.bf16.mxu0 0
      %3338 = vmatpush1.bf16.msra.mxu0 0
      %3339 = vmatprep.mubr.bf16.mxu0 0
      %3340 = vmatmul.mubr.bf16.gmra.mrb[0].mxu0 %v3240
      %v3341 = vpop.f32.mrb[0].mxu0
      %v3342 = vadd.f32 0.0, %v3341
      %v3343 = vpop.f32.mrb[0].mxu0
      %v3344 = vadd.f32 0.0, %v3343
      %v3345 = vpop.f32.mrb[0].mxu0
      %v3346 = vpop.f32.mrb[0].mxu0
      %3347 = vdwg.mxu0
      %3348 = vmatprep.subr.bf16.mxu0 %v3204
      %3349 = vmatpush1.bf16.msra.mxu0 %v3203
      %3350 = vmatprep.subr.bf16.mxu0 %v3212
      %3351 = vmatpush1.bf16.msra.mxu0 %v3211
      %3352 = vmatprep.subr.bf16.mxu0 %v3258
      %3353 = vmatpush1.bf16.msra.mxu0 %v3255
      %3354 = vmatprep.subr.bf16.mxu0 0
      %3355 = vmatpush1.bf16.msra.mxu0 0
      %3356 = vmatprep.subr.bf16.mxu0 0
      %3357 = vmatpush1.bf16.msra.mxu0 0
      %3358 = vmatprep.subr.bf16.mxu0 0
      %3359 = vmatpush1.bf16.msra.mxu0 0
      %3360 = vmatprep.subr.bf16.mxu0 0
      %3361 = vmatpush1.bf16.msra.mxu0 0
      %3362 = vmatprep.subr.bf16.mxu0 0
      %3363 = vmatpush1.bf16.msra.mxu0 0
      %3364 = vmatprep.subr.bf16.mxu0 0
      %3365 = vmatpush1.bf16.msra.mxu0 0
      %3366 = vmatprep.subr.bf16.mxu0 0
      %3367 = vmatpush1.bf16.msra.mxu0 0
      %3368 = vmatprep.subr.bf16.mxu0 0
      %3369 = vmatpush1.bf16.msra.mxu0 0
      %3370 = vmatprep.subr.bf16.mxu0 0
      %3371 = vmatpush1.bf16.msra.mxu0 0
      %3372 = vmatprep.subr.bf16.mxu0 0
      %3373 = vmatpush1.bf16.msra.mxu0 0
      %3374 = vmatprep.subr.bf16.mxu0 0
      %3375 = vmatpush1.bf16.msra.mxu0 0
      %3376 = vmatprep.subr.bf16.mxu0 0
      %3377 = vmatpush1.bf16.msra.mxu0 0
      %3378 = vmatprep.subr.bf16.mxu0 0
      %3379 = vmatpush1.bf16.msra.mxu0 0
      %3380 = vmatprep.mubr.bf16.mxu0 0
      %3381 = vmatmul.mubr.bf16.gmra.mrb[0].mxu0 %v3240
      %v3382 = vpop.f32.mrb[0].mxu0
      %v3383 = vadd.f32 0.0, %v3382
      %v3384 = vpop.f32.mrb[0].mxu0
      %v3385 = vadd.f32 0.0, %v3384
      %v3386 = vpop.f32.mrb[0].mxu0
      %v3387 = vpop.f32.mrb[0].mxu0
      %3388 = vdwg.mxu0
      %3389 = vmatprep.subr.bf16.mxu0 %v3206
      %3390 = vmatpush1.bf16.msra.mxu0 %v3205
      %3391 = vmatprep.subr.bf16.mxu0 %v3214
      %3392 = vmatpush1.bf16.msra.mxu0 %v3213
      %3393 = vmatprep.subr.bf16.mxu0 %v3264
      %3394 = vmatpush1.bf16.msra.mxu0 %v3261
      %3395 = vmatprep.subr.bf16.mxu0 0
      %3396 = vmatpush1.bf16.msra.mxu0 0
      %3397 = vmatprep.subr.bf16.mxu0 0
      %3398 = vmatpush1.bf16.msra.mxu0 0
      %3399 = vmatprep.subr.bf16.mxu0 0
      %3400 = vmatpush1.bf16.msra.mxu0 0
      %3401 = vmatprep.subr.bf16.mxu0 0
      %3402 = vmatpush1.bf16.msra.mxu0 0
      %3403 = vmatprep.subr.bf16.mxu0 0
      %3404 = vmatpush1.bf16.msra.mxu0 0
      %3405 = vmatprep.subr.bf16.mxu0 0
      %3406 = vmatpush1.bf16.msra.mxu0 0
      %3407 = vmatprep.subr.bf16.mxu0 0
      %3408 = vmatpush1.bf16.msra.mxu0 0
      %3409 = vmatprep.subr.bf16.mxu0 0
      %3410 = vmatpush1.bf16.msra.mxu0 0
      %3411 = vmatprep.subr.bf16.mxu0 0
      %3412 = vmatpush1.bf16.msra.mxu0 0
      %3413 = vmatprep.subr.bf16.mxu0 0
      %3414 = vmatpush1.bf16.msra.mxu0 0
      %3415 = vmatprep.subr.bf16.mxu0 0
      %3416 = vmatpush1.bf16.msra.mxu0 0
      %3417 = vmatprep.subr.bf16.mxu0 0
      %3418 = vmatpush1.bf16.msra.mxu0 0
      %3419 = vmatprep.subr.bf16.mxu0 0
      %3420 = vmatpush1.bf16.msra.mxu0 0
      %3421 = vmatprep.mubr.bf16.mxu0 0
      %3422 = vmatmul.mubr.bf16.gmra.mrb[0].mxu0 %v3240
      %v3423 = vpop.f32.mrb[0].mxu0
      %v3424 = vadd.f32 0.0, %v3423
      %v3425 = vpop.f32.mrb[0].mxu0
      %v3426 = vadd.f32 0.0, %v3425
      %v3427 = vpop.f32.mrb[0].mxu0
      %v3428 = vpop.f32.mrb[0].mxu0
      %3429 = vdwg.mxu0
      %v3430 = vadd.f32 %v2535, %v3301
      %v3431 = vadd.f32 %v2537, %v3303
      %v3432 = vadd.f32 %v2576, %v3342
      %v3433 = vadd.f32 %v2578, %v3344
      %v3434 = vadd.f32 %v2617, %v3383
      %v3435 = vadd.f32 %v2619, %v3385
      %v3436 = vadd.f32 %v2658, %v3424
      %v3437 = vadd.f32 %v2660, %v3426
      %v3438 = vld [vmem:[%s4] sm:$0xff]
      %3440 = vset.pattern.permute.xlu0 0
      %3441 = vperm.xlu0 %3440, %v3438
      %v3442 = vpop.permute.xlu0 %3441
      %v3444 = vadd.f32 %v3430, %v3442
      %v3445 = vadd.f32 %v3431, %v3442
      %v3446 = vadd.f32 %v3432, %v3442
      %v3447 = vadd.f32 %v3433, %v3442
      %v3448 = vadd.f32 %v3434, %v3442
      %v3449 = vadd.f32 %v3435, %v3442
      %v3450 = vadd.f32 %v3436, %v3442
      %v3451 = vadd.f32 %v3437, %v3442
      %v3452 = vmax.f32 %v3444, 0.0
      %v3453 = vmax.f32 %v3445, 0.0
      %v3454 = vmax.f32 %v3446, 0.0
      %v3455 = vmax.f32 %v3447, 0.0
      %v3456 = vmax.f32 %v3448, 0.0
      %v3457 = vmax.f32 %v3449, 0.0
      %v3458 = vmax.f32 %v3450, 0.0
      %v3459 = vmax.f32 %v3451, 0.0
      %3460 = vst [vmem:[%s417] sm:$0xff] %v3452
      %3461 = vst [vmem:[%s417 + $0x8] sm:$0xff] %v3453
      %3462 = vst [vmem:[%s417 + $0x10] sm:$0xff] %v3454
      %3463 = vst [vmem:[%s417 + $0x18] sm:$0xff] %v3455
      %3464 = vst [vmem:[%s417 + $0x20] sm:$0xff] %v3456
      %3465 = vst [vmem:[%s417 + $0x28] sm:$0xff] %v3457
      %3466 = vst [vmem:[%s417 + $0x30] sm:$0xff] %v3458
      %3467 = vst [vmem:[%s417 + $0x38] sm:$0xff] %v3459
      %s3468 = smul.u32 8, %s22
      %p3469 = scmp.lt.s32.totalorder %s21, 1
      %s3470 = scalar_select %p3469, %s21, 1
      %p3471 = scmp.lt.s32.totalorder %s3468, 15
      %s3472 = scalar_select %p3471, %s3468, 15
      %s3473 = smul.addr %s3470, 16
      %s3474 = sadd.s32 %s3472, %s3473
      %s3475 = smul.addr %s3474, 8
      %s3476 = scalar_lea.vmem %s6, %s3475
      // Predicated region
      $region45: #{conv_bn_relu_3d.1} parent=43 // pred_check
        %p3477 = pneg %p212
      $region46: #{conv_bn_relu_3d.1} parent=43 // pred_check_branch
        %3479 = sbr.rel (%p3477) target = $region48
      $region47: #{conv_bn_relu_3d.1} parent=43 // pred_region
        %s3480 = smul.u32 8, %s22
      $region48: #{conv_bn_relu_3d.1} parent=43 // pred_fallthru
        _
    $region44: #{conv_bn_relu_3d.1} parent=5 // pred_fallthru
      _
    %p3481 = scmp.le.s32.totalorder 2, %s12
    // Predicated region
    $region49: #{conv_bn_relu_3d.1} parent=5 // pred_check
      %p3482 = pneg %p3481
    $region50: #{conv_bn_relu_3d.1} parent=5 // pred_check_branch
      %3484 = sbr.rel (%p3482) target = $region52
    $region51: #{conv_bn_relu_3d.1} parent=5 // pred_region
      %s3485 = ssub.s32 %s12, 2
      // Predicated region
      $region53: #{conv_bn_relu_3d.1} parent=51 // pred_check
        %p3486 = pneg %p218
      $region54: #{conv_bn_relu_3d.1} parent=51 // pred_check_branch
        %3488 = sbr.rel (%p3486) target = $region56
      $region55: #{conv_bn_relu_3d.1} parent=51 // pred_region
        %s3489 = smul.u32 8, %s24
        %p3490 = scmp.lt.s32.totalorder %s23, 1
        %s3491 = scalar_select %p3490, %s23, 1
        %p3492 = scmp.lt.s32.totalorder %s3489, 15
        %s3493 = scalar_select %p3492, %s3489, 15
        %s3494 = smul.addr %s3491, 16
        %s3495 = sadd.s32 %s3493, %s3494
        %s3496 = smul.addr %s3495, 8
        %s3497 = scalar_lea.vmem %s6, %s3496
      $region56: #{conv_bn_relu_3d.1} parent=51 // pred_fallthru
        _
    $region52: #{conv_bn_relu_3d.1} parent=5 // pred_fallthru
      _
  $region6: #{conv_bn_relu_3d.1} parent=0 // loop_footer
    %s16 = sadd.s32 1, %s12
  $region7: #{conv_bn_relu_3d.1} parent=0 // loop_footer_branch
    %11 = sbr.rel target = $region3
  $region8: #{conv_bn_relu_3d.1} parent=0 // loop_exit
    _

</llo_original>
